<compile_context>
chip_gen: v6e
topology: v6e:2x2x1
jax: 0.10.0
libtpu: 0.0.40
codegen_flags: <defaults>
</compile_context>

<pallas_src>
import functools
import math

import numpy as np

import jax
import jax.numpy as jnp
from jax import lax
from jax.experimental import pallas as pl
from jax.experimental.pallas import tpu as pltpu

MULTIPLE_OF = 256
_VMEM_LIMIT = 40 * 1024 * 1024       # <= 64 MiB/TC (v7x); ample headroom on v5e/v6e
_MASK_VALUE = -0.7 * float(jnp.finfo(jnp.float32).max)


def _sublane_mult(dtype):
    # Native sublane packing: 8 rows for 4-byte, 16 for 2-byte, 32 for 1-byte dtypes.
    return max(8, 32 // np.dtype(dtype).itemsize)


def _pick_block(n, target, mult):
    """Largest multiple of `mult` that divides n and is <= target, else n (full dim)."""
    b = (min(n, target) // mult) * mult
    while b >= mult:
        if n % b == 0:
            return b
        b -= mult
    return n


# --------------------------------------------------------------------------
# Kernel 1: fused RMSNorm(x) @ W   (QKV projection, final norm + logits)
# --------------------------------------------------------------------------
def _rmsnorm_matmul_kernel(eps):
    def kernel(x_ref, g_ref, w_ref, o_ref, y_ref):
        # RMSNorm is computed once per row tile (at j == 0) into a VMEM scratch
        # and reused for every N tile of this row block (N is the inner grid axis).
        @pl.when(pl.program_id(1) == 0)
        def _():
            x = x_ref[...].astype(jnp.float32)
            ms = jnp.mean(x * x, axis=-1, keepdims=True)
            normed = (x * lax.rsqrt(ms + eps)).astype(x_ref.dtype)     # .type_as(x)
            y_ref[...] = (normed * g_ref[...]).astype(y_ref.dtype)     # * norm weight
        o_ref[...] = jnp.dot(y_ref[...], w_ref[...],
                             preferred_element_type=jnp.float32).astype(o_ref.dtype)
    return kernel


def rmsnorm_matmul(x2d, g, w, eps, out_dtype=None, block_rows=512, block_n=512):
    # TODO(synk): for very large K, add a K grid axis with a two-pass norm instead
    # of keeping the full (tm, K) / (K, tn) panels in VMEM.
    R, K = x2d.shape
    K2, N = w.shape
    assert K == K2
    out_dtype = x2d.dtype if out_dtype is None else out_dtype
    tm = _pick_block(R, block_rows, _sublane_mult(x2d.dtype))
    tn = _pick_block(N, block_n, 128)
    grid = (R // tm, N // tn)
    return pl.pallas_call(
        _rmsnorm_matmul_kernel(eps),
        out_shape=jax.ShapeDtypeStruct((R, N), out_dtype),
        grid_spec=pltpu.PrefetchScalarGridSpec(
            num_scalar_prefetch=0,
            grid=grid,
            in_specs=[
                pl.BlockSpec((tm, K), lambda i, j: (i, 0)),   # x row tile (resident over j)
                pl.BlockSpec((1, K), lambda i, j: (0, 0)),    # norm weight
                pl.BlockSpec((K, tn), lambda i, j: (0, j)),   # weight panel
            ],
            out_specs=pl.BlockSpec((tm, tn), lambda i, j: (i, j)),
            scratch_shapes=[pltpu.VMEM((tm, K), x2d.dtype)],  # hoisted normed(x)*g
        ),
        compiler_params=pltpu.CompilerParams(
            dimension_semantics=("parallel", "arbitrary"),
            vmem_limit_bytes=_VMEM_LIMIT),
    )(x2d, g.reshape(1, K), w)


# --------------------------------------------------------------------------
# Kernel 2: fused RMSNorm + SwiGLU up-projection: silu(norm(x)@W1) * (norm(x)@W3)
# --------------------------------------------------------------------------
def _rmsnorm_swiglu_kernel(eps):
    def kernel(x_ref, g_ref, w1_ref, w3_ref, o_ref, y_ref):
        @pl.when(pl.program_id(1) == 0)
        def _():
            x = x_ref[...].astype(jnp.float32)
            ms = jnp.mean(x * x, axis=-1, keepdims=True)
            normed = (x * lax.rsqrt(ms + eps)).astype(x_ref.dtype)
            y_ref[...] = (normed * g_ref[...]).astype(y_ref.dtype)
        y = y_ref[...]
        a = jnp.dot(y, w1_ref[...], preferred_element_type=jnp.float32)
        b = jnp.dot(y, w3_ref[...], preferred_element_type=jnp.float32)
        o_ref[...] = (a * jax.nn.sigmoid(a) * b).astype(o_ref.dtype)   # silu(a) * b
    return kernel


def rmsnorm_swiglu(x2d, g, w1, w3, eps, block_rows=512, block_n=256):
    # block_n defaults to 256: this kernel double-buffers TWO (K, tn) weight panels.
    R, K = x2d.shape
    _, N = w1.shape
    tm = _pick_block(R, block_rows, _sublane_mult(x2d.dtype))
    tn = _pick_block(N, block_n, 128)
    grid = (R // tm, N // tn)
    return pl.pallas_call(
        _rmsnorm_swiglu_kernel(eps),
        out_shape=jax.ShapeDtypeStruct((R, N), x2d.dtype),
        grid_spec=pltpu.PrefetchScalarGridSpec(
            num_scalar_prefetch=0,
            grid=grid,
            in_specs=[
                pl.BlockSpec((tm, K), lambda i, j: (i, 0)),
                pl.BlockSpec((1, K), lambda i, j: (0, 0)),
                pl.BlockSpec((K, tn), lambda i, j: (0, j)),
                pl.BlockSpec((K, tn), lambda i, j: (0, j)),
            ],
            out_specs=pl.BlockSpec((tm, tn), lambda i, j: (i, j)),
            scratch_shapes=[pltpu.VMEM((tm, K), x2d.dtype)],
        ),
        compiler_params=pltpu.CompilerParams(
            dimension_semantics=("parallel", "arbitrary"),
            vmem_limit_bytes=_VMEM_LIMIT),
    )(x2d, g.reshape(1, K), w1, w3)


# --------------------------------------------------------------------------
# Kernel 3: residual + x @ W with a K grid axis   (Wo projection, FFN down-proj)
# --------------------------------------------------------------------------
def _matmul_residual_kernel(x_ref, w_ref, r_ref, o_ref, acc_ref):
    @pl.when(pl.program_id(2) == 0)
    def _():
        acc_ref[...] = jnp.zeros_like(acc_ref)
    acc_ref[...] += jnp.dot(x_ref[...], w_ref[...], preferred_element_type=jnp.float32)

    @pl.when(pl.program_id(2) == pl.num_programs(2) - 1)
    def _():
        o_ref[...] = (r_ref[...].astype(jnp.float32) + acc_ref[...]).astype(o_ref.dtype)


def matmul_residual(x2d, w, res2d, block_rows=512, block_n=512, block_k=512):
    # TODO(synk): for large-R prefill a weight-stationary (j, i) grid with K untiled
    # would cut weight re-streaming further; the larger row tile amortizes it here.
    R, K = x2d.shape
    _, N = w.shape
    tm = _pick_block(R, block_rows, _sublane_mult(x2d.dtype))
    tn = _pick_block(N, block_n, 128)
    tk = _pick_block(K, block_k, 128)
    grid = (R // tm, N // tn, K // tk)
    return pl.pallas_call(
        _matmul_residual_kernel,
        out_shape=jax.ShapeDtypeStruct((R, N), res2d.dtype),
        grid_spec=pltpu.PrefetchScalarGridSpec(
            num_scalar_prefetch=0,
            grid=grid,
            in_specs=[
                pl.BlockSpec((tm, tk), lambda i, j, k: (i, k)),
                pl.BlockSpec((tk, tn), lambda i, j, k: (k, j)),
                pl.BlockSpec((tm, tn), lambda i, j, k: (i, j)),
            ],
            out_specs=pl.BlockSpec((tm, tn), lambda i, j, k: (i, j)),
            scratch_shapes=[pltpu.VMEM((tm, tn), jnp.float32)],
        ),
        compiler_params=pltpu.CompilerParams(
            dimension_semantics=("parallel", "parallel", "arbitrary"),
            vmem_limit_bytes=_VMEM_LIMIT),
    )(x2d, w, res2d)


# --------------------------------------------------------------------------
# Kernel 4: per-(batch, head) attention with fused RoPE + causal softmax,
#           reading q/k/v windows straight out of the (B, S, 3D) qkv activation
#           and writing the output directly in (B, S, D) layout.
# --------------------------------------------------------------------------
def _attention_kernel(heads_per_step, head_dim, scale):
    half = head_dim // 2

    def kernel(q_ref, k_ref, v_ref, cos_ref, sin_ref, o_ref):
        S = q_ref.shape[1]
        cos = cos_ref[...].astype(jnp.float32)        # [S, Dh]
        sin = sin_ref[...].astype(jnp.float32)        # [S, Dh], rotate_half sign folded in
        rows = lax.broadcasted_iota(jnp.int32, (S, S), 0)
        cols = lax.broadcasted_iota(jnp.int32, (S, S), 1)
        causal = cols <= rows

        for h in range(heads_per_step):
            # TODO(synk): for head_dim < 128 this slices at sub-lane granularity;
            # the lane-aligned head_dim=128 path uses one head per grid step.
            sl = slice(h * head_dim, (h + 1) * head_dim)
            q = q_ref[0, :, sl].astype(jnp.float32)   # [S, Dh]
            k = k_ref[0, :, sl].astype(jnp.float32)
            v = v_ref[0, :, sl]

            # RoPE: rotate_half(x) == roll(x, Dh/2) with the sign carried by `sin`.
            q = q * cos + pltpu.roll(q, shift=half, axis=1) * sin
            k = k * cos + pltpu.roll(k, shift=half, axis=1) * sin
            q = q * scale                              # fold 1/sqrt(Dh) into q

            s = jnp.dot(q.astype(v.dtype), k.astype(v.dtype).T,
                        preferred_element_type=jnp.float32)            # [S, S]
            s = jnp.where(causal, s, _MASK_VALUE)
            m = jnp.max(s, axis=-1, keepdims=True)
            p = jnp.exp(s - m)
            l = jnp.sum(p, axis=-1, keepdims=True)
            o = jnp.dot(p.astype(v.dtype), v, preferred_element_type=jnp.float32)
            o = o * pl.reciprocal(l, approx=True)      # divide on the [S, Dh] output
            o_ref[0, :, sl] = o.astype(o_ref.dtype)
        # TODO(synk): flash-style online-softmax KV tiling for long sequences.
    return kernel


def attention(qkv, cos, sin_signed, n_heads):
    """qkv: [B, S, 3*D] (q | k | v concatenated); cos/sin_signed: [S, Dh]."""
    B, S, threeD = qkv.shape
    D = threeD // 3
    Dh = D // n_heads
    # One (batch, head) pair per grid step when the head dim is lane-aligned
    # (LLaMA: Dh=128); otherwise fall back to one batch per step.
    heads_per_step = 1 if Dh % 128 == 0 else n_heads
    Wb = heads_per_step * Dh
    koff = D // Wb                      # number of column blocks per q/k/v section
    grid = (B, n_heads // heads_per_step)
    kernel = _attention_kernel(heads_per_step, Dh, 1.0 / math.sqrt(Dh))
    return pl.pallas_call(
        kernel,
        out_shape=jax.ShapeDtypeStruct((B, S, D), qkv.dtype),
        grid_spec=pltpu.PrefetchScalarGridSpec(
            num_scalar_prefetch=0,
            grid=grid,
            in_specs=[
                pl.BlockSpec((1, S, Wb), lambda b, j: (b, 0, j)),             # q window
                pl.BlockSpec((1, S, Wb), lambda b, j: (b, 0, koff + j)),      # k window
                pl.BlockSpec((1, S, Wb), lambda b, j: (b, 0, 2 * koff + j)),  # v window
                pl.BlockSpec((S, Dh), lambda b, j: (0, 0)),
                pl.BlockSpec((S, Dh), lambda b, j: (0, 0)),
            ],
            out_specs=pl.BlockSpec((1, S, Wb), lambda b, j: (b, 0, j)),
        ),
        compiler_params=pltpu.CompilerParams(
            dimension_semantics=("parallel", "parallel"),
            vmem_limit_bytes=_VMEM_LIMIT),
    )(qkv, qkv, qkv, cos, sin_signed)


# --------------------------------------------------------------------------
# Model forward (Pallas composition)
# --------------------------------------------------------------------------
def precompute_cos_sin(seq_len, dim, base=10000.0):
    inv_freq = 1.0 / (base ** (jnp.arange(0, dim, 2, dtype=jnp.float32) / dim))
    t = jnp.arange(seq_len, dtype=jnp.float32)
    freqs = jnp.einsum("i,j->ij", t, inv_freq)
    emb = jnp.concatenate([freqs, freqs], axis=-1)
    return jnp.cos(emb), jnp.sin(emb)                  # [S, Dh] each


def transformer_block_forward(x, lw, cos, sin_signed, n_heads, eps):
    B, S, D = x.shape
    R = B * S
    x2d = x.reshape(R, D)

    # attention: fused RMSNorm + QKV proj -> fused RoPE/causal attention -> Wo + residual
    qkv = rmsnorm_matmul(x2d, lw["attn_norm"], lw["wqkv"], eps)             # [R, 3D]
    attn = attention(qkv.reshape(B, S, 3 * D), cos, sin_signed, n_heads)    # [B, S, D]
    h2d = matmul_residual(attn.reshape(R, D), lw["wo"], x2d)                # x + attn @ Wo

    # feed-forward: fused RMSNorm + SwiGLU up-proj -> W2 + residual
    ff = rmsnorm_swiglu(h2d, lw["ffn_norm"], lw["w1"], lw["w3"], eps)       # [R, hidden]
    out2d = matmul_residual(ff, lw["w2"], h2d)                              # h + ff @ W2
    return out2d.reshape(B, S, D)


def transformer_forward(weights, tokens, n_heads, eps):
    B, S = tokens.shape
    D = weights["tok_emb"].shape[1]
    Dh = D // n_heads
    # TODO(synk): token-embedding gather stays in XLA (jnp.take); a Pallas DMA gather
    # adds nothing at these sizes.
    h = jnp.take(weights["tok_emb"], tokens, axis=0)                        # [B, S, D]
    cos, sin = precompute_cos_sin(S, Dh)
    sign = jnp.concatenate([-jnp.ones((Dh // 2,), jnp.float32),
                            jnp.ones((Dh // 2,), jnp.float32)])
    cos = cos.astype(h.dtype)
    sin_signed = (sin * sign[None, :]).astype(h.dtype)
    for lw in weights["layers"]:
        h = transformer_block_forward(h, lw, cos, sin_signed, n_heads, eps)
    # final RMSNorm fused with the output projection; logits are float32
    logits = rmsnorm_matmul(h.reshape(B * S, D), weights["norm"], weights["output"],
                            eps, out_dtype=jnp.float32)
    return logits.reshape(B, S, -1)


# --------------------------------------------------------------------------
# Pure-JAX reference (mirrors the PyTorch module exactly)
# --------------------------------------------------------------------------
def _rmsnorm_ref(x, w, eps):
    xf = x.astype(jnp.float32)
    out = xf * lax.rsqrt(jnp.mean(xf * xf, axis=-1, keepdims=True) + eps)
    return out.astype(x.dtype) * w


def _rotate_half_ref(x):
    h = x.shape[-1] // 2
    return jnp.concatenate([-x[..., h:], x[..., :h]], axis=-1)


def transformer_reference(weights, tokens, n_heads, eps):
    B, S = tokens.shape
    D = weights["tok_emb"].shape[1]
    Dh = D // n_heads
    h = weights["tok_emb"][tokens]
    cos, sin = precompute_cos_sin(S, Dh)
    cos4 = cos[None, :, None, :].astype(h.dtype)
    sin4 = sin[None, :, None, :].astype(h.dtype)
    mask = jnp.triu(jnp.full((1, 1, S, S), -jnp.inf, dtype=jnp.float32), k=1)
    for lw in weights["layers"]:
        xn = _rmsnorm_ref(h, lw["attn_norm"], eps)
        qkv = xn @ lw["wqkv"]
        q, k, v = jnp.split(qkv, 3, axis=-1)
        q = q.reshape(B, S, n_heads, Dh)
        k = k.reshape(B, S, n_heads, Dh)
        v = v.reshape(B, S, n_heads, Dh)
        q = q * cos4 + _rotate_half_ref(q) * sin4
        k = k * cos4 + _rotate_half_ref(k) * sin4
        q, k, v = (t.transpose(0, 2, 1, 3) for t in (q, k, v))
        scores = (q @ k.transpose(0, 1, 3, 2)) / math.sqrt(Dh) + mask
        probs = jax.nn.softmax(scores.astype(jnp.float32), axis=-1).astype(q.dtype)
        attn = (probs @ v).transpose(0, 2, 1, 3).reshape(B, S, D)
        h = h + attn @ lw["wo"]
        hn = _rmsnorm_ref(h, lw["ffn_norm"], eps)
        ff = jax.nn.silu(hn @ lw["w1"]) * (hn @ lw["w3"])
        h = h + ff @ lw["w2"]
    hn = _rmsnorm_ref(h, weights["norm"], eps)
    return (hn @ weights["output"]).astype(jnp.float32)


# --------------------------------------------------------------------------
# Deterministic weight construction (Linear weights stored as [in, out])
# --------------------------------------------------------------------------
def init_weights(key, *, dim, n_layers, n_heads, vocab_size, dtype=jnp.bfloat16):
    hidden = int(2 * (4 * dim) / 3)
    hidden = MULTIPLE_OF * ((hidden + MULTIPLE_OF - 1) // MULTIPLE_OF)

    def dense(k, fan_in, fan_out):
        return (0.02 * jax.random.normal(k, (fan_in, fan_out), jnp.float32)).astype(dtype)

    keys = jax.random.split(key, 2 + n_layers)
    weights = {
        "tok_emb": jax.random.normal(keys[0], (vocab_size, dim), jnp.float32).astype(dtype),
        "norm": jnp.ones((dim,), dtype),
        "output": dense(keys[1], dim, vocab_size),
        "layers": [],
    }
    for li in range(n_layers):
        lk = jax.random.split(keys[2 + li], 7)
        weights["layers"].append({
            "attn_norm": jnp.ones((dim,), dtype),
            "ffn_norm": jnp.ones((dim,), dtype),
            "wqkv": jnp.concatenate([dense(lk[0], dim, dim),
                                     dense(lk[1], dim, dim),
                                     dense(lk[2], dim, dim)], axis=-1),
            "wo": dense(lk[3], dim, dim),
            "w1": dense(lk[4], dim, hidden),
            "w3": dense(lk[5], dim, hidden),
            "w2": dense(lk[6], hidden, dim),
        })
    return weights


if __name__ == "__main__":
    # Small deterministic config consistent with the module: head_dim = 128 (the
    # real LLaMA head size), FFN hidden rounded to MULTIPLE_OF=256 -> 768.
    batch, seq = 2, 8
    dim, n_heads, n_layers, vocab = 256, 2, 2, 512
    eps = 1e-6
    dtype = jnp.bfloat16

    key = jax.random.PRNGKey(0)
    wkey, tkey = jax.random.split(key)
    weights = init_weights(wkey, dim=dim, n_layers=n_layers, n_heads=n_heads,
                           vocab_size=vocab, dtype=dtype)
    tokens = jax.random.randint(tkey, (batch, seq), 0, vocab, dtype=jnp.int32)

    fwd = jax.jit(functools.partial(transformer_forward, n_heads=n_heads, eps=eps))
    logits = jax.block_until_ready(fwd(weights, tokens))

    ref_fn = jax.jit(functools.partial(transformer_reference, n_heads=n_heads, eps=eps))
    ref = jax.block_until_ready(ref_fn(weights, tokens))

    assert logits.shape == (batch, seq, vocab), logits.shape
    assert logits.dtype == jnp.float32
    max_err = float(jnp.max(jnp.abs(logits - ref)))
    rel_err = float(jnp.linalg.norm(logits - ref) / jnp.linalg.norm(ref))
    assert jnp.allclose(logits, ref, atol=2e-2, rtol=2e-2), (max_err, rel_err)
    assert rel_err < 1e-2, rel_err

    print("KERNEL_OK")
</pallas_src>

<mosaic_0001>
module attributes {stable_mosaic.version = 11 : i64} {
  func.func @_matmul_residual_kernel(%arg0: i32, %arg1: i32, %arg2: i32, %arg3: memref<16x256xbf16, #tpu.memory_space<vmem>>, %arg4: memref<256x256xbf16, #tpu.memory_space<vmem>>, %arg5: memref<16x256xbf16, #tpu.memory_space<vmem>>, %arg6: memref<16x256xbf16, #tpu.memory_space<vmem>>, %arg7: memref<16x256xf32, #tpu.memory_space<vmem>>) attributes {dimension_semantics = [#tpu.dimension_semantics<parallel>, #tpu.dimension_semantics<parallel>, #tpu.dimension_semantics<arbitrary>], iteration_bounds = array<i64: 1, 1, 1>, scalar_prefetch = 0 : i64, scratch_operands = 1 : i64, tpu.core_type = #tpu.core_type<tc>, window_params = [{transform_indices = @transform_0, window_bounds = array<i64: 16, 256>}, {transform_indices = @transform_1, window_bounds = array<i64: 256, 256>}, {transform_indices = @transform_2, window_bounds = array<i64: 16, 256>}, {transform_indices = @transform_3, window_bounds = array<i64: 16, 256>}]} {
    %c0_i32 = arith.constant 0 : i32
    %0 = arith.cmpi eq, %arg2, %c0_i32 : i32
    %1 = arith.extui %0 : i1 to i32
    %c0_i32_0 = arith.constant 0 : i32
    %2 = arith.cmpi ne, %1, %c0_i32_0 : i32
    scf.if %2 {
      %cst_10 = arith.constant 0.000000e+00 : f32
      %12 = vector.broadcast %cst_10 : f32 to vector<16x256xf32>
      %c0_11 = arith.constant 0 : index
      %c0_12 = arith.constant 0 : index
      %13 = vector.load %arg7[%c0_11, %c0_12] : memref<16x256xf32, #tpu.memory_space<vmem>>, vector<16x256xf32>
      tpu.vector_store %arg7[%c0_11, %c0_12], %12 {strides = array<i32>} : memref<16x256xf32, #tpu.memory_space<vmem>>, vector<16x256xf32>,
    } else {
    }
    %c0 = arith.constant 0 : index
    %c0_1 = arith.constant 0 : index
    %3 = vector.load %arg7[%c0, %c0_1] : memref<16x256xf32, #tpu.memory_space<vmem>>, vector<16x256xf32>
    %c0_2 = arith.constant 0 : index
    %c0_3 = arith.constant 0 : index
    %4 = vector.load %arg3[%c0_2, %c0_3] : memref<16x256xbf16, #tpu.memory_space<vmem>>, vector<16x256xbf16>
    %c0_4 = arith.constant 0 : index
    %c0_5 = arith.constant 0 : index
    %5 = vector.load %arg4[%c0_4, %c0_5] : memref<256x256xbf16, #tpu.memory_space<vmem>>, vector<256x256xbf16>
    %cst = arith.constant dense<0.000000e+00> : vector<16x256xf32>
    %6 = tpu.matmul %4, %5, %cst {dimension_numbers = #tpu.dot_dimension_numbers<[1], [0], [0], [1], [0, 0, 1, 1], [], []>} : vector<16x256xbf16>, vector<256x256xbf16>, vector<16x256xf32> -> vector<16x256xf32>
    %7 = arith.addf %3, %6 : vector<16x256xf32>
    %c0_6 = arith.constant 0 : index
    %c0_7 = arith.constant 0 : index
    %8 = vector.load %arg7[%c0_6, %c0_7] : memref<16x256xf32, #tpu.memory_space<vmem>>, vector<16x256xf32>
    tpu.vector_store %arg7[%c0_6, %c0_7], %7 {strides = array<i32>} : memref<16x256xf32, #tpu.memory_space<vmem>>, vector<16x256xf32>,
    %c0_i32_8 = arith.constant 0 : i32
    %9 = arith.cmpi eq, %arg2, %c0_i32_8 : i32
    %10 = arith.extui %9 : i1 to i32
    %c0_i32_9 = arith.constant 0 : i32
    %11 = arith.cmpi ne, %10, %c0_i32_9 : i32
    scf.if %11 {
      %c0_10 = arith.constant 0 : index
      %c0_11 = arith.constant 0 : index
      %12 = vector.load %arg5[%c0_10, %c0_11] : memref<16x256xbf16, #tpu.memory_space<vmem>>, vector<16x256xbf16>
      %13 = arith.extf %12 : vector<16x256xbf16> to vector<16x256xf32>
      %c0_12 = arith.constant 0 : index
      %c0_13 = arith.constant 0 : index
      %14 = vector.load %arg7[%c0_12, %c0_13] : memref<16x256xf32, #tpu.memory_space<vmem>>, vector<16x256xf32>
      %15 = arith.addf %13, %14 : vector<16x256xf32>
      %16 = arith.truncf %15 : vector<16x256xf32> to vector<16x256xbf16>
      %c0_14 = arith.constant 0 : index
      %c0_15 = arith.constant 0 : index
      %17 = vector.load %arg6[%c0_14, %c0_15] : memref<16x256xbf16, #tpu.memory_space<vmem>>, vector<16x256xbf16>
      tpu.vector_store %arg6[%c0_14, %c0_15], %16 {strides = array<i32>} : memref<16x256xbf16, #tpu.memory_space<vmem>>, vector<16x256xbf16>,
    } else {
    }
    return
  }
  func.func @transform_0(%arg0: i32, %arg1: i32, %arg2: i32) -> (i32, i32) {
    %c0_i32 = arith.constant 0 : i32
    return %arg0, %arg2 : i32, i32
  }
  func.func @transform_1(%arg0: i32, %arg1: i32, %arg2: i32) -> (i32, i32) {
    %c0_i32 = arith.constant 0 : i32
    return %arg2, %arg1 : i32, i32
  }
  func.func @transform_2(%arg0: i32, %arg1: i32, %arg2: i32) -> (i32, i32) {
    %c0_i32 = arith.constant 0 : i32
    return %arg0, %arg1 : i32, i32
  }
  func.func @transform_3(%arg0: i32, %arg1: i32, %arg2: i32) -> (i32, i32) {
    %c0_i32 = arith.constant 0 : i32
    return %arg0, %arg1 : i32, i32
  }
}

module attributes {stable_mosaic.version = 11 : i64} {
  func.func @kernel(%arg0: i32, %arg1: i32, %arg2: memref<16x256xbf16, #tpu.memory_space<vmem>>, %arg3: memref<1x256xbf16, #tpu.memory_space<vmem>>, %arg4: memref<256x384xbf16, #tpu.memory_space<vmem>>, %arg5: memref<16x384xbf16, #tpu.memory_space<vmem>>, %arg6: memref<16x256xbf16, #tpu.memory_space<vmem>>) attributes {dimension_semantics = [#tpu.dimension_semantics<parallel>, #tpu.dimension_semantics<arbitrary>], iteration_bounds = array<i64: 1, 2>, scalar_prefetch = 0 : i64, scratch_operands = 1 : i64, tpu.core_type = #tpu.core_type<tc>, window_params = [{transform_indices = @transform_0, window_bounds = array<i64: 16, 256>}, {pipeline_mode = #tpu.pipeline_mode<synchronous>, transform_indices = @transform_1, window_bounds = array<i64: 1, 256>}, {transform_indices = @transform_2, window_bounds = array<i64: 256, 384>}, {transform_indices = @transform_3, window_bounds = array<i64: 16, 384>}]} {
    %c0_i32 = arith.constant 0 : i32
    %0 = arith.cmpi eq, %arg1, %c0_i32 : i32
    %1 = arith.extui %0 : i1 to i32
    %c0_i32_0 = arith.constant 0 : i32
    %2 = arith.cmpi ne, %1, %c0_i32_0 : i32
    scf.if %2 {
      %c0_6 = arith.constant 0 : index
      %c0_7 = arith.constant 0 : index
      %8 = vector.load %arg2[%c0_6, %c0_7] : memref<16x256xbf16, #tpu.memory_space<vmem>>, vector<16x256xbf16>
      %9 = arith.extf %8 : vector<16x256xbf16> to vector<16x256xf32>
      %10 = arith.mulf %9, %9 : vector<16x256xf32>
      %cst_8 = arith.constant dense<0.000000e+00> : vector<16xf32>
      %11 = vector.multi_reduction <add>, %10, %cst_8 [1] : vector<16x256xf32> to vector<16xf32>
      %12 = vector.shape_cast %11 : vector<16xf32> to vector<16x1xf32>
      %cst_9 = arith.constant 2.560000e+02 : f32
      %13 = vector.broadcast %cst_9 : f32 to vector<16x1xf32>
      %14 = arith.divf %12, %13 : vector<16x1xf32>
      %cst_10 = arith.constant 9.99999997E-7 : f32
      %15 = vector.broadcast %cst_10 : f32 to vector<16x1xf32>
      %16 = arith.addf %14, %15 : vector<16x1xf32>
      %17 = math.rsqrt %16 : vector<16x1xf32>
      %18 = vector.broadcast %17 : vector<16x1xf32> to vector<16x256xf32>
      %19 = arith.mulf %9, %18 : vector<16x256xf32>
      %20 = arith.truncf %19 : vector<16x256xf32> to vector<16x256xbf16>
      %c0_11 = arith.constant 0 : index
      %c0_12 = arith.constant 0 : index
      %21 = vector.load %arg3[%c0_11, %c0_12] : memref<1x256xbf16, #tpu.memory_space<vmem>>, vector<1x256xbf16>
      %22 = vector.broadcast %21 : vector<1x256xbf16> to vector<16x256xbf16>
      %23 = arith.mulf %20, %22 : vector<16x256xbf16>
      %c0_13 = arith.constant 0 : index
      %c0_14 = arith.constant 0 : index
      %24 = vector.load %arg6[%c0_13, %c0_14] : memref<16x256xbf16, #tpu.memory_space<vmem>>, vector<16x256xbf16>
      tpu.vector_store %arg6[%c0_13, %c0_14], %23 {strides = array<i32>} : memref<16x256xbf16, #tpu.memory_space<vmem>>, vector<16x256xbf16>,
    } else {
    }
    %c0 = arith.constant 0 : index
    %c0_1 = arith.constant 0 : index
    %3 = vector.load %arg6[%c0, %c0_1] : memref<16x256xbf16, #tpu.memory_space<vmem>>, vector<16x256xbf16>
    %c0_2 = arith.constant 0 : index
    %c0_3 = arith.constant 0 : index
    %4 = vector.load %arg4[%c0_2, %c0_3] : memref<256x384xbf16, #tpu.memory_space<vmem>>, vector<256x384xbf16>
    %cst = arith.constant dense<0.000000e+00> : vector<16x384xf32>
    %5 = tpu.matmul %3, %4, %cst {dimension_numbers = #tpu.dot_dimension_numbers<[1], [0], [0], [1], [0, 0, 1, 1], [], []>} : vector<16x256xbf16>, vector<256x384xbf16>, vector<16x384xf32> -> vector<16x384xf32>
    %6 = arith.truncf %5 : vector<16x384xf32> to vector<16x384xbf16>
    %c0_4 = arith.constant 0 : index
    %c0_5 = arith.constant 0 : index
    %7 = vector.load %arg5[%c0_4, %c0_5] : memref<16x384xbf16, #tpu.memory_space<vmem>>, vector<16x384xbf16>
    tpu.vector_store %arg5[%c0_4, %c0_5], %6 {strides = array<i32>} : memref<16x384xbf16, #tpu.memory_space<vmem>>, vector<16x384xbf16>,
    return
  }
  func.func @transform_0(%arg0: i32, %arg1: i32) -> (i32, i32) {
    %c0_i32 = arith.constant 0 : i32
    %c0_i32_0 = arith.constant 0 : i32
    return %arg0, %c0_i32 : i32, i32
  }
  func.func @transform_1(%arg0: i32, %arg1: i32) -> (i32, i32) {
    %c0_i32 = arith.constant 0 : i32
    %c0_i32_0 = arith.constant 0 : i32
    %c0_i32_1 = arith.constant 0 : i32
    return %c0_i32, %c0_i32_0 : i32, i32
  }
  func.func @transform_2(%arg0: i32, %arg1: i32) -> (i32, i32) {
    %c0_i32 = arith.constant 0 : i32
    %c0_i32_0 = arith.constant 0 : i32
    return %c0_i32, %arg1 : i32, i32
  }
  func.func @transform_3(%arg0: i32, %arg1: i32) -> (i32, i32) {
    %c0_i32 = arith.constant 0 : i32
    return %arg0, %arg1 : i32, i32
  }
}

module attributes {stable_mosaic.version = 11 : i64} {
  func.func @kernel(%arg0: i32, %arg1: i32, %arg2: memref<1x8x128xbf16, #tpu.memory_space<vmem>>, %arg3: memref<1x8x128xbf16, #tpu.memory_space<vmem>>, %arg4: memref<1x8x128xbf16, #tpu.memory_space<vmem>>, %arg5: memref<8x128xbf16, #tpu.memory_space<vmem>>, %arg6: memref<8x128xbf16, #tpu.memory_space<vmem>>, %arg7: memref<1x8x128xbf16, #tpu.memory_space<vmem>>) attributes {dimension_semantics = [#tpu.dimension_semantics<parallel>, #tpu.dimension_semantics<parallel>], iteration_bounds = array<i64: 2, 2>, scalar_prefetch = 0 : i64, scratch_operands = 0 : i64, tpu.core_type = #tpu.core_type<tc>, window_params = [{transform_indices = @transform_0, window_bounds = array<i64: 1, 8, 128>}, {transform_indices = @transform_1, window_bounds = array<i64: 1, 8, 128>}, {transform_indices = @transform_2, window_bounds = array<i64: 1, 8, 128>}, {pipeline_mode = #tpu.pipeline_mode<synchronous>, transform_indices = @transform_3, window_bounds = array<i64: 8, 128>}, {pipeline_mode = #tpu.pipeline_mode<synchronous>, transform_indices = @transform_4, window_bounds = array<i64: 8, 128>}, {transform_indices = @transform_5, window_bounds = array<i64: 1, 8, 128>}]} {
    %c0 = arith.constant 0 : index
    %c0_0 = arith.constant 0 : index
    %0 = vector.load %arg5[%c0, %c0_0] : memref<8x128xbf16, #tpu.memory_space<vmem>>, vector<8x128xbf16>
    %1 = arith.extf %0 : vector<8x128xbf16> to vector<8x128xf32>
    %c0_1 = arith.constant 0 : index
    %c0_2 = arith.constant 0 : index
    %2 = vector.load %arg6[%c0_1, %c0_2] : memref<8x128xbf16, #tpu.memory_space<vmem>>, vector<8x128xbf16>
    %3 = arith.extf %2 : vector<8x128xbf16> to vector<8x128xf32>
    %4 = tpu.iota {dimensions = array<i32: 0>} : vector<8x8xi32>
    %5 = tpu.iota {dimensions = array<i32: 1>} : vector<8x8xi32>
    %6 = arith.cmpi sle, %5, %4 : vector<8x8xi32>
    %c0_3 = arith.constant 0 : index
    %c0_4 = arith.constant 0 : index
    %c0_5 = arith.constant 0 : index
    %7 = vector.load %arg2[%c0_3, %c0_4, %c0_5] : memref<1x8x128xbf16, #tpu.memory_space<vmem>>, vector<1x8x128xbf16>
    %8 = vector.shape_cast %7 : vector<1x8x128xbf16> to vector<8x128xbf16>
    %9 = arith.extf %8 : vector<8x128xbf16> to vector<8x128xf32>
    %c0_6 = arith.constant 0 : index
    %c0_7 = arith.constant 0 : index
    %c0_8 = arith.constant 0 : index
    %10 = vector.load %arg3[%c0_6, %c0_7, %c0_8] : memref<1x8x128xbf16, #tpu.memory_space<vmem>>, vector<1x8x128xbf16>
    %11 = vector.shape_cast %10 : vector<1x8x128xbf16> to vector<8x128xbf16>
    %12 = arith.extf %11 : vector<8x128xbf16> to vector<8x128xf32>
    %c0_9 = arith.constant 0 : index
    %c0_10 = arith.constant 0 : index
    %c0_11 = arith.constant 0 : index
    %13 = vector.load %arg4[%c0_9, %c0_10, %c0_11] : memref<1x8x128xbf16, #tpu.memory_space<vmem>>, vector<1x8x128xbf16>
    %14 = vector.shape_cast %13 : vector<1x8x128xbf16> to vector<8x128xbf16>
    %15 = arith.mulf %9, %1 : vector<8x128xf32>
    %c64_i32 = arith.constant 64 : i32
    %16 = tpu.dynamic_rotate %9 by %c64_i32 dim 1 : vector<8x128xf32>, i32 -> vector<8x128xf32>
    %17 = arith.mulf %16, %3 : vector<8x128xf32>
    %18 = arith.addf %15, %17 : vector<8x128xf32>
    %19 = arith.mulf %12, %1 : vector<8x128xf32>
    %c64_i32_12 = arith.constant 64 : i32
    %20 = tpu.dynamic_rotate %12 by %c64_i32_12 dim 1 : vector<8x128xf32>, i32 -> vector<8x128xf32>
    %21 = arith.mulf %20, %3 : vector<8x128xf32>
    %22 = arith.addf %19, %21 : vector<8x128xf32>
    %cst = arith.constant 0.0883883461 : f32
    %23 = vector.broadcast %cst : f32 to vector<8x128xf32>
    %24 = arith.mulf %18, %23 : vector<8x128xf32>
    %25 = arith.truncf %24 : vector<8x128xf32> to vector<8x128xbf16>
    %26 = arith.truncf %22 : vector<8x128xf32> to vector<8x128xbf16>
    %27 = tpu.transpose %26, [1, 0] : vector<8x128xbf16> -> vector<128x8xbf16>
    %cst_13 = arith.constant dense<0.000000e+00> : vector<8x8xf32>
    %28 = tpu.matmul %25, %27, %cst_13 {dimension_numbers = #tpu.dot_dimension_numbers<[1], [0], [0], [1], [0, 0, 1, 1], [], []>} : vector<8x128xbf16>, vector<128x8xbf16>, vector<8x8xf32> -> vector<8x8xf32>
    %cst_14 = arith.constant -2.38197633E+38 : f32
    %29 = vector.broadcast %cst_14 : f32 to vector<8x8xf32>
    %30 = arith.select %6, %28, %29 : vector<8x8xi1>, vector<8x8xf32>
    %cst_15 = arith.constant dense<0xFF800000> : vector<8xf32>
    %31 = vector.multi_reduction <maximumf>, %30, %cst_15 [1] : vector<8x8xf32> to vector<8xf32>
    %32 = vector.shape_cast %31 : vector<8xf32> to vector<8x1xf32>
    %33 = vector.broadcast %32 : vector<8x1xf32> to vector<8x8xf32>
    %34 = arith.subf %30, %33 : vector<8x8xf32>
    %35 = math.exp %34 : vector<8x8xf32>
    %cst_16 = arith.constant dense<0.000000e+00> : vector<8xf32>
    %36 = vector.multi_reduction <add>, %35, %cst_16 [1] : vector<8x8xf32> to vector<8xf32>
    %37 = vector.shape_cast %36 : vector<8xf32> to vector<8x1xf32>
    %38 = arith.truncf %35 : vector<8x8xf32> to vector<8x8xbf16>
    %cst_17 = arith.constant dense<0.000000e+00> : vector<8x128xf32>
    %39 = tpu.matmul %38, %14, %cst_17 {dimension_numbers = #tpu.dot_dimension_numbers<[1], [0], [0], [1], [0, 0, 1, 1], [], []>} : vector<8x8xbf16>, vector<8x128xbf16>, vector<8x128xf32> -> vector<8x128xf32>
    %40 = tpu.reciprocal %37 {approx = true} : vector<8x1xf32> -> vector<8x1xf32>
    %41 = vector.broadcast %40 : vector<8x1xf32> to vector<8x128xf32>
    %42 = arith.mulf %39, %41 : vector<8x128xf32>
    %43 = arith.truncf %42 : vector<8x128xf32> to vector<8x128xbf16>
    %c0_18 = arith.constant 0 : index
    %c0_19 = arith.constant 0 : index
    %c0_20 = arith.constant 0 : index
    %44 = vector.load %arg7[%c0_18, %c0_19, %c0_20] : memref<1x8x128xbf16, #tpu.memory_space<vmem>>, vector<1x8x128xbf16>
    %45 = vector.shape_cast %44 : vector<1x8x128xbf16> to vector<8x128xbf16>
    %46 = vector.shape_cast %43 : vector<8x128xbf16> to vector<1x8x128xbf16>
    tpu.vector_store %arg7[%c0_18, %c0_19, %c0_20], %46 {strides = array<i32>} : memref<1x8x128xbf16, #tpu.memory_space<vmem>>, vector<1x8x128xbf16>,
    return
  }
  func.func @transform_0(%arg0: i32, %arg1: i32) -> (i32, i32, i32) {
    %c0_i32 = arith.constant 0 : i32
    %c0_i32_0 = arith.constant 0 : i32
    return %arg0, %c0_i32, %arg1 : i32, i32, i32
  }
  func.func @transform_1(%arg0: i32, %arg1: i32) -> (i32, i32, i32) {
    %c2_i32 = arith.constant 2 : i32
    %0 = arith.addi %c2_i32, %arg1 : i32
    %c0_i32 = arith.constant 0 : i32
    %c0_i32_0 = arith.constant 0 : i32
    return %arg0, %c0_i32, %0 : i32, i32, i32
  }
  func.func @transform_2(%arg0: i32, %arg1: i32) -> (i32, i32, i32) {
    %c4_i32 = arith.constant 4 : i32
    %0 = arith.addi %c4_i32, %arg1 : i32
    %c0_i32 = arith.constant 0 : i32
    %c0_i32_0 = arith.constant 0 : i32
    return %arg0, %c0_i32, %0 : i32, i32, i32
  }
  func.func @transform_3(%arg0: i32, %arg1: i32) -> (i32, i32) {
    %c0_i32 = arith.constant 0 : i32
    %c0_i32_0 = arith.constant 0 : i32
    %c0_i32_1 = arith.constant 0 : i32
    return %c0_i32, %c0_i32_0 : i32, i32
  }
  func.func @transform_4(%arg0: i32, %arg1: i32) -> (i32, i32) {
    %c0_i32 = arith.constant 0 : i32
    %c0_i32_0 = arith.constant 0 : i32
    %c0_i32_1 = arith.constant 0 : i32
    return %c0_i32, %c0_i32_0 : i32, i32
  }
  func.func @transform_5(%arg0: i32, %arg1: i32) -> (i32, i32, i32) {
    %c0_i32 = arith.constant 0 : i32
    %c0_i32_0 = arith.constant 0 : i32
    return %arg0, %c0_i32, %arg1 : i32, i32, i32
  }
}

module attributes {stable_mosaic.version = 11 : i64} {
  func.func @kernel(%arg0: i32, %arg1: i32, %arg2: memref<16x256xbf16, #tpu.memory_space<vmem>>, %arg3: memref<1x256xbf16, #tpu.memory_space<vmem>>, %arg4: memref<256x256xbf16, #tpu.memory_space<vmem>>, %arg5: memref<256x256xbf16, #tpu.memory_space<vmem>>, %arg6: memref<16x256xbf16, #tpu.memory_space<vmem>>, %arg7: memref<16x256xbf16, #tpu.memory_space<vmem>>) attributes {dimension_semantics = [#tpu.dimension_semantics<parallel>, #tpu.dimension_semantics<arbitrary>], iteration_bounds = array<i64: 1, 3>, scalar_prefetch = 0 : i64, scratch_operands = 1 : i64, tpu.core_type = #tpu.core_type<tc>, window_params = [{transform_indices = @transform_0, window_bounds = array<i64: 16, 256>}, {pipeline_mode = #tpu.pipeline_mode<synchronous>, transform_indices = @transform_1, window_bounds = array<i64: 1, 256>}, {transform_indices = @transform_2, window_bounds = array<i64: 256, 256>}, {transform_indices = @transform_3, window_bounds = array<i64: 256, 256>}, {transform_indices = @transform_4, window_bounds = array<i64: 16, 256>}]} {
    %c0_i32 = arith.constant 0 : i32
    %0 = arith.cmpi eq, %arg1, %c0_i32 : i32
    %1 = arith.extui %0 : i1 to i32
    %c0_i32_0 = arith.constant 0 : i32
    %2 = arith.cmpi ne, %1, %c0_i32_0 : i32
    scf.if %2 {
      %c0_10 = arith.constant 0 : index
      %c0_11 = arith.constant 0 : index
      %17 = vector.load %arg2[%c0_10, %c0_11] : memref<16x256xbf16, #tpu.memory_space<vmem>>, vector<16x256xbf16>
      %18 = arith.extf %17 : vector<16x256xbf16> to vector<16x256xf32>
      %19 = arith.mulf %18, %18 : vector<16x256xf32>
      %cst_12 = arith.constant dense<0.000000e+00> : vector<16xf32>
      %20 = vector.multi_reduction <add>, %19, %cst_12 [1] : vector<16x256xf32> to vector<16xf32>
      %21 = vector.shape_cast %20 : vector<16xf32> to vector<16x1xf32>
      %cst_13 = arith.constant 2.560000e+02 : f32
      %22 = vector.broadcast %cst_13 : f32 to vector<16x1xf32>
      %23 = arith.divf %21, %22 : vector<16x1xf32>
      %cst_14 = arith.constant 9.99999997E-7 : f32
      %24 = vector.broadcast %cst_14 : f32 to vector<16x1xf32>
      %25 = arith.addf %23, %24 : vector<16x1xf32>
      %26 = math.rsqrt %25 : vector<16x1xf32>
      %27 = vector.broadcast %26 : vector<16x1xf32> to vector<16x256xf32>
      %28 = arith.mulf %18, %27 : vector<16x256xf32>
      %29 = arith.truncf %28 : vector<16x256xf32> to vector<16x256xbf16>
      %c0_15 = arith.constant 0 : index
      %c0_16 = arith.constant 0 : index
      %30 = vector.load %arg3[%c0_15, %c0_16] : memref<1x256xbf16, #tpu.memory_space<vmem>>, vector<1x256xbf16>
      %31 = vector.broadcast %30 : vector<1x256xbf16> to vector<16x256xbf16>
      %32 = arith.mulf %29, %31 : vector<16x256xbf16>
      %c0_17 = arith.constant 0 : index
      %c0_18 = arith.constant 0 : index
      %33 = vector.load %arg7[%c0_17, %c0_18] : memref<16x256xbf16, #tpu.memory_space<vmem>>, vector<16x256xbf16>
      tpu.vector_store %arg7[%c0_17, %c0_18], %32 {strides = array<i32>} : memref<16x256xbf16, #tpu.memory_space<vmem>>, vector<16x256xbf16>,
    } else {
    }
    %c0 = arith.constant 0 : index
    %c0_1 = arith.constant 0 : index
    %3 = vector.load %arg7[%c0, %c0_1] : memref<16x256xbf16, #tpu.memory_space<vmem>>, vector<16x256xbf16>
    %c0_2 = arith.constant 0 : index
    %c0_3 = arith.constant 0 : index
    %4 = vector.load %arg4[%c0_2, %c0_3] : memref<256x256xbf16, #tpu.memory_space<vmem>>, vector<256x256xbf16>
    %cst = arith.constant dense<0.000000e+00> : vector<16x256xf32>
    %5 = tpu.matmul %3, %4, %cst {dimension_numbers = #tpu.dot_dimension_numbers<[1], [0], [0], [1], [0, 0, 1, 1], [], []>} : vector<16x256xbf16>, vector<256x256xbf16>, vector<16x256xf32> -> vector<16x256xf32>
    %c0_4 = arith.constant 0 : index
    %c0_5 = arith.constant 0 : index
    %6 = vector.load %arg5[%c0_4, %c0_5] : memref<256x256xbf16, #tpu.memory_space<vmem>>, vector<256x256xbf16>
    %cst_6 = arith.constant dense<0.000000e+00> : vector<16x256xf32>
    %7 = tpu.matmul %3, %6, %cst_6 {dimension_numbers = #tpu.dot_dimension_numbers<[1], [0], [0], [1], [0, 0, 1, 1], [], []>} : vector<16x256xbf16>, vector<256x256xbf16>, vector<16x256xf32> -> vector<16x256xf32>
    %8 = arith.negf %5 : vector<16x256xf32>
    %9 = math.exp %8 : vector<16x256xf32>
    %cst_7 = arith.constant 1.000000e+00 : f32
    %10 = vector.broadcast %cst_7 : f32 to vector<16x256xf32>
    %11 = arith.addf %10, %9 : vector<16x256xf32>
    %12 = arith.divf %10, %11 : vector<16x256xf32>
    %13 = arith.mulf %5, %12 : vector<16x256xf32>
    %14 = arith.mulf %13, %7 : vector<16x256xf32>
    %15 = arith.truncf %14 : vector<16x256xf32> to vector<16x256xbf16>
    %c0_8 = arith.constant 0 : index
    %c0_9 = arith.constant 0 : index
    %16 = vector.load %arg6[%c0_8, %c0_9] : memref<16x256xbf16, #tpu.memory_space<vmem>>, vector<16x256xbf16>
    tpu.vector_store %arg6[%c0_8, %c0_9], %15 {strides = array<i32>} : memref<16x256xbf16, #tpu.memory_space<vmem>>, vector<16x256xbf16>,
    return
  }
  func.func @transform_0(%arg0: i32, %arg1: i32) -> (i32, i32) {
    %c0_i32 = arith.constant 0 : i32
    %c0_i32_0 = arith.constant 0 : i32
    return %arg0, %c0_i32 : i32, i32
  }
  func.func @transform_1(%arg0: i32, %arg1: i32) -> (i32, i32) {
    %c0_i32 = arith.constant 0 : i32
    %c0_i32_0 = arith.constant 0 : i32
    %c0_i32_1 = arith.constant 0 : i32
    return %c0_i32, %c0_i32_0 : i32, i32
  }
  func.func @transform_2(%arg0: i32, %arg1: i32) -> (i32, i32) {
    %c0_i32 = arith.constant 0 : i32
    %c0_i32_0 = arith.constant 0 : i32
    return %c0_i32, %arg1 : i32, i32
  }
  func.func @transform_3(%arg0: i32, %arg1: i32) -> (i32, i32) {
    %c0_i32 = arith.constant 0 : i32
    %c0_i32_0 = arith.constant 0 : i32
    return %c0_i32, %arg1 : i32, i32
  }
  func.func @transform_4(%arg0: i32, %arg1: i32) -> (i32, i32) {
    %c0_i32 = arith.constant 0 : i32
    return %arg0, %arg1 : i32, i32
  }
}

module attributes {stable_mosaic.version = 11 : i64} {
  func.func @_matmul_residual_kernel(%arg0: i32, %arg1: i32, %arg2: i32, %arg3: memref<16x384xbf16, #tpu.memory_space<vmem>>, %arg4: memref<384x256xbf16, #tpu.memory_space<vmem>>, %arg5: memref<16x256xbf16, #tpu.memory_space<vmem>>, %arg6: memref<16x256xbf16, #tpu.memory_space<vmem>>, %arg7: memref<16x256xf32, #tpu.memory_space<vmem>>) attributes {dimension_semantics = [#tpu.dimension_semantics<parallel>, #tpu.dimension_semantics<parallel>, #tpu.dimension_semantics<arbitrary>], iteration_bounds = array<i64: 1, 1, 2>, scalar_prefetch = 0 : i64, scratch_operands = 1 : i64, tpu.core_type = #tpu.core_type<tc>, window_params = [{transform_indices = @transform_0, window_bounds = array<i64: 16, 384>}, {transform_indices = @transform_1, window_bounds = array<i64: 384, 256>}, {transform_indices = @transform_2, window_bounds = array<i64: 16, 256>}, {transform_indices = @transform_3, window_bounds = array<i64: 16, 256>}]} {
    %c0_i32 = arith.constant 0 : i32
    %0 = arith.cmpi eq, %arg2, %c0_i32 : i32
    %1 = arith.extui %0 : i1 to i32
    %c0_i32_0 = arith.constant 0 : i32
    %2 = arith.cmpi ne, %1, %c0_i32_0 : i32
    scf.if %2 {
      %cst_9 = arith.constant 0.000000e+00 : f32
      %12 = vector.broadcast %cst_9 : f32 to vector<16x256xf32>
      %c0_10 = arith.constant 0 : index
      %c0_11 = arith.constant 0 : index
      %13 = vector.load %arg7[%c0_10, %c0_11] : memref<16x256xf32, #tpu.memory_space<vmem>>, vector<16x256xf32>
      tpu.vector_store %arg7[%c0_10, %c0_11], %12 {strides = array<i32>} : memref<16x256xf32, #tpu.memory_space<vmem>>, vector<16x256xf32>,
    } else {
    }
    %c0 = arith.constant 0 : index
    %c0_1 = arith.constant 0 : index
    %3 = vector.load %arg7[%c0, %c0_1] : memref<16x256xf32, #tpu.memory_space<vmem>>, vector<16x256xf32>
    %c0_2 = arith.constant 0 : index
    %c0_3 = arith.constant 0 : index
    %4 = vector.load %arg3[%c0_2, %c0_3] : memref<16x384xbf16, #tpu.memory_space<vmem>>, vector<16x384xbf16>
    %c0_4 = arith.constant 0 : index
    %c0_5 = arith.constant 0 : index
    %5 = vector.load %arg4[%c0_4, %c0_5] : memref<384x256xbf16, #tpu.memory_space<vmem>>, vector<384x256xbf16>
    %cst = arith.constant dense<0.000000e+00> : vector<16x256xf32>
    %6 = tpu.matmul %4, %5, %cst {dimension_numbers = #tpu.dot_dimension_numbers<[1], [0], [0], [1], [0, 0, 1, 1], [], []>} : vector<16x384xbf16>, vector<384x256xbf16>, vector<16x256xf32> -> vector<16x256xf32>
    %7 = arith.addf %3, %6 : vector<16x256xf32>
    %c0_6 = arith.constant 0 : index
    %c0_7 = arith.constant 0 : index
    %8 = vector.load %arg7[%c0_6, %c0_7] : memref<16x256xf32, #tpu.memory_space<vmem>>, vector<16x256xf32>
    tpu.vector_store %arg7[%c0_6, %c0_7], %7 {strides = array<i32>} : memref<16x256xf32, #tpu.memory_space<vmem>>, vector<16x256xf32>,
    %c1_i32 = arith.constant 1 : i32
    %9 = arith.cmpi eq, %arg2, %c1_i32 : i32
    %10 = arith.extui %9 : i1 to i32
    %c0_i32_8 = arith.constant 0 : i32
    %11 = arith.cmpi ne, %10, %c0_i32_8 : i32
    scf.if %11 {
      %c0_9 = arith.constant 0 : index
      %c0_10 = arith.constant 0 : index
      %12 = vector.load %arg5[%c0_9, %c0_10] : memref<16x256xbf16, #tpu.memory_space<vmem>>, vector<16x256xbf16>
      %13 = arith.extf %12 : vector<16x256xbf16> to vector<16x256xf32>
      %c0_11 = arith.constant 0 : index
      %c0_12 = arith.constant 0 : index
      %14 = vector.load %arg7[%c0_11, %c0_12] : memref<16x256xf32, #tpu.memory_space<vmem>>, vector<16x256xf32>
      %15 = arith.addf %13, %14 : vector<16x256xf32>
      %16 = arith.truncf %15 : vector<16x256xf32> to vector<16x256xbf16>
      %c0_13 = arith.constant 0 : index
      %c0_14 = arith.constant 0 : index
      %17 = vector.load %arg6[%c0_13, %c0_14] : memref<16x256xbf16, #tpu.memory_space<vmem>>, vector<16x256xbf16>
      tpu.vector_store %arg6[%c0_13, %c0_14], %16 {strides = array<i32>} : memref<16x256xbf16, #tpu.memory_space<vmem>>, vector<16x256xbf16>,
    } else {
    }
    return
  }
  func.func @transform_0(%arg0: i32, %arg1: i32, %arg2: i32) -> (i32, i32) {
    %c0_i32 = arith.constant 0 : i32
    return %arg0, %arg2 : i32, i32
  }
  func.func @transform_1(%arg0: i32, %arg1: i32, %arg2: i32) -> (i32, i32) {
    %c0_i32 = arith.constant 0 : i32
    return %arg2, %arg1 : i32, i32
  }
  func.func @transform_2(%arg0: i32, %arg1: i32, %arg2: i32) -> (i32, i32) {
    %c0_i32 = arith.constant 0 : i32
    return %arg0, %arg1 : i32, i32
  }
  func.func @transform_3(%arg0: i32, %arg1: i32, %arg2: i32) -> (i32, i32) {
    %c0_i32 = arith.constant 0 : i32
    return %arg0, %arg1 : i32, i32
  }
}

module attributes {stable_mosaic.version = 11 : i64} {
  func.func @kernel(%arg0: i32, %arg1: i32, %arg2: memref<16x256xbf16, #tpu.memory_space<vmem>>, %arg3: memref<1x256xbf16, #tpu.memory_space<vmem>>, %arg4: memref<256x384xbf16, #tpu.memory_space<vmem>>, %arg5: memref<16x384xbf16, #tpu.memory_space<vmem>>, %arg6: memref<16x256xbf16, #tpu.memory_space<vmem>>) attributes {dimension_semantics = [#tpu.dimension_semantics<parallel>, #tpu.dimension_semantics<arbitrary>], iteration_bounds = array<i64: 1, 2>, scalar_prefetch = 0 : i64, scratch_operands = 1 : i64, tpu.core_type = #tpu.core_type<tc>, window_params = [{transform_indices = @transform_0, window_bounds = array<i64: 16, 256>}, {pipeline_mode = #tpu.pipeline_mode<synchronous>, transform_indices = @transform_1, window_bounds = array<i64: 1, 256>}, {transform_indices = @transform_2, window_bounds = array<i64: 256, 384>}, {transform_indices = @transform_3, window_bounds = array<i64: 16, 384>}]} {
    %c0_i32 = arith.constant 0 : i32
    %0 = arith.cmpi eq, %arg1, %c0_i32 : i32
    %1 = arith.extui %0 : i1 to i32
    %c0_i32_0 = arith.constant 0 : i32
    %2 = arith.cmpi ne, %1, %c0_i32_0 : i32
    scf.if %2 {
      %c0_6 = arith.constant 0 : index
      %c0_7 = arith.constant 0 : index
      %8 = vector.load %arg2[%c0_6, %c0_7] : memref<16x256xbf16, #tpu.memory_space<vmem>>, vector<16x256xbf16>
      %9 = arith.extf %8 : vector<16x256xbf16> to vector<16x256xf32>
      %10 = arith.mulf %9, %9 : vector<16x256xf32>
      %cst_8 = arith.constant dense<0.000000e+00> : vector<16xf32>
      %11 = vector.multi_reduction <add>, %10, %cst_8 [1] : vector<16x256xf32> to vector<16xf32>
      %12 = vector.shape_cast %11 : vector<16xf32> to vector<16x1xf32>
      %cst_9 = arith.constant 2.560000e+02 : f32
      %13 = vector.broadcast %cst_9 : f32 to vector<16x1xf32>
      %14 = arith.divf %12, %13 : vector<16x1xf32>
      %cst_10 = arith.constant 9.99999997E-7 : f32
      %15 = vector.broadcast %cst_10 : f32 to vector<16x1xf32>
      %16 = arith.addf %14, %15 : vector<16x1xf32>
      %17 = math.rsqrt %16 : vector<16x1xf32>
      %18 = vector.broadcast %17 : vector<16x1xf32> to vector<16x256xf32>
      %19 = arith.mulf %9, %18 : vector<16x256xf32>
      %20 = arith.truncf %19 : vector<16x256xf32> to vector<16x256xbf16>
      %c0_11 = arith.constant 0 : index
      %c0_12 = arith.constant 0 : index
      %21 = vector.load %arg3[%c0_11, %c0_12] : memref<1x256xbf16, #tpu.memory_space<vmem>>, vector<1x256xbf16>
      %22 = vector.broadcast %21 : vector<1x256xbf16> to vector<16x256xbf16>
      %23 = arith.mulf %20, %22 : vector<16x256xbf16>
      %c0_13 = arith.constant 0 : index
      %c0_14 = arith.constant 0 : index
      %24 = vector.load %arg6[%c0_13, %c0_14] : memref<16x256xbf16, #tpu.memory_space<vmem>>, vector<16x256xbf16>
      tpu.vector_store %arg6[%c0_13, %c0_14], %23 {strides = array<i32>} : memref<16x256xbf16, #tpu.memory_space<vmem>>, vector<16x256xbf16>,
    } else {
    }
    %c0 = arith.constant 0 : index
    %c0_1 = arith.constant 0 : index
    %3 = vector.load %arg6[%c0, %c0_1] : memref<16x256xbf16, #tpu.memory_space<vmem>>, vector<16x256xbf16>
    %c0_2 = arith.constant 0 : index
    %c0_3 = arith.constant 0 : index
    %4 = vector.load %arg4[%c0_2, %c0_3] : memref<256x384xbf16, #tpu.memory_space<vmem>>, vector<256x384xbf16>
    %cst = arith.constant dense<0.000000e+00> : vector<16x384xf32>
    %5 = tpu.matmul %3, %4, %cst {dimension_numbers = #tpu.dot_dimension_numbers<[1], [0], [0], [1], [0, 0, 1, 1], [], []>} : vector<16x256xbf16>, vector<256x384xbf16>, vector<16x384xf32> -> vector<16x384xf32>
    %6 = arith.truncf %5 : vector<16x384xf32> to vector<16x384xbf16>
    %c0_4 = arith.constant 0 : index
    %c0_5 = arith.constant 0 : index
    %7 = vector.load %arg5[%c0_4, %c0_5] : memref<16x384xbf16, #tpu.memory_space<vmem>>, vector<16x384xbf16>
    tpu.vector_store %arg5[%c0_4, %c0_5], %6 {strides = array<i32>} : memref<16x384xbf16, #tpu.memory_space<vmem>>, vector<16x384xbf16>,
    return
  }
  func.func @transform_0(%arg0: i32, %arg1: i32) -> (i32, i32) {
    %c0_i32 = arith.constant 0 : i32
    %c0_i32_0 = arith.constant 0 : i32
    return %arg0, %c0_i32 : i32, i32
  }
  func.func @transform_1(%arg0: i32, %arg1: i32) -> (i32, i32) {
    %c0_i32 = arith.constant 0 : i32
    %c0_i32_0 = arith.constant 0 : i32
    %c0_i32_1 = arith.constant 0 : i32
    return %c0_i32, %c0_i32_0 : i32, i32
  }
  func.func @transform_2(%arg0: i32, %arg1: i32) -> (i32, i32) {
    %c0_i32 = arith.constant 0 : i32
    %c0_i32_0 = arith.constant 0 : i32
    return %c0_i32, %arg1 : i32, i32
  }
  func.func @transform_3(%arg0: i32, %arg1: i32) -> (i32, i32) {
    %c0_i32 = arith.constant 0 : i32
    return %arg0, %arg1 : i32, i32
  }
}

module attributes {stable_mosaic.version = 11 : i64} {
  func.func @_matmul_residual_kernel(%arg0: i32, %arg1: i32, %arg2: i32, %arg3: memref<16x256xbf16, #tpu.memory_space<vmem>>, %arg4: memref<256x256xbf16, #tpu.memory_space<vmem>>, %arg5: memref<16x256xbf16, #tpu.memory_space<vmem>>, %arg6: memref<16x256xbf16, #tpu.memory_space<vmem>>, %arg7: memref<16x256xf32, #tpu.memory_space<vmem>>) attributes {dimension_semantics = [#tpu.dimension_semantics<parallel>, #tpu.dimension_semantics<parallel>, #tpu.dimension_semantics<arbitrary>], iteration_bounds = array<i64: 1, 1, 1>, scalar_prefetch = 0 : i64, scratch_operands = 1 : i64, tpu.core_type = #tpu.core_type<tc>, window_params = [{transform_indices = @transform_0, window_bounds = array<i64: 16, 256>}, {transform_indices = @transform_1, window_bounds = array<i64: 256, 256>}, {transform_indices = @transform_2, window_bounds = array<i64: 16, 256>}, {transform_indices = @transform_3, window_bounds = array<i64: 16, 256>}]} {
    %c0_i32 = arith.constant 0 : i32
    %0 = arith.cmpi eq, %arg2, %c0_i32 : i32
    %1 = arith.extui %0 : i1 to i32
    %c0_i32_0 = arith.constant 0 : i32
    %2 = arith.cmpi ne, %1, %c0_i32_0 : i32
    scf.if %2 {
      %cst_10 = arith.constant 0.000000e+00 : f32
      %12 = vector.broadcast %cst_10 : f32 to vector<16x256xf32>
      %c0_11 = arith.constant 0 : index
      %c0_12 = arith.constant 0 : index
      %13 = vector.load %arg7[%c0_11, %c0_12] : memref<16x256xf32, #tpu.memory_space<vmem>>, vector<16x256xf32>
      tpu.vector_store %arg7[%c0_11, %c0_12], %12 {strides = array<i32>} : memref<16x256xf32, #tpu.memory_space<vmem>>, vector<16x256xf32>,
    } else {
    }
    %c0 = arith.constant 0 : index
    %c0_1 = arith.constant 0 : index
    %3 = vector.load %arg7[%c0, %c0_1] : memref<16x256xf32, #tpu.memory_space<vmem>>, vector<16x256xf32>
    %c0_2 = arith.constant 0 : index
    %c0_3 = arith.constant 0 : index
    %4 = vector.load %arg3[%c0_2, %c0_3] : memref<16x256xbf16, #tpu.memory_space<vmem>>, vector<16x256xbf16>
    %c0_4 = arith.constant 0 : index
    %c0_5 = arith.constant 0 : index
    %5 = vector.load %arg4[%c0_4, %c0_5] : memref<256x256xbf16, #tpu.memory_space<vmem>>, vector<256x256xbf16>
    %cst = arith.constant dense<0.000000e+00> : vector<16x256xf32>
    %6 = tpu.matmul %4, %5, %cst {dimension_numbers = #tpu.dot_dimension_numbers<[1], [0], [0], [1], [0, 0, 1, 1], [], []>} : vector<16x256xbf16>, vector<256x256xbf16>, vector<16x256xf32> -> vector<16x256xf32>
    %7 = arith.addf %3, %6 : vector<16x256xf32>
    %c0_6 = arith.constant 0 : index
    %c0_7 = arith.constant 0 : index
    %8 = vector.load %arg7[%c0_6, %c0_7] : memref<16x256xf32, #tpu.memory_space<vmem>>, vector<16x256xf32>
    tpu.vector_store %arg7[%c0_6, %c0_7], %7 {strides = array<i32>} : memref<16x256xf32, #tpu.memory_space<vmem>>, vector<16x256xf32>,
    %c0_i32_8 = arith.constant 0 : i32
    %9 = arith.cmpi eq, %arg2, %c0_i32_8 : i32
    %10 = arith.extui %9 : i1 to i32
    %c0_i32_9 = arith.constant 0 : i32
    %11 = arith.cmpi ne, %10, %c0_i32_9 : i32
    scf.if %11 {
      %c0_10 = arith.constant 0 : index
      %c0_11 = arith.constant 0 : index
      %12 = vector.load %arg5[%c0_10, %c0_11] : memref<16x256xbf16, #tpu.memory_space<vmem>>, vector<16x256xbf16>
      %13 = arith.extf %12 : vector<16x256xbf16> to vector<16x256xf32>
      %c0_12 = arith.constant 0 : index
      %c0_13 = arith.constant 0 : index
      %14 = vector.load %arg7[%c0_12, %c0_13] : memref<16x256xf32, #tpu.memory_space<vmem>>, vector<16x256xf32>
      %15 = arith.addf %13, %14 : vector<16x256xf32>
      %16 = arith.truncf %15 : vector<16x256xf32> to vector<16x256xbf16>
      %c0_14 = arith.constant 0 : index
      %c0_15 = arith.constant 0 : index
      %17 = vector.load %arg6[%c0_14, %c0_15] : memref<16x256xbf16, #tpu.memory_space<vmem>>, vector<16x256xbf16>
      tpu.vector_store %arg6[%c0_14, %c0_15], %16 {strides = array<i32>} : memref<16x256xbf16, #tpu.memory_space<vmem>>, vector<16x256xbf16>,
    } else {
    }
    return
  }
  func.func @transform_0(%arg0: i32, %arg1: i32, %arg2: i32) -> (i32, i32) {
    %c0_i32 = arith.constant 0 : i32
    return %arg0, %arg2 : i32, i32
  }
  func.func @transform_1(%arg0: i32, %arg1: i32, %arg2: i32) -> (i32, i32) {
    %c0_i32 = arith.constant 0 : i32
    return %arg2, %arg1 : i32, i32
  }
  func.func @transform_2(%arg0: i32, %arg1: i32, %arg2: i32) -> (i32, i32) {
    %c0_i32 = arith.constant 0 : i32
    return %arg0, %arg1 : i32, i32
  }
  func.func @transform_3(%arg0: i32, %arg1: i32, %arg2: i32) -> (i32, i32) {
    %c0_i32 = arith.constant 0 : i32
    return %arg0, %arg1 : i32, i32
  }
}

module attributes {stable_mosaic.version = 11 : i64} {
  func.func @kernel(%arg0: i32, %arg1: i32, %arg2: memref<16x256xbf16, #tpu.memory_space<vmem>>, %arg3: memref<1x256xbf16, #tpu.memory_space<vmem>>, %arg4: memref<256x512xbf16, #tpu.memory_space<vmem>>, %arg5: memref<16x512xf32, #tpu.memory_space<vmem>>, %arg6: memref<16x256xbf16, #tpu.memory_space<vmem>>) attributes {dimension_semantics = [#tpu.dimension_semantics<parallel>, #tpu.dimension_semantics<arbitrary>], iteration_bounds = array<i64: 1, 1>, scalar_prefetch = 0 : i64, scratch_operands = 1 : i64, tpu.core_type = #tpu.core_type<tc>, window_params = [{transform_indices = @transform_0, window_bounds = array<i64: 16, 256>}, {pipeline_mode = #tpu.pipeline_mode<synchronous>, transform_indices = @transform_1, window_bounds = array<i64: 1, 256>}, {transform_indices = @transform_2, window_bounds = array<i64: 256, 512>}, {transform_indices = @transform_3, window_bounds = array<i64: 16, 512>}]} {
    %c0_i32 = arith.constant 0 : i32
    %0 = arith.cmpi eq, %arg1, %c0_i32 : i32
    %1 = arith.extui %0 : i1 to i32
    %c0_i32_0 = arith.constant 0 : i32
    %2 = arith.cmpi ne, %1, %c0_i32_0 : i32
    scf.if %2 {
      %c0_6 = arith.constant 0 : index
      %c0_7 = arith.constant 0 : index
      %7 = vector.load %arg2[%c0_6, %c0_7] : memref<16x256xbf16, #tpu.memory_space<vmem>>, vector<16x256xbf16>
      %8 = arith.extf %7 : vector<16x256xbf16> to vector<16x256xf32>
      %9 = arith.mulf %8, %8 : vector<16x256xf32>
      %cst_8 = arith.constant dense<0.000000e+00> : vector<16xf32>
      %10 = vector.multi_reduction <add>, %9, %cst_8 [1] : vector<16x256xf32> to vector<16xf32>
      %11 = vector.shape_cast %10 : vector<16xf32> to vector<16x1xf32>
      %cst_9 = arith.constant 2.560000e+02 : f32
      %12 = vector.broadcast %cst_9 : f32 to vector<16x1xf32>
      %13 = arith.divf %11, %12 : vector<16x1xf32>
      %cst_10 = arith.constant 9.99999997E-7 : f32
      %14 = vector.broadcast %cst_10 : f32 to vector<16x1xf32>
      %15 = arith.addf %13, %14 : vector<16x1xf32>
      %16 = math.rsqrt %15 : vector<16x1xf32>
      %17 = vector.broadcast %16 : vector<16x1xf32> to vector<16x256xf32>
      %18 = arith.mulf %8, %17 : vector<16x256xf32>
      %19 = arith.truncf %18 : vector<16x256xf32> to vector<16x256xbf16>
      %c0_11 = arith.constant 0 : index
      %c0_12 = arith.constant 0 : index
      %20 = vector.load %arg3[%c0_11, %c0_12] : memref<1x256xbf16, #tpu.memory_space<vmem>>, vector<1x256xbf16>
      %21 = vector.broadcast %20 : vector<1x256xbf16> to vector<16x256xbf16>
      %22 = arith.mulf %19, %21 : vector<16x256xbf16>
      %c0_13 = arith.constant 0 : index
      %c0_14 = arith.constant 0 : index
      %23 = vector.load %arg6[%c0_13, %c0_14] : memref<16x256xbf16, #tpu.memory_space<vmem>>, vector<16x256xbf16>
      tpu.vector_store %arg6[%c0_13, %c0_14], %22 {strides = array<i32>} : memref<16x256xbf16, #tpu.memory_space<vmem>>, vector<16x256xbf16>,
    } else {
    }
    %c0 = arith.constant 0 : index
    %c0_1 = arith.constant 0 : index
    %3 = vector.load %arg6[%c0, %c0_1] : memref<16x256xbf16, #tpu.memory_space<vmem>>, vector<16x256xbf16>
    %c0_2 = arith.constant 0 : index
    %c0_3 = arith.constant 0 : index
    %4 = vector.load %arg4[%c0_2, %c0_3] : memref<256x512xbf16, #tpu.memory_space<vmem>>, vector<256x512xbf16>
    %cst = arith.constant dense<0.000000e+00> : vector<16x512xf32>
    %5 = tpu.matmul %3, %4, %cst {dimension_numbers = #tpu.dot_dimension_numbers<[1], [0], [0], [1], [0, 0, 1, 1], [], []>} : vector<16x256xbf16>, vector<256x512xbf16>, vector<16x512xf32> -> vector<16x512xf32>
    %c0_4 = arith.constant 0 : index
    %c0_5 = arith.constant 0 : index
    %6 = vector.load %arg5[%c0_4, %c0_5] : memref<16x512xf32, #tpu.memory_space<vmem>>, vector<16x512xf32>
    tpu.vector_store %arg5[%c0_4, %c0_5], %5 {strides = array<i32>} : memref<16x512xf32, #tpu.memory_space<vmem>>, vector<16x512xf32>,
    return
  }
  func.func @transform_0(%arg0: i32, %arg1: i32) -> (i32, i32) {
    %c0_i32 = arith.constant 0 : i32
    %c0_i32_0 = arith.constant 0 : i32
    return %arg0, %c0_i32 : i32, i32
  }
  func.func @transform_1(%arg0: i32, %arg1: i32) -> (i32, i32) {
    %c0_i32 = arith.constant 0 : i32
    %c0_i32_0 = arith.constant 0 : i32
    %c0_i32_1 = arith.constant 0 : i32
    return %c0_i32, %c0_i32_0 : i32, i32
  }
  func.func @transform_2(%arg0: i32, %arg1: i32) -> (i32, i32) {
    %c0_i32 = arith.constant 0 : i32
    %c0_i32_0 = arith.constant 0 : i32
    return %c0_i32, %arg1 : i32, i32
  }
  func.func @transform_3(%arg0: i32, %arg1: i32) -> (i32, i32) {
    %c0_i32 = arith.constant 0 : i32
    return %arg0, %arg1 : i32, i32
  }
}

</mosaic_0001>

<llo_original>
// kernel: transformer_forward.12
$region0: #{transformer_forward.12}
  #allocation0 [shape = 'u32[]', space=smem, size = 0x4, offset = 0x4, fixed_abs, tag = 'smem constant byte address 0x4 - core index']
  #allocation1 [shape = 'u32[144,128]{1,0:T(1,128)}', space=vmem, size = 0x12000, scoped, tag = 'internal scratch']
  %s0 = inlined_call_operand.vmem [shape: bf16[2,8,768], index: 0, kind: input, shape index: {}, may-alias: {0,1,2}]
  %s1 = inlined_call_operand.vmem [shape: bf16[2,8,768], index: 1, kind: input, shape index: {}, may-alias: {0,1,2}]
  %s2 = inlined_call_operand.vmem [shape: bf16[2,8,768], index: 2, kind: input, shape index: {}, may-alias: {0,1,2}]
  %s3 = inlined_call_operand.vmem [shape: bf16[8,128], index: 3, kind: input, shape index: {}]
  %s4 = inlined_call_operand.vmem [shape: bf16[8,128], index: 4, kind: input, shape index: {}]
  %s5 = inlined_call_operand.vmem [shape: bf16[2,8,256], index: 5, kind: output, shape index: {}]
  %s6 = sld [smem:[#allocation0]]
  $region53: #{transformer_forward.12} parent=0
    _
  %s8 = ssub.s32 1, %s6
  %s9 = scalar_select 0, %s8, %s6
  loop: start=0, step=1, limit=6
  $region2: #{transformer_forward.12} parent=0 // loop_pre_header
    _
  $region3: #{transformer_forward.12} parent=0 // loop_header
    %s11 = sphi 0, %s15
    %p12 = scmp.ge.s32.totalorder %s11, 6
    %s18 = sphi 0, %s30
    %s19 = sphi 0, %s26
    %s20 = sphi 0, %s18
    %s21 = sphi 0, %s19
    %s22 = sphi 0, %s20
    %s23 = sphi 0, %s21
    %s35 = sphi 0, %s37
    %s38 = sphi 0, %s35
    %s39 = sphi 0, %s38
    %s55 = sphi 0, %s39
    %s65 = sphi 0, %s67
    %s68 = sphi 0, %s65
    %s69 = sphi 0, %s68
    %s85 = sphi 0, %s69
    %s95 = sphi 0, %s97
    %s98 = sphi 0, %s95
    %s99 = sphi 0, %s98
    %s115 = sphi 0, %s99
    %s119 = sphi 0, %s119
    %s121 = sphi 0, %s119
    %s122 = sphi 0, %s121
    %s136 = sphi 0, %s122
    %s140 = sphi 0, %s140
    %s142 = sphi 0, %s140
    %s143 = sphi 0, %s142
    %s157 = sphi 0, %s143
    %s165 = sphi 0, %s167
    %s168 = sphi 0, %s165
    %s169 = sphi 0, %s168
    %s185 = sphi 0, %s169
  $region4: #{transformer_forward.12} parent=0 // loop_header_branch
    %14 = sbr.rel (%p12) target = $region8
  $region5: #{transformer_forward.12} parent=0 // loop_body
    %s16 = ssub.s32 %s11, 1
    %s17 = ssub.s32 %s11, 2
    %s24 = sadd.s32 1, %s19
    %p25 = scmp.ge.s32.totalorder %s24, 2
    %s26 = scalar_select %p25, 0, %s24
    %s27 = sadd.s32 1, %s18
    %s28 = scalar_select %p25, %s27, %s18
    %p29 = scmp.ge.s32.totalorder %s28, 2
    %s30 = scalar_select %p29, 0, %s28
    %s31 = ssub.s32 %s18, %s30
    %s32 = ssub.s32 %s19, %s26
    %s33 = sor.u32 %s31, %s32
    %p34 = scmp.eq.s32.totalorder %s33, 0
    %s36 = sadd.s32 %s35, 1
    %s37 = scalar_select %p34, %s35, %s36
    %p40 = pneg %p34
    %p41 = scmp.eq.s32.totalorder %s11, 3
    %p42 = por %p40, %p41
    %p43 = scmp.ne.s32.totalorder %s35, %s38
    %p44 = scmp.eq.s32.totalorder %s11, 0
    %p45 = por %p43, %p44
    %p46 = scmp.ne.s32.totalorder %s35, %s38
    %p47 = scmp.eq.s32.totalorder %s16, 3
    %p48 = por %p46, %p47
    %p49 = scmp.ne.s32.totalorder %s38, %s39
    %p50 = scmp.eq.s32.totalorder %s16, 0
    %p51 = por %p49, %p50
    %p52 = scmp.ne.s32.totalorder %s38, %s39
    %p53 = scmp.eq.s32.totalorder %s17, 3
    %p54 = por %p52, %p53
    %p56 = scmp.ne.s32.totalorder %s39, %s55
    %p57 = scmp.eq.s32.totalorder %s17, 0
    %p58 = por %p56, %p57
    %s59 = sadd.s32 %s19, 2
    %s60 = sadd.s32 %s26, 2
    %s61 = ssub.s32 %s18, %s30
    %s62 = ssub.s32 %s59, %s60
    %s63 = sor.u32 %s61, %s62
    %p64 = scmp.eq.s32.totalorder %s63, 0
    %s66 = sadd.s32 %s65, 1
    %s67 = scalar_select %p64, %s65, %s66
    %p70 = pneg %p64
    %p71 = scmp.eq.s32.totalorder %s11, 3
    %p72 = por %p70, %p71
    %p73 = scmp.ne.s32.totalorder %s65, %s68
    %p74 = scmp.eq.s32.totalorder %s11, 0
    %p75 = por %p73, %p74
    %p76 = scmp.ne.s32.totalorder %s65, %s68
    %p77 = scmp.eq.s32.totalorder %s16, 3
    %p78 = por %p76, %p77
    %p79 = scmp.ne.s32.totalorder %s68, %s69
    %p80 = scmp.eq.s32.totalorder %s16, 0
    %p81 = por %p79, %p80
    %p82 = scmp.ne.s32.totalorder %s68, %s69
    %p83 = scmp.eq.s32.totalorder %s17, 3
    %p84 = por %p82, %p83
    %p86 = scmp.ne.s32.totalorder %s69, %s85
    %p87 = scmp.eq.s32.totalorder %s17, 0
    %p88 = por %p86, %p87
    %s89 = sadd.s32 %s19, 4
    %s90 = sadd.s32 %s26, 4
    %s91 = ssub.s32 %s18, %s30
    %s92 = ssub.s32 %s89, %s90
    %s93 = sor.u32 %s91, %s92
    %p94 = scmp.eq.s32.totalorder %s93, 0
    %s96 = sadd.s32 %s95, 1
    %s97 = scalar_select %p94, %s95, %s96
    %p100 = pneg %p94
    %p101 = scmp.eq.s32.totalorder %s11, 3
    %p102 = por %p100, %p101
    %p103 = scmp.ne.s32.totalorder %s95, %s98
    %p104 = scmp.eq.s32.totalorder %s11, 0
    %p105 = por %p103, %p104
    %p106 = scmp.ne.s32.totalorder %s95, %s98
    %p107 = scmp.eq.s32.totalorder %s16, 3
    %p108 = por %p106, %p107
    %p109 = scmp.ne.s32.totalorder %s98, %s99
    %p110 = scmp.eq.s32.totalorder %s16, 0
    %p111 = por %p109, %p110
    %p112 = scmp.ne.s32.totalorder %s98, %s99
    %p113 = scmp.eq.s32.totalorder %s17, 3
    %p114 = por %p112, %p113
    %p116 = scmp.ne.s32.totalorder %s99, %s115
    %p117 = scmp.eq.s32.totalorder %s17, 0
    %p118 = por %p116, %p117
    %s120 = sadd.s32 %s119, 1
    %p123 = scmp.eq.s32.totalorder %s11, 3
    %p124 = scmp.ne.s32.totalorder %s119, %s121
    %p125 = scmp.eq.s32.totalorder %s11, 0
    %p126 = por %p124, %p125
    %p127 = scmp.ne.s32.totalorder %s119, %s121
    %p128 = scmp.eq.s32.totalorder %s16, 3
    %p129 = por %p127, %p128
    %p130 = scmp.ne.s32.totalorder %s121, %s122
    %p131 = scmp.eq.s32.totalorder %s16, 0
    %p132 = por %p130, %p131
    %p133 = scmp.ne.s32.totalorder %s121, %s122
    %p134 = scmp.eq.s32.totalorder %s17, 3
    %p135 = por %p133, %p134
    %p137 = scmp.ne.s32.totalorder %s122, %s136
    %p138 = scmp.eq.s32.totalorder %s17, 0
    %p139 = por %p137, %p138
    %s141 = sadd.s32 %s140, 1
    %p144 = scmp.eq.s32.totalorder %s11, 3
    %p145 = scmp.ne.s32.totalorder %s140, %s142
    %p146 = scmp.eq.s32.totalorder %s11, 0
    %p147 = por %p145, %p146
    %p148 = scmp.ne.s32.totalorder %s140, %s142
    %p149 = scmp.eq.s32.totalorder %s16, 3
    %p150 = por %p148, %p149
    %p151 = scmp.ne.s32.totalorder %s142, %s143
    %p152 = scmp.eq.s32.totalorder %s16, 0
    %p153 = por %p151, %p152
    %p154 = scmp.ne.s32.totalorder %s142, %s143
    %p155 = scmp.eq.s32.totalorder %s17, 3
    %p156 = por %p154, %p155
    %p158 = scmp.ne.s32.totalorder %s143, %s157
    %p159 = scmp.eq.s32.totalorder %s17, 0
    %p160 = por %p158, %p159
    %s161 = ssub.s32 %s18, %s30
    %s162 = ssub.s32 %s19, %s26
    %s163 = sor.u32 %s161, %s162
    %p164 = scmp.eq.s32.totalorder %s163, 0
    %s166 = sadd.s32 %s165, 1
    %s167 = scalar_select %p164, %s165, %s166
    %p170 = pneg %p164
    %p171 = scmp.eq.s32.totalorder %s11, 3
    %p172 = por %p170, %p171
    %p173 = scmp.ne.s32.totalorder %s165, %s168
    %p174 = scmp.eq.s32.totalorder %s11, 0
    %p175 = por %p173, %p174
    %p176 = scmp.ne.s32.totalorder %s165, %s168
    %p177 = scmp.eq.s32.totalorder %s16, 3
    %p178 = por %p176, %p177
    %p179 = scmp.ne.s32.totalorder %s168, %s169
    %p180 = scmp.eq.s32.totalorder %s16, 0
    %p181 = por %p179, %p180
    %p182 = scmp.ne.s32.totalorder %s168, %s169
    %p183 = scmp.eq.s32.totalorder %s17, 3
    %p184 = por %p182, %p183
    %p186 = scmp.ne.s32.totalorder %s169, %s185
    %p187 = scmp.eq.s32.totalorder %s17, 0
    %p188 = por %p186, %p187
    %p189 = scmp.le.s32.totalorder 1, %s11
    %p190 = scmp.lt.s32.totalorder %s11, 5
    %p191 = pnand %p189, %p190
    %p192 = pneg %p191
    // Predicated region
    $region9: #{transformer_forward.12} parent=5 // pred_check
      _
    $region10: #{transformer_forward.12} parent=5 // pred_check_branch
      %194 = sbr.rel (%p191) target = $region12
    $region11: #{transformer_forward.12} parent=5 // pred_region
      %s195 = ssub.s32 %s11, 1
      // Predicated region
      $region13: #{transformer_forward.12} parent=11 // pred_check
        %p196 = pneg %p132
      $region14: #{transformer_forward.12} parent=11 // pred_check_branch
        %198 = sbr.rel (%p196) target = $region16
      $region15: #{transformer_forward.12} parent=11 // pred_region
        _
      $region16: #{transformer_forward.12} parent=11 // pred_fallthru
        _
      // Predicated region
      $region17: #{transformer_forward.12} parent=11 // pred_check
        %p199 = pneg %p153
      $region18: #{transformer_forward.12} parent=11 // pred_check_branch
        %201 = sbr.rel (%p199) target = $region20
      $region19: #{transformer_forward.12} parent=11 // pred_region
        _
      $region20: #{transformer_forward.12} parent=11 // pred_fallthru
        _
    $region12: #{transformer_forward.12} parent=5 // pred_fallthru
      _
    %p202 = scmp.lt.s32.totalorder %s11, 4
    // Predicated region
    $region21: #{transformer_forward.12} parent=5 // pred_check
      %p203 = pneg %p202
    $region22: #{transformer_forward.12} parent=5 // pred_check_branch
      %205 = sbr.rel (%p203) target = $region24
    $region23: #{transformer_forward.12} parent=5 // pred_region
      // Predicated region
      $region25: #{transformer_forward.12} parent=23 // pred_check
        %p206 = pneg %p45
      $region26: #{transformer_forward.12} parent=23 // pred_check_branch
        %208 = sbr.rel (%p206) target = $region28
      $region27: #{transformer_forward.12} parent=23 // pred_region
        %p209 = scmp.lt.s32.totalorder %s18, 1
        %s210 = scalar_select %p209, %s18, 1
        %p211 = scmp.lt.s32.totalorder %s19, 5
        %s212 = scalar_select %p211, %s19, 5
        %s213 = smul.addr %s210, 6
        %s214 = sadd.s32 %s212, %s213
        %s215 = smul.addr %s214, 4
        %s216 = scalar_lea.vmem %s0, %s215
      $region28: #{transformer_forward.12} parent=23 // pred_fallthru
        _
      // Predicated region
      $region29: #{transformer_forward.12} parent=23 // pred_check
        %p217 = pneg %p75
      $region30: #{transformer_forward.12} parent=23 // pred_check_branch
        %219 = sbr.rel (%p217) target = $region32
      $region31: #{transformer_forward.12} parent=23 // pred_region
        %s220 = sadd.s32 %s19, 2
        %p221 = scmp.lt.s32.totalorder %s18, 1
        %s222 = scalar_select %p221, %s18, 1
        %p223 = scmp.lt.s32.totalorder %s220, 5
        %s224 = scalar_select %p223, %s220, 5
        %s225 = smul.addr %s222, 6
        %s226 = sadd.s32 %s224, %s225
        %s227 = smul.addr %s226, 4
        %s228 = scalar_lea.vmem %s1, %s227
        %s229 = sadd.s32 %s19, 2
      $region32: #{transformer_forward.12} parent=23 // pred_fallthru
        _
      // Predicated region
      $region33: #{transformer_forward.12} parent=23 // pred_check
        %p230 = pneg %p105
      $region34: #{transformer_forward.12} parent=23 // pred_check_branch
        %232 = sbr.rel (%p230) target = $region36
      $region35: #{transformer_forward.12} parent=23 // pred_region
        %s233 = sadd.s32 %s19, 4
        %p234 = scmp.lt.s32.totalorder %s18, 1
        %s235 = scalar_select %p234, %s18, 1
        %p236 = scmp.lt.s32.totalorder %s233, 5
        %s237 = scalar_select %p236, %s233, 5
        %s238 = smul.addr %s235, 6
        %s239 = sadd.s32 %s237, %s238
        %s240 = smul.addr %s239, 4
        %s241 = scalar_lea.vmem %s2, %s240
        %s242 = sadd.s32 %s19, 4
      $region36: #{transformer_forward.12} parent=23 // pred_fallthru
        _
    $region24: #{transformer_forward.12} parent=5 // pred_fallthru
      _
    %p243 = scmp.le.s32.totalorder 1, %s11
    %p244 = scmp.lt.s32.totalorder %s11, 5
    %p245 = pnand %p243, %p244
    %p246 = pneg %p245
    // Predicated region
    $region37: #{transformer_forward.12} parent=5 // pred_check
      _
    $region38: #{transformer_forward.12} parent=5 // pred_check_branch
      %248 = sbr.rel (%p245) target = $region40
    $region39: #{transformer_forward.12} parent=5 // pred_region
      %s249 = ssub.s32 %s11, 1
      %p250 = scmp.lt.s32.totalorder %s20, 1
      %s251 = scalar_select %p250, %s20, 1
      %p252 = scmp.lt.s32.totalorder %s21, 5
      %s253 = scalar_select %p252, %s21, 5
      %s254 = smul.addr %s251, 6
      %s255 = sadd.s32 %s253, %s254
      %s256 = smul.addr %s255, 4
      %s257 = scalar_lea.vmem %s0, %s256
      %p258 = pneg %p51
      %p259 = pneg %p48
      %s260 = sadd.s32 %s21, 2
      %p261 = scmp.lt.s32.totalorder %s20, 1
      %s262 = scalar_select %p261, %s20, 1
      %p263 = scmp.lt.s32.totalorder %s260, 5
      %s264 = scalar_select %p263, %s260, 5
      %s265 = smul.addr %s262, 6
      %s266 = sadd.s32 %s264, %s265
      %s267 = smul.addr %s266, 4
      %s268 = scalar_lea.vmem %s1, %s267
      %p269 = pneg %p81
      %p270 = pneg %p78
      %s271 = sadd.s32 %s21, 4
      %p272 = scmp.lt.s32.totalorder %s20, 1
      %s273 = scalar_select %p272, %s20, 1
      %p274 = scmp.lt.s32.totalorder %s271, 5
      %s275 = scalar_select %p274, %s271, 5
      %s276 = smul.addr %s273, 6
      %s277 = sadd.s32 %s275, %s276
      %s278 = smul.addr %s277, 4
      %s279 = scalar_lea.vmem %s2, %s278
      %p280 = pneg %p111
      %p281 = pneg %p108
      %p282 = pneg %p132
      %p283 = pneg %p129
      %p284 = pneg %p153
      %p285 = pneg %p150
      %p286 = pneg %p181
      %p287 = pneg %p178
      %p288 = scmp.lt.s32.totalorder %s20, 1
      %s289 = scalar_select %p288, %s20, 1
      %p290 = scmp.lt.s32.totalorder %s21, 1
      %s291 = scalar_select %p290, %s21, 1
      %s292 = smul.addr %s289, 2
      %s293 = sadd.s32 %s291, %s292
      %s294 = smul.addr %s293, 4
      %s295 = scalar_lea.vmem %s5, %s294
      %p296 = scmp.lt.s32.totalorder %s20, 1
      %s297 = scalar_select %p296, %s20, 1
      %p298 = scmp.lt.s32.totalorder %s21, 5
      %s299 = scalar_select %p298, %s21, 5
      %s300 = smul.addr %s297, 6
      %s301 = sadd.s32 %s299, %s300
      %s302 = smul.addr %s301, 4
      %s303 = scalar_lea.vmem %s0, %s302
      %s304 = sadd.s32 %s21, 2
      %p305 = scmp.lt.s32.totalorder %s20, 1
      %s306 = scalar_select %p305, %s20, 1
      %p307 = scmp.lt.s32.totalorder %s304, 5
      %s308 = scalar_select %p307, %s304, 5
      %s309 = smul.addr %s306, 6
      %s310 = sadd.s32 %s308, %s309
      %s311 = smul.addr %s310, 4
      %s312 = scalar_lea.vmem %s1, %s311
      %s313 = sadd.s32 %s21, 2
      %s314 = sadd.s32 %s21, 4
      %p315 = scmp.lt.s32.totalorder %s20, 1
      %s316 = scalar_select %p315, %s20, 1
      %p317 = scmp.lt.s32.totalorder %s314, 5
      %s318 = scalar_select %p317, %s314, 5
      %s319 = smul.addr %s316, 6
      %s320 = sadd.s32 %s318, %s319
      %s321 = smul.addr %s320, 4
      %s322 = scalar_lea.vmem %s2, %s321
      %s323 = sadd.s32 %s21, 4
      %p324 = scmp.lt.s32.totalorder %s20, 1
      %s325 = scalar_select %p324, %s20, 1
      %p326 = scmp.lt.s32.totalorder %s21, 1
      %s327 = scalar_select %p326, %s21, 1
      %s328 = smul.addr %s325, 2
      %s329 = sadd.s32 %s327, %s328
      %s330 = smul.addr %s329, 4
      %s331 = scalar_lea.vmem %s5, %s330
      %v333 = vld [vmem:[%s3] sm:$0xf]
      %v334 = vunpack.c.l.bf16 %v333
      %v335 = vld [vmem:[%s4] sm:$0xf]
      %v336 = vunpack.c.l.bf16 %v335
      %v337 = vlaneseq
      %v338 = vshrl.u32 %v337, 7
      %v339 = vlaneseq
      %v340 = vand.u32 %v339, 127
      %vm341 = vcmp.le.s32.totalorder %v340, %v338
      %v342 = vld [vmem:[%s303] sm:$0xf]
      %v343 = vunpack.c.l.bf16 %v342
      %v344 = vld [vmem:[%s312] sm:$0xf]
      %v345 = vunpack.c.l.bf16 %v344
      %v346 = vld [vmem:[%s322] sm:$0xf]
      %v347 = vmul.f32 %v343, %v334
      %348 = vrot.lane.b32.xlu0 %v343, 64
      %v349 = vpop.permute.xlu0 %348
      %v350 = vmul.f32 %v349, %v336
      %v351 = vadd.f32 %v347, %v350
      %v352 = vmul.f32 %v345, %v334
      %353 = vrot.lane.b32.xlu0 %v345, 64
      %v354 = vpop.permute.xlu0 %353
      %v355 = vmul.f32 %v354, %v336
      %v356 = vadd.f32 %v352, %v355
      %v357 = vmul.f32 %v351, 0.088388346
      %v358 = vpack.c.bf16 %v357, %v357
      %v359 = vpack.c.bf16 %v356, %v356
      %360 = vmatprep.subr.bf16.mxu0 0
      %361 = vmatpush1.bf16.xpose.msra.mxu0 0
      %362 = vmatprep.subr.bf16.mxu0 0
      %363 = vmatpush1.bf16.xpose.msra.mxu0 0
      %364 = vmatprep.subr.bf16.mxu0 0
      %365 = vmatpush1.bf16.xpose.msra.mxu0 0
      %366 = vmatprep.subr.bf16.mxu0 0
      %367 = vmatpush1.bf16.xpose.msra.mxu0 0
      %368 = vmatprep.subr.bf16.mxu0 0
      %369 = vmatpush1.bf16.xpose.msra.mxu0 0
      %370 = vmatprep.subr.bf16.mxu0 0
      %371 = vmatpush1.bf16.xpose.msra.mxu0 0
      %372 = vmatprep.subr.bf16.mxu0 0
      %373 = vmatpush1.bf16.xpose.msra.mxu0 0
      %374 = vmatprep.subr.bf16.mxu0 0
      %375 = vmatpush1.bf16.xpose.msra.mxu0 %v359
      %376 = vmatprep.subr.bf16.mxu0 0
      %377 = vmatpush2.bf16.xpose.msra.mxu0 0
      %378 = vmatprep.subr.bf16.mxu0 0
      %379 = vmatpush2.bf16.xpose.msra.mxu0 0
      %380 = vmatprep.subr.bf16.mxu0 0
      %381 = vmatpush2.bf16.xpose.msra.mxu0 0
      %382 = vmatprep.subr.bf16.mxu0 0
      %383 = vmatpush2.bf16.xpose.msra.mxu0 0
      %384 = vmatprep.subr.bf16.mxu0 0
      %385 = vmatpush2.bf16.xpose.msra.mxu0 0
      %386 = vmatprep.subr.bf16.mxu0 0
      %387 = vmatpush2.bf16.xpose.msra.mxu0 0
      %388 = vmatprep.subr.bf16.mxu0 0
      %389 = vmatpush2.bf16.xpose.msra.mxu0 0
      %390 = vmatprep.subr.bf16.mxu0 0
      %391 = vmatpush2.bf16.xpose.msra.mxu0 0
      %392 = vmatprep.mubr.bf16.mxu0 0
      %393 = vmatmul.mubr.bf16.gmra.mxu0 %v358
      %v394 = vpop.f32.mrf.mxu0
      %v395 = vadd.f32 0.0, %v394
      %v396 = vpop.f32.mrf.mxu0
      %v397 = vpop.f32.mrf.mxu0
      %v398 = vpop.f32.mrf.mxu0
      %399 = vdwg.mxu0
      %v400 = vsel %vm341, %v395, -2.3819763e+38
      %vm401 = vcmask 64512
      %v402 = vsel %vm401, %v400, -inf
      %403 = vmax.xlane.f32.xlu0 %v402
      %v404 = vpop.xlane.xlu0 %403
      %v405 = vsub.f32 %v400, %v404
      %v406 = vmul.f32 %v405, 1.442695
      %v407 = vpow.pop %v406
      %v408 = vsel %vm401, %v407, 0.0
      %409 = vadd.xlane.f32.xlu0 %v408
      %v410 = vpop.xlane.xlu0 %409
      %v411 = vpack.c.bf16 %v407, %v407
      %v413 = vsel %vm401, %v411, 0
      %vm415 = vcmask 1043456
      %v417 = vsel %vm415, %v346, 0
      %419 = vmatprep.subr.bf16.mxu0 0
      %420 = vmatpush1.bf16.msra.mxu0 0
      %421 = vmatprep.subr.bf16.mxu0 0
      %422 = vmatpush1.bf16.msra.mxu0 0
      %423 = vmatprep.subr.bf16.mxu0 0
      %424 = vmatpush1.bf16.msra.mxu0 0
      %425 = vmatprep.subr.bf16.mxu0 0
      %426 = vmatpush1.bf16.msra.mxu0 0
      %427 = vmatprep.subr.bf16.mxu0 0
      %428 = vmatpush1.bf16.msra.mxu0 0
      %429 = vmatprep.subr.bf16.mxu0 0
      %430 = vmatpush1.bf16.msra.mxu0 0
      %431 = vmatprep.subr.bf16.mxu0 0
      %432 = vmatpush1.bf16.msra.mxu0 0
      %433 = vmatprep.subr.bf16.mxu0 0
      %434 = vmatpush1.bf16.msra.mxu0 %v417
      %435 = vmatprep.subr.bf16.mxu0 0
      %436 = vmatpush2.bf16.msra.mxu0 0
      %437 = vmatprep.subr.bf16.mxu0 0
      %438 = vmatpush2.bf16.msra.mxu0 0
      %439 = vmatprep.subr.bf16.mxu0 0
      %440 = vmatpush2.bf16.msra.mxu0 0
      %441 = vmatprep.subr.bf16.mxu0 0
      %442 = vmatpush2.bf16.msra.mxu0 0
      %443 = vmatprep.subr.bf16.mxu0 0
      %444 = vmatpush2.bf16.msra.mxu0 0
      %445 = vmatprep.subr.bf16.mxu0 0
      %446 = vmatpush2.bf16.msra.mxu0 0
      %447 = vmatprep.subr.bf16.mxu0 0
      %448 = vmatpush2.bf16.msra.mxu0 0
      %449 = vmatprep.subr.bf16.mxu0 0
      %450 = vmatpush2.bf16.msra.mxu0 0
      %451 = vmatprep.mubr.bf16.mxu0 0
      %452 = vmatmul.mubr.bf16.gmra.mxu0 %v413
      %v453 = vpop.f32.mrf.mxu0
      %v454 = vadd.f32 0.0, %v453
      %v455 = vpop.f32.mrf.mxu0
      %v456 = vpop.f32.mrf.mxu0
      %v457 = vpop.f32.mrf.mxu0
      %458 = vdwg.mxu0
      %v459 = vrcp.pop %v410
      %v460 = vmul.f32 %v454, %v459
      %v461 = vpack.c.bf16 %v460, %v460
      %462 = vst [vmem:[%s331] sm:$0xf] %v461
      %p463 = scmp.lt.s32.totalorder %s20, 1
      %s464 = scalar_select %p463, %s20, 1
      %p465 = scmp.lt.s32.totalorder %s21, 1
      %s466 = scalar_select %p465, %s21, 1
      %s467 = smul.addr %s464, 2
      %s468 = sadd.s32 %s466, %s467
      %s469 = smul.addr %s468, 4
      %s470 = scalar_lea.vmem %s5, %s469
      // Predicated region
      $region41: #{transformer_forward.12} parent=39 // pred_check
        %p471 = pneg %p178
      $region42: #{transformer_forward.12} parent=39 // pred_check_branch
        %473 = sbr.rel (%p471) target = $region44
      $region43: #{transformer_forward.12} parent=39 // pred_region
        _
      $region44: #{transformer_forward.12} parent=39 // pred_fallthru
        _
    $region40: #{transformer_forward.12} parent=5 // pred_fallthru
      _
    %p474 = scmp.le.s32.totalorder 2, %s11
    // Predicated region
    $region45: #{transformer_forward.12} parent=5 // pred_check
      %p475 = pneg %p474
    $region46: #{transformer_forward.12} parent=5 // pred_check_branch
      %477 = sbr.rel (%p475) target = $region48
    $region47: #{transformer_forward.12} parent=5 // pred_region
      %s478 = ssub.s32 %s11, 2
      // Predicated region
      $region49: #{transformer_forward.12} parent=47 // pred_check
        %p479 = pneg %p184
      $region50: #{transformer_forward.12} parent=47 // pred_check_branch
        %481 = sbr.rel (%p479) target = $region52
      $region51: #{transformer_forward.12} parent=47 // pred_region
        %p482 = scmp.lt.s32.totalorder %s22, 1
        %s483 = scalar_select %p482, %s22, 1
        %p484 = scmp.lt.s32.totalorder %s23, 1
        %s485 = scalar_select %p484, %s23, 1
        %s486 = smul.addr %s483, 2
        %s487 = sadd.s32 %s485, %s486
        %s488 = smul.addr %s487, 4
        %s489 = scalar_lea.vmem %s5, %s488
      $region52: #{transformer_forward.12} parent=47 // pred_fallthru
        _
    $region48: #{transformer_forward.12} parent=5 // pred_fallthru
      _
  $region6: #{transformer_forward.12} parent=0 // loop_footer
    %s15 = sadd.s32 1, %s11
  $region7: #{transformer_forward.12} parent=0 // loop_footer_branch
    %10 = sbr.rel target = $region3
  $region8: #{transformer_forward.12} parent=0 // loop_exit
    _

// kernel: transformer_forward.13
$region0: #{transformer_forward.13}
  #allocation0 [shape = 'u32[]', space=smem, size = 0x4, offset = 0x4, fixed_abs, tag = 'smem constant byte address 0x4 - core index']
  #allocation1 [shape = 'u32[144,128]{1,0:T(1,128)}', space=vmem, size = 0x12000, scoped, tag = 'internal scratch']
  #allocation2 [shape = 'f32[16,256]{1,0:T(8,128)}', space=vmem, size = 0x4000, scoped, tag = 'scratch operand']
  %s0 = inlined_call_operand.vmem [shape: bf16[16,256], index: 0, kind: input, shape index: {}]
  %s1 = inlined_call_operand.hbm [shape: bf16[256,256], index: 1, kind: input, shape index: {}]
  %s2 = inlined_call_operand.vmem [shape: bf16[16,256], index: 2, kind: input, shape index: {}]
  %s3 = inlined_call_operand.vmem [shape: bf16[16,256], index: 3, kind: output, shape index: {}]
  %s4 = sld [smem:[#allocation0]]
  $region34: #{transformer_forward.13} parent=0
    _
  %s6 = ssub.s32 1, %s4
  %s7 = scalar_select 0, %s6, %s4
  $region1: #{transformer_forward.13} parent=0
    #allocation3 [shape = 'u8[131072]{0}', space=vmem, size = 0x20000, scoped, tag = 'input window, operand 1, single buffered']
    #allocation4 [shape = 's32[1]{0}', space=sflag, size = 0x4, scoped, tag = 'scoped memory for transformer_forward.13']
    %8 = vsyncpa [#allocation4], 0
    // Predicated region
    $region2: #{transformer_forward.13} parent=1 // pred_check
      _
    $region3: #{transformer_forward.13} parent=1 // pred_check_branch
      %10 = sbr.rel (0) target = $region5
    $region4: #{transformer_forward.13} parent=1 // pred_region
      _
    $region5: #{transformer_forward.13} parent=1 // pred_fallthru
      _
    // Predicated region
    $region6: #{transformer_forward.13} parent=1 // pred_check
      _
    $region7: #{transformer_forward.13} parent=1 // pred_check_branch
      %12 = sbr.rel (0) target = $region9
    $region8: #{transformer_forward.13} parent=1 // pred_region
      %s14 = ssub.s32 4096, 4096
      %15 = vsyncadd [#allocation4], %s14
      %s16 = sshll.u32 [#allocation3], 4
      %s17 = int_to_ptr.vmem [resolvable:$true] %s16
      %22 = dma.hbm_to_vmem [thread:$0]  %s1, 4096, %s17, [#allocation4], 128, 128, 8
    $region9: #{transformer_forward.13} parent=1 // pred_fallthru
      _
    // Predicated region
    $region10: #{transformer_forward.13} parent=1 // pred_check
      _
    $region11: #{transformer_forward.13} parent=1 // pred_check_branch
      %24 = sbr.rel (0) target = $region13
    $region12: #{transformer_forward.13} parent=1 // pred_region
      _
    $region13: #{transformer_forward.13} parent=1 // pred_fallthru
      _
    // Predicated region
    $region14: #{transformer_forward.13} parent=1 // pred_check
      _
    $region15: #{transformer_forward.13} parent=1 // pred_check_branch
      %26 = sbr.rel (0) target = $region17
    $region16: #{transformer_forward.13} parent=1 // pred_region
      %27 = dma.done [#allocation4], 4096
    $region17: #{transformer_forward.13} parent=1 // pred_fallthru
      _
    %p28 = scmp.eq.s32.totalorder 0, 0
    // Predicated region
    $region18: #{transformer_forward.13} parent=1 // pred_check
      %p29 = pneg %p28
    $region19: #{transformer_forward.13} parent=1 // pred_check_branch
      %31 = sbr.rel (%p29) target = $region21
    $region20: #{transformer_forward.13} parent=1 // pred_region
      %32 = vst [vmem:[#allocation2] sm:$0xff] 0.0
      %33 = vst [vmem:[#allocation2 + $0x8] sm:$0xff] 0.0
      %34 = vst [vmem:[#allocation2 + $0x10] sm:$0xff] 0.0
      %35 = vst [vmem:[#allocation2 + $0x18] sm:$0xff] 0.0
    $region21: #{transformer_forward.13} parent=1 // pred_fallthru
      _
    %v36 = vld [vmem:[#allocation2] sm:$0xff]
    %v37 = vld [vmem:[#allocation2 + $0x8] sm:$0xff]
    %v38 = vld [vmem:[#allocation2 + $0x10] sm:$0xff]
    %v39 = vld [vmem:[#allocation2 + $0x18] sm:$0xff]
    %v40 = vld [vmem:[%s0] sm:$0xff]
    %v41 = vld [vmem:[%s0 + $0x8] sm:$0xff]
    %v42 = vld [vmem:[#allocation3] sm:$0xff]
    %v43 = vld [vmem:[#allocation3 + $0x8] sm:$0xff]
    %v44 = vld [vmem:[#allocation3 + $0x10] sm:$0xff]
    %v45 = vld [vmem:[#allocation3 + $0x18] sm:$0xff]
    %v46 = vld [vmem:[#allocation3 + $0x20] sm:$0xff]
    %v47 = vld [vmem:[#allocation3 + $0x28] sm:$0xff]
    %v48 = vld [vmem:[#allocation3 + $0x30] sm:$0xff]
    %v49 = vld [vmem:[#allocation3 + $0x38] sm:$0xff]
    %v50 = vld [vmem:[#allocation3 + $0x40] sm:$0xff]
    %v51 = vld [vmem:[#allocation3 + $0x48] sm:$0xff]
    %v52 = vld [vmem:[#allocation3 + $0x50] sm:$0xff]
    %v53 = vld [vmem:[#allocation3 + $0x58] sm:$0xff]
    %v54 = vld [vmem:[#allocation3 + $0x60] sm:$0xff]
    %v55 = vld [vmem:[#allocation3 + $0x68] sm:$0xff]
    %v56 = vld [vmem:[#allocation3 + $0x70] sm:$0xff]
    %v57 = vld [vmem:[#allocation3 + $0x78] sm:$0xff]
    %v58 = vld [vmem:[#allocation3 + $0x80] sm:$0xff]
    %v59 = vld [vmem:[#allocation3 + $0x88] sm:$0xff]
    %v60 = vld [vmem:[#allocation3 + $0x90] sm:$0xff]
    %v61 = vld [vmem:[#allocation3 + $0x98] sm:$0xff]
    %v62 = vld [vmem:[#allocation3 + $0xa0] sm:$0xff]
    %v63 = vld [vmem:[#allocation3 + $0xa8] sm:$0xff]
    %v64 = vld [vmem:[#allocation3 + $0xb0] sm:$0xff]
    %v65 = vld [vmem:[#allocation3 + $0xb8] sm:$0xff]
    %v66 = vld [vmem:[#allocation3 + $0xc0] sm:$0xff]
    %v67 = vld [vmem:[#allocation3 + $0xc8] sm:$0xff]
    %v68 = vld [vmem:[#allocation3 + $0xd0] sm:$0xff]
    %v69 = vld [vmem:[#allocation3 + $0xd8] sm:$0xff]
    %v70 = vld [vmem:[#allocation3 + $0xe0] sm:$0xff]
    %v71 = vld [vmem:[#allocation3 + $0xe8] sm:$0xff]
    %v72 = vld [vmem:[#allocation3 + $0xf0] sm:$0xff]
    %v73 = vld [vmem:[#allocation3 + $0xf8] sm:$0xff]
    %v76 = vunpack.c.l.b16 %v40
    %v77 = vunpack.c.h.b16 %v40
    %v78 = vunpack.c.l.b16 %v41
    %v79 = vunpack.c.h.b16 %v41
    %v80 = vpack.c.b16 %v78, %v76
    %v81 = vpack.c.b16 %v79, %v77
    %v116 = vunpack.c.l.b16 %v42
    %v117 = vunpack.c.h.b16 %v42
    %v118 = vunpack.c.l.b16 %v43
    %v119 = vunpack.c.h.b16 %v43
    %v120 = vunpack.c.l.b16 %v44
    %v121 = vunpack.c.h.b16 %v44
    %v122 = vunpack.c.l.b16 %v45
    %v123 = vunpack.c.h.b16 %v45
    %v124 = vunpack.c.l.b16 %v46
    %v125 = vunpack.c.h.b16 %v46
    %v126 = vunpack.c.l.b16 %v47
    %v127 = vunpack.c.h.b16 %v47
    %v128 = vunpack.c.l.b16 %v48
    %v129 = vunpack.c.h.b16 %v48
    %v130 = vunpack.c.l.b16 %v49
    %v131 = vunpack.c.h.b16 %v49
    %v132 = vunpack.c.l.b16 %v50
    %v133 = vunpack.c.h.b16 %v50
    %v134 = vunpack.c.l.b16 %v51
    %v135 = vunpack.c.h.b16 %v51
    %v136 = vunpack.c.l.b16 %v52
    %v137 = vunpack.c.h.b16 %v52
    %v138 = vunpack.c.l.b16 %v53
    %v139 = vunpack.c.h.b16 %v53
    %v140 = vunpack.c.l.b16 %v54
    %v141 = vunpack.c.h.b16 %v54
    %v142 = vunpack.c.l.b16 %v55
    %v143 = vunpack.c.h.b16 %v55
    %v144 = vunpack.c.l.b16 %v56
    %v145 = vunpack.c.h.b16 %v56
    %v146 = vunpack.c.l.b16 %v57
    %v147 = vunpack.c.h.b16 %v57
    %v148 = vunpack.c.l.b16 %v58
    %v149 = vunpack.c.h.b16 %v58
    %v150 = vunpack.c.l.b16 %v59
    %v151 = vunpack.c.h.b16 %v59
    %v152 = vunpack.c.l.b16 %v60
    %v153 = vunpack.c.h.b16 %v60
    %v154 = vunpack.c.l.b16 %v61
    %v155 = vunpack.c.h.b16 %v61
    %v156 = vunpack.c.l.b16 %v62
    %v157 = vunpack.c.h.b16 %v62
    %v158 = vunpack.c.l.b16 %v63
    %v159 = vunpack.c.h.b16 %v63
    %v160 = vunpack.c.l.b16 %v64
    %v161 = vunpack.c.h.b16 %v64
    %v162 = vunpack.c.l.b16 %v65
    %v163 = vunpack.c.h.b16 %v65
    %v164 = vunpack.c.l.b16 %v66
    %v165 = vunpack.c.h.b16 %v66
    %v166 = vunpack.c.l.b16 %v67
    %v167 = vunpack.c.h.b16 %v67
    %v168 = vunpack.c.l.b16 %v68
    %v169 = vunpack.c.h.b16 %v68
    %v170 = vunpack.c.l.b16 %v69
    %v171 = vunpack.c.h.b16 %v69
    %v172 = vunpack.c.l.b16 %v70
    %v173 = vunpack.c.h.b16 %v70
    %v174 = vunpack.c.l.b16 %v71
    %v175 = vunpack.c.h.b16 %v71
    %v176 = vunpack.c.l.b16 %v72
    %v177 = vunpack.c.h.b16 %v72
    %v178 = vunpack.c.l.b16 %v73
    %v179 = vunpack.c.h.b16 %v73
    %v180 = vpack.c.b16 %v118, %v116
    %v181 = vpack.c.b16 %v119, %v117
    %v182 = vpack.c.b16 %v122, %v120
    %v183 = vpack.c.b16 %v123, %v121
    %v184 = vpack.c.b16 %v126, %v124
    %v185 = vpack.c.b16 %v127, %v125
    %v186 = vpack.c.b16 %v130, %v128
    %v187 = vpack.c.b16 %v131, %v129
    %v188 = vpack.c.b16 %v134, %v132
    %v189 = vpack.c.b16 %v135, %v133
    %v190 = vpack.c.b16 %v138, %v136
    %v191 = vpack.c.b16 %v139, %v137
    %v192 = vpack.c.b16 %v142, %v140
    %v193 = vpack.c.b16 %v143, %v141
    %v194 = vpack.c.b16 %v146, %v144
    %v195 = vpack.c.b16 %v147, %v145
    %v196 = vpack.c.b16 %v150, %v148
    %v197 = vpack.c.b16 %v151, %v149
    %v198 = vpack.c.b16 %v154, %v152
    %v199 = vpack.c.b16 %v155, %v153
    %v200 = vpack.c.b16 %v158, %v156
    %v201 = vpack.c.b16 %v159, %v157
    %v202 = vpack.c.b16 %v162, %v160
    %v203 = vpack.c.b16 %v163, %v161
    %v204 = vpack.c.b16 %v166, %v164
    %v205 = vpack.c.b16 %v167, %v165
    %v206 = vpack.c.b16 %v170, %v168
    %v207 = vpack.c.b16 %v171, %v169
    %v208 = vpack.c.b16 %v174, %v172
    %v209 = vpack.c.b16 %v175, %v173
    %v210 = vpack.c.b16 %v178, %v176
    %v211 = vpack.c.b16 %v179, %v177
    %244 = vmatprep.subr.bf16.mxu0 %v195
    %245 = vmatpush1.bf16.msra.mxu0 %v194
    %246 = vmatprep.subr.bf16.mxu0 %v193
    %247 = vmatpush1.bf16.msra.mxu0 %v192
    %248 = vmatprep.subr.bf16.mxu0 %v191
    %249 = vmatpush1.bf16.msra.mxu0 %v190
    %250 = vmatprep.subr.bf16.mxu0 %v189
    %251 = vmatpush1.bf16.msra.mxu0 %v188
    %252 = vmatprep.subr.bf16.mxu0 %v187
    %253 = vmatpush1.bf16.msra.mxu0 %v186
    %254 = vmatprep.subr.bf16.mxu0 %v185
    %255 = vmatpush1.bf16.msra.mxu0 %v184
    %256 = vmatprep.subr.bf16.mxu0 %v183
    %257 = vmatpush1.bf16.msra.mxu0 %v182
    %258 = vmatprep.subr.bf16.mxu0 %v181
    %259 = vmatpush1.bf16.msra.mxu0 %v180
    %260 = vmatprep.subr.bf16.mxu0 %v211
    %261 = vmatpush2.bf16.msra.mxu0 %v210
    %262 = vmatprep.subr.bf16.mxu0 %v209
    %263 = vmatpush2.bf16.msra.mxu0 %v208
    %264 = vmatprep.subr.bf16.mxu0 %v207
    %265 = vmatpush2.bf16.msra.mxu0 %v206
    %266 = vmatprep.subr.bf16.mxu0 %v205
    %267 = vmatpush2.bf16.msra.mxu0 %v204
    %268 = vmatprep.subr.bf16.mxu0 %v203
    %269 = vmatpush2.bf16.msra.mxu0 %v202
    %270 = vmatprep.subr.bf16.mxu0 %v201
    %271 = vmatpush2.bf16.msra.mxu0 %v200
    %272 = vmatprep.subr.bf16.mxu0 %v199
    %273 = vmatpush2.bf16.msra.mxu0 %v198
    %274 = vmatprep.subr.bf16.mxu0 %v197
    %275 = vmatpush2.bf16.msra.mxu0 %v196
    %276 = vmatprep.mubr.bf16.mxu0 %v81
    %277 = vmatmul.mubr.bf16.gmra.mxu0 %v80
    %v278 = vpop.f32.mrf.mxu0
    %v279 = vadd.f32 0.0, %v278
    %v280 = vpop.f32.mrf.mxu0
    %v281 = vadd.f32 0.0, %v280
    %v282 = vpop.f32.mrf.mxu0
    %v283 = vadd.f32 0.0, %v282
    %v284 = vpop.f32.mrf.mxu0
    %v285 = vadd.f32 0.0, %v284
    %286 = vdwg.mxu0
    %v287 = vadd.f32 %v36, %v279
    %v288 = vadd.f32 %v37, %v281
    %v289 = vadd.f32 %v38, %v283
    %v290 = vadd.f32 %v39, %v285
    %291 = vst [vmem:[#allocation2] sm:$0xff] %v287
    %292 = vst [vmem:[#allocation2 + $0x8] sm:$0xff] %v288
    %293 = vst [vmem:[#allocation2 + $0x10] sm:$0xff] %v289
    %294 = vst [vmem:[#allocation2 + $0x18] sm:$0xff] %v290
    // Predicated region
    $region22: #{transformer_forward.13} parent=1 // pred_check
      %p295 = pneg %p28
    $region23: #{transformer_forward.13} parent=1 // pred_check_branch
      %297 = sbr.rel (%p295) target = $region25
    $region24: #{transformer_forward.13} parent=1 // pred_region
      %v298 = vld [vmem:[%s2] sm:$0xff]
      %v299 = vld [vmem:[%s2 + $0x8] sm:$0xff]
      %v300 = vunpack.c.l.bf16 %v298
      %v301 = vunpack.c.h.bf16 %v298
      %v302 = vunpack.c.l.bf16 %v299
      %v303 = vunpack.c.h.bf16 %v299
      %v304 = vld [vmem:[#allocation2] sm:$0xff]
      %v305 = vld [vmem:[#allocation2 + $0x8] sm:$0xff]
      %v306 = vld [vmem:[#allocation2 + $0x10] sm:$0xff]
      %v307 = vld [vmem:[#allocation2 + $0x18] sm:$0xff]
      %v308 = vadd.f32 %v300, %v304
      %v309 = vadd.f32 %v301, %v305
      %v310 = vadd.f32 %v302, %v306
      %v311 = vadd.f32 %v303, %v307
      %v312 = vpack.c.bf16 %v310, %v308
      %v313 = vpack.c.bf16 %v311, %v309
      %v316 = vunpack.c.l.b16 %v312
      %v317 = vunpack.c.l.b16 %v313
      %v318 = vunpack.c.h.b16 %v312
      %v319 = vunpack.c.h.b16 %v313
      %v320 = vpack.c.b16 %v317, %v316
      %v321 = vpack.c.b16 %v319, %v318
      %324 = vst [vmem:[%s3] sm:$0xff] %v320
      %325 = vst [vmem:[%s3 + $0x8] sm:$0xff] %v321
    $region25: #{transformer_forward.13} parent=1 // pred_fallthru
      _
    // Predicated region
    $region26: #{transformer_forward.13} parent=1 // pred_check
      _
    $region27: #{transformer_forward.13} parent=1 // pred_check_branch
      %327 = sbr.rel (0) target = $region29
    $region28: #{transformer_forward.13} parent=1 // pred_region
      _
    $region29: #{transformer_forward.13} parent=1 // pred_fallthru
      _
    // Predicated region
    $region30: #{transformer_forward.13} parent=1 // pred_check
      _
    $region31: #{transformer_forward.13} parent=1 // pred_check_branch
      %329 = sbr.rel (0) target = $region33
    $region32: #{transformer_forward.13} parent=1 // pred_region
      _
    $region33: #{transformer_forward.13} parent=1 // pred_fallthru
      _
    %330 = vsyncpa [#allocation4], 1

// kernel: transformer_forward.11
$region0: #{transformer_forward.11}
  #allocation0 [shape = 'u32[]', space=smem, size = 0x4, offset = 0x4, fixed_abs, tag = 'smem constant byte address 0x4 - core index']
  #allocation1 [shape = 'u32[144,128]{1,0:T(1,128)}', space=vmem, size = 0x12000, scoped, tag = 'internal scratch']
  #allocation2 [shape = 'bf16[16,256]{1,0:T(8,128)(2,1)}', space=vmem, size = 0x2000, scoped, tag = 'scratch operand']
  %s0 = inlined_call_operand.vmem [shape: bf16[16,256], index: 0, kind: input, shape index: {}]
  %s1 = inlined_call_operand.vmem [shape: bf16[1,256], index: 1, kind: input, shape index: {}]
  %s2 = inlined_call_operand.hbm [shape: bf16[256,768], index: 2, kind: input, shape index: {}]
  %s3 = inlined_call_operand.vmem [shape: bf16[16,768], index: 3, kind: output, shape index: {}]
  %s4 = sld [smem:[#allocation0]]
  $region75: #{transformer_forward.11} parent=0
    _
  %s6 = ssub.s32 1, %s4
  %s7 = scalar_select 0, %s6, %s4
  $region1: #{transformer_forward.11} parent=0
    #allocation3 [shape = 'u8[393216]{0}', space=vmem, size = 0x60000, scoped, tag = 'input window, operand 2']
    #allocation4 [shape = 's32[2]{0}', space=sflag, size = 0x8, scoped, tag = 'scoped memory for transformer_forward.11']
    #allocation5 [shape = 'u8[24576]{0}', space=vmem, size = 0x6000, scoped, tag = 'output window, operand 0']
    %8 = vsyncpa [#allocation4], 0
    %s9 = scalar_lea.sflag [#allocation4], 1
    %10 = vsyncpa %s9, 0
    loop: start=0, step=1, limit=4
    $region2: #{transformer_forward.11} parent=1 // loop_pre_header
      _
    $region3: #{transformer_forward.11} parent=1 // loop_header
      %s12 = sphi 0, %s16
      %p13 = scmp.ge.s32.totalorder %s12, 4
      %s19 = sphi 0, %s31
      %s20 = sphi 0, %s27
      %s21 = sphi 0, %s19
      %s22 = sphi 0, %s20
      %s23 = sphi 0, %s21
      %s24 = sphi 0, %s22
      %s34 = sphi 0, %s36
      %s37 = sphi 0, %s34
      %s38 = sphi 0, %s37
      %s54 = sphi 0, %s38
      %s58 = sphi 0, %s58
      %s60 = sphi 0, %s58
      %s61 = sphi 0, %s60
      %s75 = sphi 0, %s61
      %s81 = sphi 0, %s83
      %s84 = sphi 0, %s81
      %s85 = sphi 0, %s84
      %s101 = sphi 0, %s85
      %s109 = sphi 0, %s111
      %s112 = sphi 0, %s109
      %s113 = sphi 0, %s112
      %s129 = sphi 0, %s113
    $region4: #{transformer_forward.11} parent=1 // loop_header_branch
      %15 = sbr.rel (%p13) target = $region8
    $region5: #{transformer_forward.11} parent=1 // loop_body
      %s17 = ssub.s32 %s12, 1
      %s18 = ssub.s32 %s12, 2
      %s25 = sadd.s32 1, %s20
      %p26 = scmp.ge.s32.totalorder %s25, 2
      %s27 = scalar_select %p26, 0, %s25
      %s28 = sadd.s32 1, %s19
      %s29 = scalar_select %p26, %s28, %s19
      %p30 = scmp.ge.s32.totalorder %s29, 1
      %s31 = scalar_select %p30, 0, %s29
      %s32 = ssub.s32 %s19, %s31
      %p33 = scmp.eq.s32.totalorder %s32, 0
      %s35 = sadd.s32 %s34, 1
      %s36 = scalar_select %p33, %s34, %s35
      %p39 = pneg %p33
      %p40 = scmp.eq.s32.totalorder %s12, 1
      %p41 = por %p39, %p40
      %p42 = scmp.ne.s32.totalorder %s34, %s37
      %p43 = scmp.eq.s32.totalorder %s12, 0
      %p44 = por %p42, %p43
      %p45 = scmp.ne.s32.totalorder %s34, %s37
      %p46 = scmp.eq.s32.totalorder %s17, 1
      %p47 = por %p45, %p46
      %p48 = scmp.ne.s32.totalorder %s37, %s38
      %p49 = scmp.eq.s32.totalorder %s17, 0
      %p50 = por %p48, %p49
      %p51 = scmp.ne.s32.totalorder %s37, %s38
      %p52 = scmp.eq.s32.totalorder %s18, 1
      %p53 = por %p51, %p52
      %p55 = scmp.ne.s32.totalorder %s38, %s54
      %p56 = scmp.eq.s32.totalorder %s18, 0
      %p57 = por %p55, %p56
      %s59 = sadd.s32 %s58, 1
      %p62 = scmp.eq.s32.totalorder %s12, 1
      %p63 = scmp.ne.s32.totalorder %s58, %s60
      %p64 = scmp.eq.s32.totalorder %s12, 0
      %p65 = por %p63, %p64
      %p66 = scmp.ne.s32.totalorder %s58, %s60
      %p67 = scmp.eq.s32.totalorder %s17, 1
      %p68 = por %p66, %p67
      %p69 = scmp.ne.s32.totalorder %s60, %s61
      %p70 = scmp.eq.s32.totalorder %s17, 0
      %p71 = por %p69, %p70
      %p72 = scmp.ne.s32.totalorder %s60, %s61
      %p73 = scmp.eq.s32.totalorder %s18, 1
      %p74 = por %p72, %p73
      %p76 = scmp.ne.s32.totalorder %s61, %s75
      %p77 = scmp.eq.s32.totalorder %s18, 0
      %p78 = por %p76, %p77
      %s79 = ssub.s32 %s20, %s27
      %p80 = scmp.eq.s32.totalorder %s79, 0
      %s82 = sadd.s32 %s81, 1
      %s83 = scalar_select %p80, %s81, %s82
      %p86 = pneg %p80
      %p87 = scmp.eq.s32.totalorder %s12, 1
      %p88 = por %p86, %p87
      %p89 = scmp.ne.s32.totalorder %s81, %s84
      %p90 = scmp.eq.s32.totalorder %s12, 0
      %p91 = por %p89, %p90
      %p92 = scmp.ne.s32.totalorder %s81, %s84
      %p93 = scmp.eq.s32.totalorder %s17, 1
      %p94 = por %p92, %p93
      %p95 = scmp.ne.s32.totalorder %s84, %s85
      %p96 = scmp.eq.s32.totalorder %s17, 0
      %p97 = por %p95, %p96
      %p98 = scmp.ne.s32.totalorder %s84, %s85
      %p99 = scmp.eq.s32.totalorder %s18, 1
      %p100 = por %p98, %p99
      %p102 = scmp.ne.s32.totalorder %s85, %s101
      %p103 = scmp.eq.s32.totalorder %s18, 0
      %p104 = por %p102, %p103
      %s105 = ssub.s32 %s19, %s31
      %s106 = ssub.s32 %s20, %s27
      %s107 = sor.u32 %s105, %s106
      %p108 = scmp.eq.s32.totalorder %s107, 0
      %s110 = sadd.s32 %s109, 1
      %s111 = scalar_select %p108, %s109, %s110
      %p114 = pneg %p108
      %p115 = scmp.eq.s32.totalorder %s12, 1
      %p116 = por %p114, %p115
      %p117 = scmp.ne.s32.totalorder %s109, %s112
      %p118 = scmp.eq.s32.totalorder %s12, 0
      %p119 = por %p117, %p118
      %p120 = scmp.ne.s32.totalorder %s109, %s112
      %p121 = scmp.eq.s32.totalorder %s17, 1
      %p122 = por %p120, %p121
      %p123 = scmp.ne.s32.totalorder %s112, %s113
      %p124 = scmp.eq.s32.totalorder %s17, 0
      %p125 = por %p123, %p124
      %p126 = scmp.ne.s32.totalorder %s112, %s113
      %p127 = scmp.eq.s32.totalorder %s18, 1
      %p128 = por %p126, %p127
      %p130 = scmp.ne.s32.totalorder %s113, %s129
      %p131 = scmp.eq.s32.totalorder %s18, 0
      %p132 = por %p130, %p131
      %p133 = scmp.le.s32.totalorder 1, %s12
      %p134 = scmp.lt.s32.totalorder %s12, 3
      %p135 = pnand %p133, %p134
      %p136 = pneg %p135
      // Predicated region
      $region9: #{transformer_forward.11} parent=5 // pred_check
        _
      $region10: #{transformer_forward.11} parent=5 // pred_check_branch
        %138 = sbr.rel (%p135) target = $region12
      $region11: #{transformer_forward.11} parent=5 // pred_region
        %s139 = ssub.s32 %s12, 1
        // Predicated region
        $region13: #{transformer_forward.11} parent=11 // pred_check
          %p140 = pneg %p50
        $region14: #{transformer_forward.11} parent=11 // pred_check_branch
          %142 = sbr.rel (%p140) target = $region16
        $region15: #{transformer_forward.11} parent=11 // pred_region
          %s143 = smul.u32 2, %s21
          %p144 = scmp.lt.s32.totalorder %s143, 1
          %s145 = scalar_select %p144, %s143, 1
          %s146 = smul.addr %s145, 2
          %s147 = smul.addr %s146, 4
          %s148 = scalar_lea.vmem %s0, %s147
          %s149 = smul.u32 2, %s21
        $region16: #{transformer_forward.11} parent=11 // pred_fallthru
          _
        // Predicated region
        $region17: #{transformer_forward.11} parent=11 // pred_check
          %p150 = pneg %p71
        $region18: #{transformer_forward.11} parent=11 // pred_check_branch
          %152 = sbr.rel (%p150) target = $region20
        $region19: #{transformer_forward.11} parent=11 // pred_region
          _
        $region20: #{transformer_forward.11} parent=11 // pred_fallthru
          _
      $region12: #{transformer_forward.11} parent=5 // pred_fallthru
        _
      %p153 = scmp.lt.s32.totalorder %s12, 2
      // Predicated region
      $region21: #{transformer_forward.11} parent=5 // pred_check
        %p154 = pneg %p153
      $region22: #{transformer_forward.11} parent=5 // pred_check_branch
        %156 = sbr.rel (%p154) target = $region24
      $region23: #{transformer_forward.11} parent=5 // pred_region
        // Predicated region
        $region25: #{transformer_forward.11} parent=23 // pred_check
          %p157 = pneg %p91
        $region26: #{transformer_forward.11} parent=23 // pred_check_branch
          %159 = sbr.rel (%p157) target = $region28
        $region27: #{transformer_forward.11} parent=23 // pred_region
          %s160 = sand.u32 %s81, 1
          %s161 = scalar_lea.sflag [#allocation4], %s160
          %s162 = sand.u32 %s81, 1
          %s163 = smul.addr %s162, 384
          %s164 = scalar_lea.vmem [#allocation3], %s163
          %s165 = smul.u32 3, %s20
          %s167 = ssub.s32 6144, 6144
          %168 = vsyncadd %s161, %s167
          %s169 = smul.addr %s165, 64
          %s170 = scalar_lea.hbm %s2, %s169
          %s171 = sshll.u32 %s164, 4
          %s172 = int_to_ptr.vmem [resolvable:$true] %s171
          %177 = dma.hbm_to_vmem [thread:$0]  %s170, 6144, %s172, %s161, 384, 192, 12
        $region28: #{transformer_forward.11} parent=23 // pred_fallthru
          _
      $region24: #{transformer_forward.11} parent=5 // pred_fallthru
        _
      %p178 = scmp.le.s32.totalorder 1, %s12
      %p179 = scmp.lt.s32.totalorder %s12, 3
      %p180 = pnand %p178, %p179
      %p181 = pneg %p180
      // Predicated region
      $region29: #{transformer_forward.11} parent=5 // pred_check
        _
      $region30: #{transformer_forward.11} parent=5 // pred_check_branch
        %183 = sbr.rel (%p180) target = $region32
      $region31: #{transformer_forward.11} parent=5 // pred_region
        %s184 = ssub.s32 %s12, 1
        %s185 = sand.u32 %s84, 1
        %s186 = scalar_lea.sflag [#allocation4], %s185
        %s187 = sand.u32 %s84, 1
        %s188 = smul.addr %s187, 384
        %s189 = scalar_lea.vmem [#allocation3], %s188
        // Predicated region
        $region33: #{transformer_forward.11} parent=31 // pred_check
          %p190 = pneg %p97
        $region34: #{transformer_forward.11} parent=31 // pred_check_branch
          %192 = sbr.rel (%p190) target = $region36
        $region35: #{transformer_forward.11} parent=31 // pred_region
          %193 = dma.done %s186, 6144
        $region36: #{transformer_forward.11} parent=31 // pred_fallthru
          _
        %s194 = smul.u32 2, %s21
        %p195 = scmp.lt.s32.totalorder %s194, 1
        %s196 = scalar_select %p195, %s194, 1
        %s197 = smul.addr %s196, 2
        %s198 = smul.addr %s197, 4
        %s199 = scalar_lea.vmem %s0, %s198
        %p200 = pneg %p50
        %p201 = pneg %p47
        %p202 = pneg %p71
        %p203 = pneg %p68
        %s204 = sand.u32 %s84, 1
        %s205 = scalar_lea.sflag [#allocation4], %s204
        %s206 = sand.u32 %s84, 1
        %s207 = smul.addr %s206, 384
        %s208 = scalar_lea.vmem [#allocation3], %s207
        %p209 = pneg %p97
        %p210 = pneg %p94
        %p211 = pneg %p125
        %p212 = pneg %p122
        %s213 = sand.u32 %s112, 1
        %s214 = sand.u32 %s112, 1
        %s215 = smul.addr %s214, 24
        %s216 = scalar_lea.vmem [#allocation5], %s215
        %s217 = smul.u32 2, %s21
        %p218 = scmp.lt.s32.totalorder %s217, 1
        %s219 = scalar_select %p218, %s217, 1
        %s220 = smul.addr %s219, 2
        %s221 = smul.addr %s220, 4
        %s222 = scalar_lea.vmem %s0, %s221
        %s223 = smul.u32 2, %s21
        %s224 = smul.u32 3, %s22
        %s225 = smul.u32 2, %s21
        %s226 = smul.u32 3, %s22
        %p228 = scmp.eq.s32.totalorder %s22, 0
        // Predicated region
        $region37: #{transformer_forward.11} parent=31 // pred_check
          %p229 = pneg %p228
        $region38: #{transformer_forward.11} parent=31 // pred_check_branch
          %231 = sbr.rel (%p229) target = $region40
        $region39: #{transformer_forward.11} parent=31 // pred_region
          %v232 = vld [vmem:[%s222] sm:$0xff]
          %v233 = vld [vmem:[%s222 + $0x8] sm:$0xff]
          %v234 = vunpack.c.l.bf16 %v232
          %v235 = vunpack.c.h.bf16 %v232
          %v236 = vunpack.c.l.bf16 %v233
          %v237 = vunpack.c.h.bf16 %v233
          %v238 = vmul.f32 %v234, %v234
          %v239 = vmul.f32 %v235, %v235
          %v240 = vmul.f32 %v236, %v236
          %v241 = vmul.f32 %v237, %v237
          %v242 = vadd.f32 %v238, %v239
          %243 = vadd.xlane.f32.xlu0 %v242
          %v244 = vpop.xlane.xlu0 %243
          %v245 = vadd.f32 %v240, %v241
          %246 = vadd.xlane.f32.xlu0 %v245
          %v247 = vpop.xlane.xlu0 %246
          %v248 = vrcp.pop 256.0
          %v249 = vmul.f32 %v244, %v248
          %v250 = vmul.f32 %v247, %v248
          %v251 = vadd.f32 %v249, 1e-06
          %v252 = vadd.f32 %v250, 1e-06
          %v253 = vrsqrt.pop %v251
          %v254 = vrsqrt.pop %v252
          %v255 = vmul.f32 %v234, %v253
          %v256 = vmul.f32 %v235, %v253
          %v257 = vmul.f32 %v236, %v254
          %v258 = vmul.f32 %v237, %v254
          %v259 = vpack.c.bf16 %v257, %v255
          %v260 = vpack.c.bf16 %v258, %v256
          %v261 = vld [vmem:[%s1] sm:$0x3]
          %v264 = vunpack.c.l.s4 1966171168
          %v265 = vunpack.c.0.s8 %v264
          %v266 = vlaneseq
          %v267 = vshrl.u32 %v266, 7
          %v268 = vsub.s32 %v265, %v267
          %v269 = vrot.slane %v261, %v268
          %v270 = vcombine.high %v269, %v269
          %v272 = vunpack.c.l.s4 1966171168
          %v273 = vunpack.c.0.s8 %v272
          %v274 = vlaneseq
          %v275 = vshrl.u32 %v274, 7
          %v276 = vsub.s32 %v273, %v275
          %v277 = vrot.slane %v269, %v276
          %v279 = vunpack.c.l.s4 1966171168
          %v280 = vunpack.c.0.s8 %v279
          %v281 = vlaneseq
          %v282 = vshrl.u32 %v281, 7
          %v283 = vsub.s32 %v280, %v282
          %v284 = vrot.slane %v270, %v283
          %v286 = vpack.i.b16 %v277, %v277
          %v288 = vlaneseq
          %v289 = vshrl.u32 %v288, 7
          %v290 = vsub.s32 0, %v289
          %v291 = vrot.slane %v286, %v290
          %v293 = vpack.i.b16 %v284, %v284
          %v295 = vlaneseq
          %v296 = vshrl.u32 %v295, 7
          %v297 = vsub.s32 0, %v296
          %v298 = vrot.slane %v293, %v297
          %v299 = vmul.bf16 %v259, %v291
          %v300 = vmul.bf16 %v260, %v298
          %v303 = vunpack.c.l.b16 %v299
          %v304 = vunpack.c.l.b16 %v300
          %v305 = vunpack.c.h.b16 %v299
          %v306 = vunpack.c.h.b16 %v300
          %v307 = vpack.c.b16 %v304, %v303
          %v308 = vpack.c.b16 %v306, %v305
          %311 = vst [vmem:[#allocation2] sm:$0xff] %v307
          %312 = vst [vmem:[#allocation2 + $0x8] sm:$0xff] %v308
        $region40: #{transformer_forward.11} parent=31 // pred_fallthru
          _
        %v313 = vld [vmem:[#allocation2] sm:$0xff]
        %v314 = vld [vmem:[#allocation2 + $0x8] sm:$0xff]
        %v315 = vld [vmem:[%s189] sm:$0xff]
        %v316 = vld [vmem:[%s189 + $0x8] sm:$0xf]
        %v317 = vld [vmem:[%s189 + $0xc] sm:$0xff]
        %v318 = vld [vmem:[%s189 + $0x14] sm:$0xf]
        %v319 = vld [vmem:[%s189 + $0x18] sm:$0xff]
        %v320 = vld [vmem:[%s189 + $0x20] sm:$0xf]
        %v321 = vld [vmem:[%s189 + $0x24] sm:$0xff]
        %v322 = vld [vmem:[%s189 + $0x2c] sm:$0xf]
        %v323 = vld [vmem:[%s189 + $0x30] sm:$0xff]
        %v324 = vld [vmem:[%s189 + $0x38] sm:$0xf]
        %v325 = vld [vmem:[%s189 + $0x3c] sm:$0xff]
        %v326 = vld [vmem:[%s189 + $0x44] sm:$0xf]
        %v327 = vld [vmem:[%s189 + $0x48] sm:$0xff]
        %v328 = vld [vmem:[%s189 + $0x50] sm:$0xf]
        %v329 = vld [vmem:[%s189 + $0x54] sm:$0xff]
        %v330 = vld [vmem:[%s189 + $0x5c] sm:$0xf]
        %v331 = vld [vmem:[%s189 + $0x60] sm:$0xff]
        %v332 = vld [vmem:[%s189 + $0x68] sm:$0xf]
        %v333 = vld [vmem:[%s189 + $0x6c] sm:$0xff]
        %v334 = vld [vmem:[%s189 + $0x74] sm:$0xf]
        %v335 = vld [vmem:[%s189 + $0x78] sm:$0xff]
        %v336 = vld [vmem:[%s189 + $0x80] sm:$0xf]
        %v337 = vld [vmem:[%s189 + $0x84] sm:$0xff]
        %v338 = vld [vmem:[%s189 + $0x8c] sm:$0xf]
        %v339 = vld [vmem:[%s189 + $0x90] sm:$0xff]
        %v340 = vld [vmem:[%s189 + $0x98] sm:$0xf]
        %v341 = vld [vmem:[%s189 + $0x9c] sm:$0xff]
        %v342 = vld [vmem:[%s189 + $0xa4] sm:$0xf]
        %v343 = vld [vmem:[%s189 + $0xa8] sm:$0xff]
        %v344 = vld [vmem:[%s189 + $0xb0] sm:$0xf]
        %v345 = vld [vmem:[%s189 + $0xb4] sm:$0xff]
        %v346 = vld [vmem:[%s189 + $0xbc] sm:$0xf]
        %v347 = vld [vmem:[%s189 + $0xc0] sm:$0xff]
        %v348 = vld [vmem:[%s189 + $0xc8] sm:$0xf]
        %v349 = vld [vmem:[%s189 + $0xcc] sm:$0xff]
        %v350 = vld [vmem:[%s189 + $0xd4] sm:$0xf]
        %v351 = vld [vmem:[%s189 + $0xd8] sm:$0xff]
        %v352 = vld [vmem:[%s189 + $0xe0] sm:$0xf]
        %v353 = vld [vmem:[%s189 + $0xe4] sm:$0xff]
        %v354 = vld [vmem:[%s189 + $0xec] sm:$0xf]
        %v355 = vld [vmem:[%s189 + $0xf0] sm:$0xff]
        %v356 = vld [vmem:[%s189 + $0xf8] sm:$0xf]
        %v357 = vld [vmem:[%s189 + $0xfc] sm:$0xff]
        %v358 = vld [vmem:[%s189 + $0x104] sm:$0xf]
        %v359 = vld [vmem:[%s189 + $0x108] sm:$0xff]
        %v360 = vld [vmem:[%s189 + $0x110] sm:$0xf]
        %v361 = vld [vmem:[%s189 + $0x114] sm:$0xff]
        %v362 = vld [vmem:[%s189 + $0x11c] sm:$0xf]
        %v363 = vld [vmem:[%s189 + $0x120] sm:$0xff]
        %v364 = vld [vmem:[%s189 + $0x128] sm:$0xf]
        %v365 = vld [vmem:[%s189 + $0x12c] sm:$0xff]
        %v366 = vld [vmem:[%s189 + $0x134] sm:$0xf]
        %v367 = vld [vmem:[%s189 + $0x138] sm:$0xff]
        %v368 = vld [vmem:[%s189 + $0x140] sm:$0xf]
        %v369 = vld [vmem:[%s189 + $0x144] sm:$0xff]
        %v370 = vld [vmem:[%s189 + $0x14c] sm:$0xf]
        %v371 = vld [vmem:[%s189 + $0x150] sm:$0xff]
        %v372 = vld [vmem:[%s189 + $0x158] sm:$0xf]
        %v373 = vld [vmem:[%s189 + $0x15c] sm:$0xff]
        %v374 = vld [vmem:[%s189 + $0x164] sm:$0xf]
        %v375 = vld [vmem:[%s189 + $0x168] sm:$0xff]
        %v376 = vld [vmem:[%s189 + $0x170] sm:$0xf]
        %v377 = vld [vmem:[%s189 + $0x174] sm:$0xff]
        %v378 = vld [vmem:[%s189 + $0x17c] sm:$0xf]
        %v381 = vunpack.c.l.b16 %v313
        %v382 = vunpack.c.h.b16 %v313
        %v383 = vunpack.c.l.b16 %v314
        %v384 = vunpack.c.h.b16 %v314
        %v385 = vpack.c.b16 %v383, %v381
        %v386 = vpack.c.b16 %v384, %v382
        %v453 = vunpack.c.l.b16 %v315
        %v454 = vunpack.c.h.b16 %v315
        %v455 = vunpack.c.l.b16 %v316
        %v456 = vunpack.c.l.b16 %v317
        %v457 = vunpack.c.h.b16 %v317
        %v458 = vunpack.c.l.b16 %v318
        %v459 = vunpack.c.l.b16 %v319
        %v460 = vunpack.c.h.b16 %v319
        %v461 = vunpack.c.l.b16 %v320
        %v462 = vunpack.c.l.b16 %v321
        %v463 = vunpack.c.h.b16 %v321
        %v464 = vunpack.c.l.b16 %v322
        %v465 = vunpack.c.l.b16 %v323
        %v466 = vunpack.c.h.b16 %v323
        %v467 = vunpack.c.l.b16 %v324
        %v468 = vunpack.c.l.b16 %v325
        %v469 = vunpack.c.h.b16 %v325
        %v470 = vunpack.c.l.b16 %v326
        %v471 = vunpack.c.l.b16 %v327
        %v472 = vunpack.c.h.b16 %v327
        %v473 = vunpack.c.l.b16 %v328
        %v474 = vunpack.c.l.b16 %v329
        %v475 = vunpack.c.h.b16 %v329
        %v476 = vunpack.c.l.b16 %v330
        %v477 = vunpack.c.l.b16 %v331
        %v478 = vunpack.c.h.b16 %v331
        %v479 = vunpack.c.l.b16 %v332
        %v480 = vunpack.c.l.b16 %v333
        %v481 = vunpack.c.h.b16 %v333
        %v482 = vunpack.c.l.b16 %v334
        %v483 = vunpack.c.l.b16 %v335
        %v484 = vunpack.c.h.b16 %v335
        %v485 = vunpack.c.l.b16 %v336
        %v486 = vunpack.c.l.b16 %v337
        %v487 = vunpack.c.h.b16 %v337
        %v488 = vunpack.c.l.b16 %v338
        %v489 = vunpack.c.l.b16 %v339
        %v490 = vunpack.c.h.b16 %v339
        %v491 = vunpack.c.l.b16 %v340
        %v492 = vunpack.c.l.b16 %v341
        %v493 = vunpack.c.h.b16 %v341
        %v494 = vunpack.c.l.b16 %v342
        %v495 = vunpack.c.l.b16 %v343
        %v496 = vunpack.c.h.b16 %v343
        %v497 = vunpack.c.l.b16 %v344
        %v498 = vunpack.c.l.b16 %v345
        %v499 = vunpack.c.h.b16 %v345
        %v500 = vunpack.c.l.b16 %v346
        %v501 = vunpack.c.l.b16 %v347
        %v502 = vunpack.c.h.b16 %v347
        %v503 = vunpack.c.l.b16 %v348
        %v504 = vunpack.c.l.b16 %v349
        %v505 = vunpack.c.h.b16 %v349
        %v506 = vunpack.c.l.b16 %v350
        %v507 = vunpack.c.l.b16 %v351
        %v508 = vunpack.c.h.b16 %v351
        %v509 = vunpack.c.l.b16 %v352
        %v510 = vunpack.c.l.b16 %v353
        %v511 = vunpack.c.h.b16 %v353
        %v512 = vunpack.c.l.b16 %v354
        %v513 = vunpack.c.l.b16 %v355
        %v514 = vunpack.c.h.b16 %v355
        %v515 = vunpack.c.l.b16 %v356
        %v516 = vunpack.c.l.b16 %v357
        %v517 = vunpack.c.h.b16 %v357
        %v518 = vunpack.c.l.b16 %v358
        %v519 = vunpack.c.l.b16 %v359
        %v520 = vunpack.c.h.b16 %v359
        %v521 = vunpack.c.l.b16 %v360
        %v522 = vunpack.c.l.b16 %v361
        %v523 = vunpack.c.h.b16 %v361
        %v524 = vunpack.c.l.b16 %v362
        %v525 = vunpack.c.l.b16 %v363
        %v526 = vunpack.c.h.b16 %v363
        %v527 = vunpack.c.l.b16 %v364
        %v528 = vunpack.c.l.b16 %v365
        %v529 = vunpack.c.h.b16 %v365
        %v530 = vunpack.c.l.b16 %v366
        %v531 = vunpack.c.l.b16 %v367
        %v532 = vunpack.c.h.b16 %v367
        %v533 = vunpack.c.l.b16 %v368
        %v534 = vunpack.c.l.b16 %v369
        %v535 = vunpack.c.h.b16 %v369
        %v536 = vunpack.c.l.b16 %v370
        %v537 = vunpack.c.l.b16 %v371
        %v538 = vunpack.c.h.b16 %v371
        %v539 = vunpack.c.l.b16 %v372
        %v540 = vunpack.c.l.b16 %v373
        %v541 = vunpack.c.h.b16 %v373
        %v542 = vunpack.c.l.b16 %v374
        %v543 = vunpack.c.l.b16 %v375
        %v544 = vunpack.c.h.b16 %v375
        %v545 = vunpack.c.l.b16 %v376
        %v546 = vunpack.c.l.b16 %v377
        %v547 = vunpack.c.h.b16 %v377
        %v548 = vunpack.c.l.b16 %v378
        %v549 = vpack.c.b16 %v456, %v453
        %v550 = vpack.c.b16 %v457, %v454
        %v551 = vpack.c.b16 %v458, %v455
        %v552 = vpack.c.b16 %v462, %v459
        %v553 = vpack.c.b16 %v463, %v460
        %v554 = vpack.c.b16 %v464, %v461
        %v555 = vpack.c.b16 %v468, %v465
        %v556 = vpack.c.b16 %v469, %v466
        %v557 = vpack.c.b16 %v470, %v467
        %v558 = vpack.c.b16 %v474, %v471
        %v559 = vpack.c.b16 %v475, %v472
        %v560 = vpack.c.b16 %v476, %v473
        %v561 = vpack.c.b16 %v480, %v477
        %v562 = vpack.c.b16 %v481, %v478
        %v563 = vpack.c.b16 %v482, %v479
        %v564 = vpack.c.b16 %v486, %v483
        %v565 = vpack.c.b16 %v487, %v484
        %v566 = vpack.c.b16 %v488, %v485
        %v567 = vpack.c.b16 %v492, %v489
        %v568 = vpack.c.b16 %v493, %v490
        %v569 = vpack.c.b16 %v494, %v491
        %v570 = vpack.c.b16 %v498, %v495
        %v571 = vpack.c.b16 %v499, %v496
        %v572 = vpack.c.b16 %v500, %v497
        %v573 = vpack.c.b16 %v504, %v501
        %v574 = vpack.c.b16 %v505, %v502
        %v575 = vpack.c.b16 %v506, %v503
        %v576 = vpack.c.b16 %v510, %v507
        %v577 = vpack.c.b16 %v511, %v508
        %v578 = vpack.c.b16 %v512, %v509
        %v579 = vpack.c.b16 %v516, %v513
        %v580 = vpack.c.b16 %v517, %v514
        %v581 = vpack.c.b16 %v518, %v515
        %v582 = vpack.c.b16 %v522, %v519
        %v583 = vpack.c.b16 %v523, %v520
        %v584 = vpack.c.b16 %v524, %v521
        %v585 = vpack.c.b16 %v528, %v525
        %v586 = vpack.c.b16 %v529, %v526
        %v587 = vpack.c.b16 %v530, %v527
        %v588 = vpack.c.b16 %v534, %v531
        %v589 = vpack.c.b16 %v535, %v532
        %v590 = vpack.c.b16 %v536, %v533
        %v591 = vpack.c.b16 %v540, %v537
        %v592 = vpack.c.b16 %v541, %v538
        %v593 = vpack.c.b16 %v542, %v539
        %v594 = vpack.c.b16 %v546, %v543
        %v595 = vpack.c.b16 %v547, %v544
        %v596 = vpack.c.b16 %v548, %v545
        %645 = vmatprep.subr.bf16.mxu0 %v571
        %646 = vmatpush1.bf16.msra.mxu0 %v570
        %647 = vmatprep.subr.bf16.mxu0 %v568
        %648 = vmatpush1.bf16.msra.mxu0 %v567
        %649 = vmatprep.subr.bf16.mxu0 %v565
        %650 = vmatpush1.bf16.msra.mxu0 %v564
        %651 = vmatprep.subr.bf16.mxu0 %v562
        %652 = vmatpush1.bf16.msra.mxu0 %v561
        %653 = vmatprep.subr.bf16.mxu0 %v559
        %654 = vmatpush1.bf16.msra.mxu0 %v558
        %655 = vmatprep.subr.bf16.mxu0 %v556
        %656 = vmatpush1.bf16.msra.mxu0 %v555
        %657 = vmatprep.subr.bf16.mxu0 %v553
        %658 = vmatpush1.bf16.msra.mxu0 %v552
        %659 = vmatprep.subr.bf16.mxu0 %v550
        %660 = vmatpush1.bf16.msra.mxu0 %v549
        %661 = vmatprep.subr.bf16.mxu0 %v595
        %662 = vmatpush2.bf16.msra.mxu0 %v594
        %663 = vmatprep.subr.bf16.mxu0 %v592
        %664 = vmatpush2.bf16.msra.mxu0 %v591
        %665 = vmatprep.subr.bf16.mxu0 %v589
        %666 = vmatpush2.bf16.msra.mxu0 %v588
        %667 = vmatprep.subr.bf16.mxu0 %v586
        %668 = vmatpush2.bf16.msra.mxu0 %v585
        %669 = vmatprep.subr.bf16.mxu0 %v583
        %670 = vmatpush2.bf16.msra.mxu0 %v582
        %671 = vmatprep.subr.bf16.mxu0 %v580
        %672 = vmatpush2.bf16.msra.mxu0 %v579
        %673 = vmatprep.subr.bf16.mxu0 %v577
        %674 = vmatpush2.bf16.msra.mxu0 %v576
        %675 = vmatprep.subr.bf16.mxu0 %v574
        %676 = vmatpush2.bf16.msra.mxu0 %v573
        %677 = vmatprep.mubr.bf16.mxu0 %v386
        %678 = vmatmul.mubr.bf16.gmra.mxu0 %v385
        %v679 = vpop.f32.mrf.mxu0
        %v680 = vadd.f32 0.0, %v679
        %v681 = vpop.f32.mrf.mxu0
        %v682 = vadd.f32 0.0, %v681
        %v683 = vpop.f32.mrf.mxu0
        %v684 = vadd.f32 0.0, %v683
        %v685 = vpop.f32.mrf.mxu0
        %v686 = vadd.f32 0.0, %v685
        %687 = vdwg.mxu0
        %688 = vmatprep.subr.bf16.mxu0 0
        %689 = vmatpush1.bf16.msra.mxu0 %v572
        %690 = vmatprep.subr.bf16.mxu0 0
        %691 = vmatpush1.bf16.msra.mxu0 %v569
        %692 = vmatprep.subr.bf16.mxu0 0
        %693 = vmatpush1.bf16.msra.mxu0 %v566
        %694 = vmatprep.subr.bf16.mxu0 0
        %695 = vmatpush1.bf16.msra.mxu0 %v563
        %696 = vmatprep.subr.bf16.mxu0 0
        %697 = vmatpush1.bf16.msra.mxu0 %v560
        %698 = vmatprep.subr.bf16.mxu0 0
        %699 = vmatpush1.bf16.msra.mxu0 %v557
        %700 = vmatprep.subr.bf16.mxu0 0
        %701 = vmatpush1.bf16.msra.mxu0 %v554
        %702 = vmatprep.subr.bf16.mxu0 0
        %703 = vmatpush1.bf16.msra.mxu0 %v551
        %704 = vmatprep.subr.bf16.mxu0 0
        %705 = vmatpush2.bf16.msra.mxu0 %v596
        %706 = vmatprep.subr.bf16.mxu0 0
        %707 = vmatpush2.bf16.msra.mxu0 %v593
        %708 = vmatprep.subr.bf16.mxu0 0
        %709 = vmatpush2.bf16.msra.mxu0 %v590
        %710 = vmatprep.subr.bf16.mxu0 0
        %711 = vmatpush2.bf16.msra.mxu0 %v587
        %712 = vmatprep.subr.bf16.mxu0 0
        %713 = vmatpush2.bf16.msra.mxu0 %v584
        %714 = vmatprep.subr.bf16.mxu0 0
        %715 = vmatpush2.bf16.msra.mxu0 %v581
        %716 = vmatprep.subr.bf16.mxu0 0
        %717 = vmatpush2.bf16.msra.mxu0 %v578
        %718 = vmatprep.subr.bf16.mxu0 0
        %719 = vmatpush2.bf16.msra.mxu0 %v575
        %720 = vmatprep.mubr.bf16.mxu0 %v386
        %721 = vmatmul.mubr.bf16.gmra.mxu0 %v385
        %v722 = vpop.f32.mrf.mxu0
        %v723 = vadd.f32 0.0, %v722
        %v724 = vpop.f32.mrf.mxu0
        %v725 = vpop.f32.mrf.mxu0
        %v726 = vadd.f32 0.0, %v725
        %v727 = vpop.f32.mrf.mxu0
        %728 = vdwg.mxu0
        %v729 = vpack.c.bf16 %v684, %v680
        %v730 = vpack.c.bf16 %v686, %v682
        %v731 = vpack.c.bf16 %v726, %v723
        %v735 = vunpack.c.l.b16 %v729
        %v736 = vunpack.c.l.b16 %v730
        %v737 = vunpack.c.l.b16 %v731
        %v738 = vunpack.c.h.b16 %v729
        %v739 = vunpack.c.h.b16 %v730
        %v740 = vunpack.c.h.b16 %v731
        %v741 = vpack.c.b16 %v736, %v735
        %v742 = vpack.c.b16 %v737, %v737
        %v743 = vpack.c.b16 %v739, %v738
        %v744 = vpack.c.b16 %v740, %v740
        %749 = vst [vmem:[%s216] sm:$0xff] %v741
        %750 = vst [vmem:[%s216 + $0x8] sm:$0xf] %v742
        %751 = vst [vmem:[%s216 + $0xc] sm:$0xff] %v743
        %752 = vst [vmem:[%s216 + $0x14] sm:$0xf] %v744
        %s753 = sand.u32 %s112, 1
        %s754 = sand.u32 %s112, 1
        %s755 = smul.addr %s754, 24
        %s756 = scalar_lea.vmem [#allocation5], %s755
        // Predicated region
        $region41: #{transformer_forward.11} parent=31 // pred_check
          %p757 = pneg %p122
        $region42: #{transformer_forward.11} parent=31 // pred_check_branch
          %759 = sbr.rel (%p757) target = $region44
        $region43: #{transformer_forward.11} parent=31 // pred_region
          %s760 = smul.u32 2, %s21
          %s761 = smul.u32 3, %s22
          %s762 = smul.addr %s760, 6
          %s763 = sadd.s32 %s761, %s762
          %s764 = smul.addr %s763, 4
          %s765 = scalar_lea.vmem %s3, %s764
          // Predicated region
          $region45: #{transformer_forward.11} parent=43 // pred_check
            _
          $region46: #{transformer_forward.11} parent=43 // pred_check_branch
            %767 = sbr.rel (0) target = $region48
          $region47: #{transformer_forward.11} parent=43 // pred_region
            // Predicated region
            $region49: #{transformer_forward.11} parent=47 // pred_check
              _
            $region50: #{transformer_forward.11} parent=47 // pred_check_branch
              %769 = sbr.rel (0) target = $region52
            $region51: #{transformer_forward.11} parent=47 // pred_region
              %s770 = scalar_lea.vmem %s756, 8 [#allocation5]
              %s771 = scalar_lea.vmem %s765, 8
              loop: start=0, step=1, limit=1
              $region53: #{transformer_forward.11} parent=51 // loop_pre_header
                _
              $region54: #{transformer_forward.11} parent=51 // loop_header
                %s773 = sphi 0, %s777
                %p774 = scmp.ge.s32.totalorder %s773, 1
                %s778 = sphi %s756, %s756
                %s779 = sphi %s765, %s765
              $region55: #{transformer_forward.11} parent=51 // loop_header_branch
                %776 = sbr.rel (%p774) target = $region59
              $region56: #{transformer_forward.11} parent=51 // loop_body
                %v780 = vld [vmem:[%s778] sm:$0xff]
                %781 = vst [vmem:[%s779] sm:$0xff] %v780
                %v782 = vld [vmem:[%s778 + $0xc] sm:$0xff]
                %783 = vst [vmem:[%s779 + $0x18] sm:$0xff] %v782
              $region57: #{transformer_forward.11} parent=51 // loop_footer
                %s777 = sadd.s32 1, %s773
              $region58: #{transformer_forward.11} parent=51 // loop_footer_branch
                %772 = sbr.rel target = $region54
              $region59: #{transformer_forward.11} parent=51 // loop_exit
                _
              %s785 = ssub.s32 16, 1
              loop: start=0, step=1, limit=1
              $region60: #{transformer_forward.11} parent=51 // loop_pre_header
                _
              $region61: #{transformer_forward.11} parent=51 // loop_header
                %s787 = sphi 0, %s791
                %p788 = scmp.ge.s32.totalorder %s787, 1
                %s792 = sphi %s770, %s770
                %s793 = sphi %s771, %s771
              $region62: #{transformer_forward.11} parent=51 // loop_header_branch
                %790 = sbr.rel (%p788) target = $region66
              $region63: #{transformer_forward.11} parent=51 // loop_body
                %v794 = vld [vmem:[%s792] sm:%s785]
                %795 = vst [vmem:[%s793] sm:%s785] %v794
                %v796 = vld [vmem:[%s792 + $0xc] sm:%s785]
                %797 = vst [vmem:[%s793 + $0x18] sm:%s785] %v796
              $region64: #{transformer_forward.11} parent=51 // loop_footer
                %s791 = sadd.s32 1, %s787
              $region65: #{transformer_forward.11} parent=51 // loop_footer_branch
                %786 = sbr.rel target = $region61
              $region66: #{transformer_forward.11} parent=51 // loop_exit
                _
            $region52: #{transformer_forward.11} parent=47 // pred_fallthru
              _
          $region48: #{transformer_forward.11} parent=43 // pred_fallthru
            _
          %798 = vnop
        $region44: #{transformer_forward.11} parent=31 // pred_fallthru
          _
      $region32: #{transformer_forward.11} parent=5 // pred_fallthru
        _
      %p799 = scmp.le.s32.totalorder 2, %s12
      // Predicated region
      $region67: #{transformer_forward.11} parent=5 // pred_check
        %p800 = pneg %p799
      $region68: #{transformer_forward.11} parent=5 // pred_check_branch
        %802 = sbr.rel (%p800) target = $region70
      $region69: #{transformer_forward.11} parent=5 // pred_region
        %s803 = ssub.s32 %s12, 2
        // Predicated region
        $region71: #{transformer_forward.11} parent=69 // pred_check
          %p804 = pneg %p128
        $region72: #{transformer_forward.11} parent=69 // pred_check_branch
          %806 = sbr.rel (%p804) target = $region74
        $region73: #{transformer_forward.11} parent=69 // pred_region
          %s807 = sand.u32 %s113, 1
          %s808 = sand.u32 %s113, 1
          %s809 = smul.addr %s808, 24
          %s810 = scalar_lea.vmem [#allocation5], %s809
        $region74: #{transformer_forward.11} parent=69 // pred_fallthru
          _
      $region70: #{transformer_forward.11} parent=5 // pred_fallthru
        _
    $region6: #{transformer_forward.11} parent=1 // loop_footer
      %s16 = sadd.s32 1, %s12
    $region7: #{transformer_forward.11} parent=1 // loop_footer_branch
      %11 = sbr.rel target = $region3
    $region8: #{transformer_forward.11} parent=1 // loop_exit
      _
    %811 = vsyncpa [#allocation4], 1
    %s812 = scalar_lea.sflag [#allocation4], 1
    %813 = vsyncpa %s812, 1

// kernel: transformer_forward.14
$region0: #{transformer_forward.14}
  #allocation0 [shape = 'u32[]', space=smem, size = 0x4, offset = 0x4, fixed_abs, tag = 'smem constant byte address 0x4 - core index']
  #allocation1 [shape = 'u32[144,128]{1,0:T(1,128)}', space=vmem, size = 0x12000, scoped, tag = 'internal scratch']
  #allocation2 [shape = 'bf16[16,256]{1,0:T(8,128)(2,1)}', space=vmem, size = 0x2000, scoped, tag = 'scratch operand']
  %s0 = inlined_call_operand.vmem [shape: bf16[16,256], index: 0, kind: input, shape index: {}]
  %s1 = inlined_call_operand.vmem [shape: bf16[1,256], index: 1, kind: input, shape index: {}]
  %s2 = inlined_call_operand.vmem [shape: bf16[256,768], index: 2, kind: input, shape index: {}]
  %s3 = inlined_call_operand.vmem [shape: bf16[256,768], index: 3, kind: input, shape index: {}]
  %s4 = inlined_call_operand.vmem [shape: bf16[16,768], index: 4, kind: output, shape index: {}]
  %s5 = sld [smem:[#allocation0]]
  $region163: #{transformer_forward.14} parent=0
    _
  %s7 = ssub.s32 1, %s5
  %s8 = scalar_select 0, %s7, %s5
  $region1: #{transformer_forward.14} parent=0
    #allocation3 [shape = 'u8[262144]{0}', space=vmem, size = 0x40000, scoped, tag = 'input window, operand 2']
    #allocation4 [shape = 'u8[262144]{0}', space=vmem, size = 0x40000, scoped, tag = 'input window, operand 3']
    #allocation5 [shape = 'u8[16384]{0}', space=vmem, size = 0x4000, scoped, tag = 'output window, operand 0']
    loop: start=0, step=1, limit=5
    $region2: #{transformer_forward.14} parent=1 // loop_pre_header
      _
    $region3: #{transformer_forward.14} parent=1 // loop_header
      %s10 = sphi 0, %s14
      %p11 = scmp.ge.s32.totalorder %s10, 5
      %s17 = sphi 0, %s29
      %s18 = sphi 0, %s25
      %s19 = sphi 0, %s17
      %s20 = sphi 0, %s18
      %s21 = sphi 0, %s19
      %s22 = sphi 0, %s20
      %s32 = sphi 0, %s34
      %s35 = sphi 0, %s32
      %s36 = sphi 0, %s35
      %s52 = sphi 0, %s36
      %s56 = sphi 0, %s56
      %s58 = sphi 0, %s56
      %s59 = sphi 0, %s58
      %s73 = sphi 0, %s59
      %s79 = sphi 0, %s81
      %s82 = sphi 0, %s79
      %s83 = sphi 0, %s82
      %s99 = sphi 0, %s83
      %s105 = sphi 0, %s107
      %s108 = sphi 0, %s105
      %s109 = sphi 0, %s108
      %s125 = sphi 0, %s109
      %s133 = sphi 0, %s135
      %s136 = sphi 0, %s133
      %s137 = sphi 0, %s136
      %s153 = sphi 0, %s137
    $region4: #{transformer_forward.14} parent=1 // loop_header_branch
      %13 = sbr.rel (%p11) target = $region8
    $region5: #{transformer_forward.14} parent=1 // loop_body
      %s15 = ssub.s32 %s10, 1
      %s16 = ssub.s32 %s10, 2
      %s23 = sadd.s32 1, %s18
      %p24 = scmp.ge.s32.totalorder %s23, 3
      %s25 = scalar_select %p24, 0, %s23
      %s26 = sadd.s32 1, %s17
      %s27 = scalar_select %p24, %s26, %s17
      %p28 = scmp.ge.s32.totalorder %s27, 1
      %s29 = scalar_select %p28, 0, %s27
      %s30 = ssub.s32 %s17, %s29
      %p31 = scmp.eq.s32.totalorder %s30, 0
      %s33 = sadd.s32 %s32, 1
      %s34 = scalar_select %p31, %s32, %s33
      %p37 = pneg %p31
      %p38 = scmp.eq.s32.totalorder %s10, 2
      %p39 = por %p37, %p38
      %p40 = scmp.ne.s32.totalorder %s32, %s35
      %p41 = scmp.eq.s32.totalorder %s10, 0
      %p42 = por %p40, %p41
      %p43 = scmp.ne.s32.totalorder %s32, %s35
      %p44 = scmp.eq.s32.totalorder %s15, 2
      %p45 = por %p43, %p44
      %p46 = scmp.ne.s32.totalorder %s35, %s36
      %p47 = scmp.eq.s32.totalorder %s15, 0
      %p48 = por %p46, %p47
      %p49 = scmp.ne.s32.totalorder %s35, %s36
      %p50 = scmp.eq.s32.totalorder %s16, 2
      %p51 = por %p49, %p50
      %p53 = scmp.ne.s32.totalorder %s36, %s52
      %p54 = scmp.eq.s32.totalorder %s16, 0
      %p55 = por %p53, %p54
      %s57 = sadd.s32 %s56, 1
      %p60 = scmp.eq.s32.totalorder %s10, 2
      %p61 = scmp.ne.s32.totalorder %s56, %s58
      %p62 = scmp.eq.s32.totalorder %s10, 0
      %p63 = por %p61, %p62
      %p64 = scmp.ne.s32.totalorder %s56, %s58
      %p65 = scmp.eq.s32.totalorder %s15, 2
      %p66 = por %p64, %p65
      %p67 = scmp.ne.s32.totalorder %s58, %s59
      %p68 = scmp.eq.s32.totalorder %s15, 0
      %p69 = por %p67, %p68
      %p70 = scmp.ne.s32.totalorder %s58, %s59
      %p71 = scmp.eq.s32.totalorder %s16, 2
      %p72 = por %p70, %p71
      %p74 = scmp.ne.s32.totalorder %s59, %s73
      %p75 = scmp.eq.s32.totalorder %s16, 0
      %p76 = por %p74, %p75
      %s77 = ssub.s32 %s18, %s25
      %p78 = scmp.eq.s32.totalorder %s77, 0
      %s80 = sadd.s32 %s79, 1
      %s81 = scalar_select %p78, %s79, %s80
      %p84 = pneg %p78
      %p85 = scmp.eq.s32.totalorder %s10, 2
      %p86 = por %p84, %p85
      %p87 = scmp.ne.s32.totalorder %s79, %s82
      %p88 = scmp.eq.s32.totalorder %s10, 0
      %p89 = por %p87, %p88
      %p90 = scmp.ne.s32.totalorder %s79, %s82
      %p91 = scmp.eq.s32.totalorder %s15, 2
      %p92 = por %p90, %p91
      %p93 = scmp.ne.s32.totalorder %s82, %s83
      %p94 = scmp.eq.s32.totalorder %s15, 0
      %p95 = por %p93, %p94
      %p96 = scmp.ne.s32.totalorder %s82, %s83
      %p97 = scmp.eq.s32.totalorder %s16, 2
      %p98 = por %p96, %p97
      %p100 = scmp.ne.s32.totalorder %s83, %s99
      %p101 = scmp.eq.s32.totalorder %s16, 0
      %p102 = por %p100, %p101
      %s103 = ssub.s32 %s18, %s25
      %p104 = scmp.eq.s32.totalorder %s103, 0
      %s106 = sadd.s32 %s105, 1
      %s107 = scalar_select %p104, %s105, %s106
      %p110 = pneg %p104
      %p111 = scmp.eq.s32.totalorder %s10, 2
      %p112 = por %p110, %p111
      %p113 = scmp.ne.s32.totalorder %s105, %s108
      %p114 = scmp.eq.s32.totalorder %s10, 0
      %p115 = por %p113, %p114
      %p116 = scmp.ne.s32.totalorder %s105, %s108
      %p117 = scmp.eq.s32.totalorder %s15, 2
      %p118 = por %p116, %p117
      %p119 = scmp.ne.s32.totalorder %s108, %s109
      %p120 = scmp.eq.s32.totalorder %s15, 0
      %p121 = por %p119, %p120
      %p122 = scmp.ne.s32.totalorder %s108, %s109
      %p123 = scmp.eq.s32.totalorder %s16, 2
      %p124 = por %p122, %p123
      %p126 = scmp.ne.s32.totalorder %s109, %s125
      %p127 = scmp.eq.s32.totalorder %s16, 0
      %p128 = por %p126, %p127
      %s129 = ssub.s32 %s17, %s29
      %s130 = ssub.s32 %s18, %s25
      %s131 = sor.u32 %s129, %s130
      %p132 = scmp.eq.s32.totalorder %s131, 0
      %s134 = sadd.s32 %s133, 1
      %s135 = scalar_select %p132, %s133, %s134
      %p138 = pneg %p132
      %p139 = scmp.eq.s32.totalorder %s10, 2
      %p140 = por %p138, %p139
      %p141 = scmp.ne.s32.totalorder %s133, %s136
      %p142 = scmp.eq.s32.totalorder %s10, 0
      %p143 = por %p141, %p142
      %p144 = scmp.ne.s32.totalorder %s133, %s136
      %p145 = scmp.eq.s32.totalorder %s15, 2
      %p146 = por %p144, %p145
      %p147 = scmp.ne.s32.totalorder %s136, %s137
      %p148 = scmp.eq.s32.totalorder %s15, 0
      %p149 = por %p147, %p148
      %p150 = scmp.ne.s32.totalorder %s136, %s137
      %p151 = scmp.eq.s32.totalorder %s16, 2
      %p152 = por %p150, %p151
      %p154 = scmp.ne.s32.totalorder %s137, %s153
      %p155 = scmp.eq.s32.totalorder %s16, 0
      %p156 = por %p154, %p155
      %p157 = scmp.le.s32.totalorder 1, %s10
      %p158 = scmp.lt.s32.totalorder %s10, 4
      %p159 = pnand %p157, %p158
      %p160 = pneg %p159
      // Predicated region
      $region9: #{transformer_forward.14} parent=5 // pred_check
        _
      $region10: #{transformer_forward.14} parent=5 // pred_check_branch
        %162 = sbr.rel (%p159) target = $region12
      $region11: #{transformer_forward.14} parent=5 // pred_region
        %s163 = ssub.s32 %s10, 1
        // Predicated region
        $region13: #{transformer_forward.14} parent=11 // pred_check
          %p164 = pneg %p48
        $region14: #{transformer_forward.14} parent=11 // pred_check_branch
          %166 = sbr.rel (%p164) target = $region16
        $region15: #{transformer_forward.14} parent=11 // pred_region
          %s167 = smul.u32 2, %s19
          %p168 = scmp.lt.s32.totalorder %s167, 1
          %s169 = scalar_select %p168, %s167, 1
          %s170 = smul.addr %s169, 2
          %s171 = smul.addr %s170, 4
          %s172 = scalar_lea.vmem %s0, %s171
          %s173 = smul.u32 2, %s19
        $region16: #{transformer_forward.14} parent=11 // pred_fallthru
          _
        // Predicated region
        $region17: #{transformer_forward.14} parent=11 // pred_check
          %p174 = pneg %p69
        $region18: #{transformer_forward.14} parent=11 // pred_check_branch
          %176 = sbr.rel (%p174) target = $region20
        $region19: #{transformer_forward.14} parent=11 // pred_region
          _
        $region20: #{transformer_forward.14} parent=11 // pred_fallthru
          _
      $region12: #{transformer_forward.14} parent=5 // pred_fallthru
        _
      %p177 = scmp.lt.s32.totalorder %s10, 3
      // Predicated region
      $region21: #{transformer_forward.14} parent=5 // pred_check
        %p178 = pneg %p177
      $region22: #{transformer_forward.14} parent=5 // pred_check_branch
        %180 = sbr.rel (%p178) target = $region24
      $region23: #{transformer_forward.14} parent=5 // pred_region
        // Predicated region
        $region25: #{transformer_forward.14} parent=23 // pred_check
          %p181 = pneg %p89
        $region26: #{transformer_forward.14} parent=23 // pred_check_branch
          %183 = sbr.rel (%p181) target = $region28
        $region27: #{transformer_forward.14} parent=23 // pred_region
          %s184 = sand.u32 %s79, 1
          %s185 = sand.u32 %s79, 1
          %s186 = smul.addr %s185, 256
          %s187 = scalar_lea.vmem [#allocation3], %s186
          %s188 = smul.u32 2, %s18
          %s189 = smul.addr %s188, 4
          %s190 = scalar_lea.vmem %s2, %s189
          // Predicated region
          $region29: #{transformer_forward.14} parent=27 // pred_check
            _
          $region30: #{transformer_forward.14} parent=27 // pred_check_branch
            %192 = sbr.rel (0) target = $region32
          $region31: #{transformer_forward.14} parent=27 // pred_region
            // Predicated region
            $region33: #{transformer_forward.14} parent=31 // pred_check
              _
            $region34: #{transformer_forward.14} parent=31 // pred_check_branch
              %194 = sbr.rel (0) target = $region36
            $region35: #{transformer_forward.14} parent=31 // pred_region
              // Predicated region
              $region48: #{transformer_forward.14} parent=35 // pred_check
                _
              $region49: #{transformer_forward.14} parent=35 // pred_check_branch
                %272 = sbr.rel (0) target = $region51
              $region50: #{transformer_forward.14} parent=35 // pred_region
                loop: start=0, step=1, limit=1
                $region52: #{transformer_forward.14} parent=50 // loop_pre_header
                  _
                $region53: #{transformer_forward.14} parent=50 // loop_header
                  %s274 = sphi 0, %s278
                  %p275 = scmp.ge.s32.totalorder %s274, 1
                  %s279 = sphi %s190, %s190
                  %s280 = sphi %s187, %s187
                $region54: #{transformer_forward.14} parent=50 // loop_header_branch
                  %277 = sbr.rel (%p275) target = $region58
                $region55: #{transformer_forward.14} parent=50 // loop_body
                  %v281 = vld [vmem:[%s279] sm:$0xff]
                  %282 = vst [vmem:[%s280] sm:$0xff] %v281
                  %v283 = vld [vmem:[%s279 + $0x18] sm:$0xff]
                  %284 = vst [vmem:[%s280 + $0x8] sm:$0xff] %v283
                  %v285 = vld [vmem:[%s279 + $0x30] sm:$0xff]
                  %286 = vst [vmem:[%s280 + $0x10] sm:$0xff] %v285
                  %v287 = vld [vmem:[%s279 + $0x48] sm:$0xff]
                  %288 = vst [vmem:[%s280 + $0x18] sm:$0xff] %v287
                  %v289 = vld [vmem:[%s279 + $0x60] sm:$0xff]
                  %290 = vst [vmem:[%s280 + $0x20] sm:$0xff] %v289
                  %v291 = vld [vmem:[%s279 + $0x78] sm:$0xff]
                  %292 = vst [vmem:[%s280 + $0x28] sm:$0xff] %v291
                  %v293 = vld [vmem:[%s279 + $0x90] sm:$0xff]
                  %294 = vst [vmem:[%s280 + $0x30] sm:$0xff] %v293
                  %v295 = vld [vmem:[%s279 + $0xa8] sm:$0xff]
                  %296 = vst [vmem:[%s280 + $0x38] sm:$0xff] %v295
                  %v297 = vld [vmem:[%s279 + $0xc0] sm:$0xff]
                  %298 = vst [vmem:[%s280 + $0x40] sm:$0xff] %v297
                  %v299 = vld [vmem:[%s279 + $0xd8] sm:$0xff]
                  %300 = vst [vmem:[%s280 + $0x48] sm:$0xff] %v299
                  %v301 = vld [vmem:[%s279 + $0xf0] sm:$0xff]
                  %302 = vst [vmem:[%s280 + $0x50] sm:$0xff] %v301
                  %v303 = vld [vmem:[%s279 + $0x108] sm:$0xff]
                  %304 = vst [vmem:[%s280 + $0x58] sm:$0xff] %v303
                  %v305 = vld [vmem:[%s279 + $0x120] sm:$0xff]
                  %306 = vst [vmem:[%s280 + $0x60] sm:$0xff] %v305
                  %v307 = vld [vmem:[%s279 + $0x138] sm:$0xff]
                  %308 = vst [vmem:[%s280 + $0x68] sm:$0xff] %v307
                  %v309 = vld [vmem:[%s279 + $0x150] sm:$0xff]
                  %310 = vst [vmem:[%s280 + $0x70] sm:$0xff] %v309
                  %v311 = vld [vmem:[%s279 + $0x168] sm:$0xff]
                  %312 = vst [vmem:[%s280 + $0x78] sm:$0xff] %v311
                  %v313 = vld [vmem:[%s279 + $0x180] sm:$0xff]
                  %314 = vst [vmem:[%s280 + $0x80] sm:$0xff] %v313
                  %v315 = vld [vmem:[%s279 + $0x198] sm:$0xff]
                  %316 = vst [vmem:[%s280 + $0x88] sm:$0xff] %v315
                  %v317 = vld [vmem:[%s279 + $0x1b0] sm:$0xff]
                  %318 = vst [vmem:[%s280 + $0x90] sm:$0xff] %v317
                  %v319 = vld [vmem:[%s279 + $0x1c8] sm:$0xff]
                  %320 = vst [vmem:[%s280 + $0x98] sm:$0xff] %v319
                  %v321 = vld [vmem:[%s279 + $0x1e0] sm:$0xff]
                  %322 = vst [vmem:[%s280 + $0xa0] sm:$0xff] %v321
                  %v323 = vld [vmem:[%s279 + $0x1f8] sm:$0xff]
                  %324 = vst [vmem:[%s280 + $0xa8] sm:$0xff] %v323
                  %v325 = vld [vmem:[%s279 + $0x210] sm:$0xff]
                  %326 = vst [vmem:[%s280 + $0xb0] sm:$0xff] %v325
                  %v327 = vld [vmem:[%s279 + $0x228] sm:$0xff]
                  %328 = vst [vmem:[%s280 + $0xb8] sm:$0xff] %v327
                  %v329 = vld [vmem:[%s279 + $0x240] sm:$0xff]
                  %330 = vst [vmem:[%s280 + $0xc0] sm:$0xff] %v329
                  %v331 = vld [vmem:[%s279 + $0x258] sm:$0xff]
                  %332 = vst [vmem:[%s280 + $0xc8] sm:$0xff] %v331
                  %v333 = vld [vmem:[%s279 + $0x270] sm:$0xff]
                  %334 = vst [vmem:[%s280 + $0xd0] sm:$0xff] %v333
                  %v335 = vld [vmem:[%s279 + $0x288] sm:$0xff]
                  %336 = vst [vmem:[%s280 + $0xd8] sm:$0xff] %v335
                  %v337 = vld [vmem:[%s279 + $0x2a0] sm:$0xff]
                  %338 = vst [vmem:[%s280 + $0xe0] sm:$0xff] %v337
                  %v339 = vld [vmem:[%s279 + $0x2b8] sm:$0xff]
                  %340 = vst [vmem:[%s280 + $0xe8] sm:$0xff] %v339
                  %v341 = vld [vmem:[%s279 + $0x2d0] sm:$0xff]
                  %342 = vst [vmem:[%s280 + $0xf0] sm:$0xff] %v341
                  %v343 = vld [vmem:[%s279 + $0x2e8] sm:$0xff]
                  %344 = vst [vmem:[%s280 + $0xf8] sm:$0xff] %v343
                $region56: #{transformer_forward.14} parent=50 // loop_footer
                  %s278 = sadd.s32 1, %s274
                $region57: #{transformer_forward.14} parent=50 // loop_footer_branch
                  %273 = sbr.rel target = $region53
                $region58: #{transformer_forward.14} parent=50 // loop_exit
                  _
              $region51: #{transformer_forward.14} parent=35 // pred_fallthru
                _
              // Predicated region
              $region59: #{transformer_forward.14} parent=35 // pred_check
                _
              $region60: #{transformer_forward.14} parent=35 // pred_check_branch
                %346 = sbr.rel target = $region62
              $region61: #{transformer_forward.14} parent=35 // pred_region
                _
              $region62: #{transformer_forward.14} parent=35 // pred_fallthru
                _
            $region36: #{transformer_forward.14} parent=31 // pred_fallthru
              _
            // Predicated region
            $region37: #{transformer_forward.14} parent=31 // pred_check
              _
            $region38: #{transformer_forward.14} parent=31 // pred_check_branch
              %196 = sbr.rel target = $region40
            $region39: #{transformer_forward.14} parent=31 // pred_region
              %s198 = ssub.s32 256, 1
              loop: start=0, step=1, limit=1
              $region41: #{transformer_forward.14} parent=39 // loop_pre_header
                _
              $region42: #{transformer_forward.14} parent=39 // loop_header
                %s200 = sphi 0, %s204
                %p201 = scmp.ge.s32.totalorder %s200, 1
                %s205 = sphi %s190, %s190
                %s206 = sphi %s187, %s187
              $region43: #{transformer_forward.14} parent=39 // loop_header_branch
                %203 = sbr.rel (%p201) target = $region47
              $region44: #{transformer_forward.14} parent=39 // loop_body
                %v207 = vld [vmem:[%s205] sm:%s198]
                %208 = vst [vmem:[%s206] sm:%s198] %v207
                %v209 = vld [vmem:[%s205 + $0x18] sm:%s198]
                %210 = vst [vmem:[%s206 + $0x8] sm:%s198] %v209
                %v211 = vld [vmem:[%s205 + $0x30] sm:%s198]
                %212 = vst [vmem:[%s206 + $0x10] sm:%s198] %v211
                %v213 = vld [vmem:[%s205 + $0x48] sm:%s198]
                %214 = vst [vmem:[%s206 + $0x18] sm:%s198] %v213
                %v215 = vld [vmem:[%s205 + $0x60] sm:%s198]
                %216 = vst [vmem:[%s206 + $0x20] sm:%s198] %v215
                %v217 = vld [vmem:[%s205 + $0x78] sm:%s198]
                %218 = vst [vmem:[%s206 + $0x28] sm:%s198] %v217
                %v219 = vld [vmem:[%s205 + $0x90] sm:%s198]
                %220 = vst [vmem:[%s206 + $0x30] sm:%s198] %v219
                %v221 = vld [vmem:[%s205 + $0xa8] sm:%s198]
                %222 = vst [vmem:[%s206 + $0x38] sm:%s198] %v221
                %v223 = vld [vmem:[%s205 + $0xc0] sm:%s198]
                %224 = vst [vmem:[%s206 + $0x40] sm:%s198] %v223
                %v225 = vld [vmem:[%s205 + $0xd8] sm:%s198]
                %226 = vst [vmem:[%s206 + $0x48] sm:%s198] %v225
                %v227 = vld [vmem:[%s205 + $0xf0] sm:%s198]
                %228 = vst [vmem:[%s206 + $0x50] sm:%s198] %v227
                %v229 = vld [vmem:[%s205 + $0x108] sm:%s198]
                %230 = vst [vmem:[%s206 + $0x58] sm:%s198] %v229
                %v231 = vld [vmem:[%s205 + $0x120] sm:%s198]
                %232 = vst [vmem:[%s206 + $0x60] sm:%s198] %v231
                %v233 = vld [vmem:[%s205 + $0x138] sm:%s198]
                %234 = vst [vmem:[%s206 + $0x68] sm:%s198] %v233
                %v235 = vld [vmem:[%s205 + $0x150] sm:%s198]
                %236 = vst [vmem:[%s206 + $0x70] sm:%s198] %v235
                %v237 = vld [vmem:[%s205 + $0x168] sm:%s198]
                %238 = vst [vmem:[%s206 + $0x78] sm:%s198] %v237
                %v239 = vld [vmem:[%s205 + $0x180] sm:%s198]
                %240 = vst [vmem:[%s206 + $0x80] sm:%s198] %v239
                %v241 = vld [vmem:[%s205 + $0x198] sm:%s198]
                %242 = vst [vmem:[%s206 + $0x88] sm:%s198] %v241
                %v243 = vld [vmem:[%s205 + $0x1b0] sm:%s198]
                %244 = vst [vmem:[%s206 + $0x90] sm:%s198] %v243
                %v245 = vld [vmem:[%s205 + $0x1c8] sm:%s198]
                %246 = vst [vmem:[%s206 + $0x98] sm:%s198] %v245
                %v247 = vld [vmem:[%s205 + $0x1e0] sm:%s198]
                %248 = vst [vmem:[%s206 + $0xa0] sm:%s198] %v247
                %v249 = vld [vmem:[%s205 + $0x1f8] sm:%s198]
                %250 = vst [vmem:[%s206 + $0xa8] sm:%s198] %v249
                %v251 = vld [vmem:[%s205 + $0x210] sm:%s198]
                %252 = vst [vmem:[%s206 + $0xb0] sm:%s198] %v251
                %v253 = vld [vmem:[%s205 + $0x228] sm:%s198]
                %254 = vst [vmem:[%s206 + $0xb8] sm:%s198] %v253
                %v255 = vld [vmem:[%s205 + $0x240] sm:%s198]
                %256 = vst [vmem:[%s206 + $0xc0] sm:%s198] %v255
                %v257 = vld [vmem:[%s205 + $0x258] sm:%s198]
                %258 = vst [vmem:[%s206 + $0xc8] sm:%s198] %v257
                %v259 = vld [vmem:[%s205 + $0x270] sm:%s198]
                %260 = vst [vmem:[%s206 + $0xd0] sm:%s198] %v259
                %v261 = vld [vmem:[%s205 + $0x288] sm:%s198]
                %262 = vst [vmem:[%s206 + $0xd8] sm:%s198] %v261
                %v263 = vld [vmem:[%s205 + $0x2a0] sm:%s198]
                %264 = vst [vmem:[%s206 + $0xe0] sm:%s198] %v263
                %v265 = vld [vmem:[%s205 + $0x2b8] sm:%s198]
                %266 = vst [vmem:[%s206 + $0xe8] sm:%s198] %v265
                %v267 = vld [vmem:[%s205 + $0x2d0] sm:%s198]
                %268 = vst [vmem:[%s206 + $0xf0] sm:%s198] %v267
                %v269 = vld [vmem:[%s205 + $0x2e8] sm:%s198]
                %270 = vst [vmem:[%s206 + $0xf8] sm:%s198] %v269
              $region45: #{transformer_forward.14} parent=39 // loop_footer
                %s204 = sadd.s32 1, %s200
              $region46: #{transformer_forward.14} parent=39 // loop_footer_branch
                %199 = sbr.rel target = $region42
              $region47: #{transformer_forward.14} parent=39 // loop_exit
                _
            $region40: #{transformer_forward.14} parent=31 // pred_fallthru
              _
          $region32: #{transformer_forward.14} parent=27 // pred_fallthru
            _
          %347 = vnop
        $region28: #{transformer_forward.14} parent=23 // pred_fallthru
          _
        // Predicated region
        $region63: #{transformer_forward.14} parent=23 // pred_check
          %p348 = pneg %p115
        $region64: #{transformer_forward.14} parent=23 // pred_check_branch
          %350 = sbr.rel (%p348) target = $region66
        $region65: #{transformer_forward.14} parent=23 // pred_region
          %s351 = sand.u32 %s105, 1
          %s352 = sand.u32 %s105, 1
          %s353 = smul.addr %s352, 256
          %s354 = scalar_lea.vmem [#allocation4], %s353
          %s355 = smul.u32 2, %s18
          %s356 = smul.addr %s355, 4
          %s357 = scalar_lea.vmem %s3, %s356
          // Predicated region
          $region67: #{transformer_forward.14} parent=65 // pred_check
            _
          $region68: #{transformer_forward.14} parent=65 // pred_check_branch
            %359 = sbr.rel (0) target = $region70
          $region69: #{transformer_forward.14} parent=65 // pred_region
            // Predicated region
            $region71: #{transformer_forward.14} parent=69 // pred_check
              _
            $region72: #{transformer_forward.14} parent=69 // pred_check_branch
              %361 = sbr.rel (0) target = $region74
            $region73: #{transformer_forward.14} parent=69 // pred_region
              // Predicated region
              $region86: #{transformer_forward.14} parent=73 // pred_check
                _
              $region87: #{transformer_forward.14} parent=73 // pred_check_branch
                %439 = sbr.rel (0) target = $region89
              $region88: #{transformer_forward.14} parent=73 // pred_region
                loop: start=0, step=1, limit=1
                $region90: #{transformer_forward.14} parent=88 // loop_pre_header
                  _
                $region91: #{transformer_forward.14} parent=88 // loop_header
                  %s441 = sphi 0, %s445
                  %p442 = scmp.ge.s32.totalorder %s441, 1
                  %s446 = sphi %s357, %s357
                  %s447 = sphi %s354, %s354
                $region92: #{transformer_forward.14} parent=88 // loop_header_branch
                  %444 = sbr.rel (%p442) target = $region96
                $region93: #{transformer_forward.14} parent=88 // loop_body
                  %v448 = vld [vmem:[%s446] sm:$0xff]
                  %449 = vst [vmem:[%s447] sm:$0xff] %v448
                  %v450 = vld [vmem:[%s446 + $0x18] sm:$0xff]
                  %451 = vst [vmem:[%s447 + $0x8] sm:$0xff] %v450
                  %v452 = vld [vmem:[%s446 + $0x30] sm:$0xff]
                  %453 = vst [vmem:[%s447 + $0x10] sm:$0xff] %v452
                  %v454 = vld [vmem:[%s446 + $0x48] sm:$0xff]
                  %455 = vst [vmem:[%s447 + $0x18] sm:$0xff] %v454
                  %v456 = vld [vmem:[%s446 + $0x60] sm:$0xff]
                  %457 = vst [vmem:[%s447 + $0x20] sm:$0xff] %v456
                  %v458 = vld [vmem:[%s446 + $0x78] sm:$0xff]
                  %459 = vst [vmem:[%s447 + $0x28] sm:$0xff] %v458
                  %v460 = vld [vmem:[%s446 + $0x90] sm:$0xff]
                  %461 = vst [vmem:[%s447 + $0x30] sm:$0xff] %v460
                  %v462 = vld [vmem:[%s446 + $0xa8] sm:$0xff]
                  %463 = vst [vmem:[%s447 + $0x38] sm:$0xff] %v462
                  %v464 = vld [vmem:[%s446 + $0xc0] sm:$0xff]
                  %465 = vst [vmem:[%s447 + $0x40] sm:$0xff] %v464
                  %v466 = vld [vmem:[%s446 + $0xd8] sm:$0xff]
                  %467 = vst [vmem:[%s447 + $0x48] sm:$0xff] %v466
                  %v468 = vld [vmem:[%s446 + $0xf0] sm:$0xff]
                  %469 = vst [vmem:[%s447 + $0x50] sm:$0xff] %v468
                  %v470 = vld [vmem:[%s446 + $0x108] sm:$0xff]
                  %471 = vst [vmem:[%s447 + $0x58] sm:$0xff] %v470
                  %v472 = vld [vmem:[%s446 + $0x120] sm:$0xff]
                  %473 = vst [vmem:[%s447 + $0x60] sm:$0xff] %v472
                  %v474 = vld [vmem:[%s446 + $0x138] sm:$0xff]
                  %475 = vst [vmem:[%s447 + $0x68] sm:$0xff] %v474
                  %v476 = vld [vmem:[%s446 + $0x150] sm:$0xff]
                  %477 = vst [vmem:[%s447 + $0x70] sm:$0xff] %v476
                  %v478 = vld [vmem:[%s446 + $0x168] sm:$0xff]
                  %479 = vst [vmem:[%s447 + $0x78] sm:$0xff] %v478
                  %v480 = vld [vmem:[%s446 + $0x180] sm:$0xff]
                  %481 = vst [vmem:[%s447 + $0x80] sm:$0xff] %v480
                  %v482 = vld [vmem:[%s446 + $0x198] sm:$0xff]
                  %483 = vst [vmem:[%s447 + $0x88] sm:$0xff] %v482
                  %v484 = vld [vmem:[%s446 + $0x1b0] sm:$0xff]
                  %485 = vst [vmem:[%s447 + $0x90] sm:$0xff] %v484
                  %v486 = vld [vmem:[%s446 + $0x1c8] sm:$0xff]
                  %487 = vst [vmem:[%s447 + $0x98] sm:$0xff] %v486
                  %v488 = vld [vmem:[%s446 + $0x1e0] sm:$0xff]
                  %489 = vst [vmem:[%s447 + $0xa0] sm:$0xff] %v488
                  %v490 = vld [vmem:[%s446 + $0x1f8] sm:$0xff]
                  %491 = vst [vmem:[%s447 + $0xa8] sm:$0xff] %v490
                  %v492 = vld [vmem:[%s446 + $0x210] sm:$0xff]
                  %493 = vst [vmem:[%s447 + $0xb0] sm:$0xff] %v492
                  %v494 = vld [vmem:[%s446 + $0x228] sm:$0xff]
                  %495 = vst [vmem:[%s447 + $0xb8] sm:$0xff] %v494
                  %v496 = vld [vmem:[%s446 + $0x240] sm:$0xff]
                  %497 = vst [vmem:[%s447 + $0xc0] sm:$0xff] %v496
                  %v498 = vld [vmem:[%s446 + $0x258] sm:$0xff]
                  %499 = vst [vmem:[%s447 + $0xc8] sm:$0xff] %v498
                  %v500 = vld [vmem:[%s446 + $0x270] sm:$0xff]
                  %501 = vst [vmem:[%s447 + $0xd0] sm:$0xff] %v500
                  %v502 = vld [vmem:[%s446 + $0x288] sm:$0xff]
                  %503 = vst [vmem:[%s447 + $0xd8] sm:$0xff] %v502
                  %v504 = vld [vmem:[%s446 + $0x2a0] sm:$0xff]
                  %505 = vst [vmem:[%s447 + $0xe0] sm:$0xff] %v504
                  %v506 = vld [vmem:[%s446 + $0x2b8] sm:$0xff]
                  %507 = vst [vmem:[%s447 + $0xe8] sm:$0xff] %v506
                  %v508 = vld [vmem:[%s446 + $0x2d0] sm:$0xff]
                  %509 = vst [vmem:[%s447 + $0xf0] sm:$0xff] %v508
                  %v510 = vld [vmem:[%s446 + $0x2e8] sm:$0xff]
                  %511 = vst [vmem:[%s447 + $0xf8] sm:$0xff] %v510
                $region94: #{transformer_forward.14} parent=88 // loop_footer
                  %s445 = sadd.s32 1, %s441
                $region95: #{transformer_forward.14} parent=88 // loop_footer_branch
                  %440 = sbr.rel target = $region91
                $region96: #{transformer_forward.14} parent=88 // loop_exit
                  _
              $region89: #{transformer_forward.14} parent=73 // pred_fallthru
                _
              // Predicated region
              $region97: #{transformer_forward.14} parent=73 // pred_check
                _
              $region98: #{transformer_forward.14} parent=73 // pred_check_branch
                %513 = sbr.rel target = $region100
              $region99: #{transformer_forward.14} parent=73 // pred_region
                _
              $region100: #{transformer_forward.14} parent=73 // pred_fallthru
                _
            $region74: #{transformer_forward.14} parent=69 // pred_fallthru
              _
            // Predicated region
            $region75: #{transformer_forward.14} parent=69 // pred_check
              _
            $region76: #{transformer_forward.14} parent=69 // pred_check_branch
              %363 = sbr.rel target = $region78
            $region77: #{transformer_forward.14} parent=69 // pred_region
              %s365 = ssub.s32 256, 1
              loop: start=0, step=1, limit=1
              $region79: #{transformer_forward.14} parent=77 // loop_pre_header
                _
              $region80: #{transformer_forward.14} parent=77 // loop_header
                %s367 = sphi 0, %s371
                %p368 = scmp.ge.s32.totalorder %s367, 1
                %s372 = sphi %s357, %s357
                %s373 = sphi %s354, %s354
              $region81: #{transformer_forward.14} parent=77 // loop_header_branch
                %370 = sbr.rel (%p368) target = $region85
              $region82: #{transformer_forward.14} parent=77 // loop_body
                %v374 = vld [vmem:[%s372] sm:%s365]
                %375 = vst [vmem:[%s373] sm:%s365] %v374
                %v376 = vld [vmem:[%s372 + $0x18] sm:%s365]
                %377 = vst [vmem:[%s373 + $0x8] sm:%s365] %v376
                %v378 = vld [vmem:[%s372 + $0x30] sm:%s365]
                %379 = vst [vmem:[%s373 + $0x10] sm:%s365] %v378
                %v380 = vld [vmem:[%s372 + $0x48] sm:%s365]
                %381 = vst [vmem:[%s373 + $0x18] sm:%s365] %v380
                %v382 = vld [vmem:[%s372 + $0x60] sm:%s365]
                %383 = vst [vmem:[%s373 + $0x20] sm:%s365] %v382
                %v384 = vld [vmem:[%s372 + $0x78] sm:%s365]
                %385 = vst [vmem:[%s373 + $0x28] sm:%s365] %v384
                %v386 = vld [vmem:[%s372 + $0x90] sm:%s365]
                %387 = vst [vmem:[%s373 + $0x30] sm:%s365] %v386
                %v388 = vld [vmem:[%s372 + $0xa8] sm:%s365]
                %389 = vst [vmem:[%s373 + $0x38] sm:%s365] %v388
                %v390 = vld [vmem:[%s372 + $0xc0] sm:%s365]
                %391 = vst [vmem:[%s373 + $0x40] sm:%s365] %v390
                %v392 = vld [vmem:[%s372 + $0xd8] sm:%s365]
                %393 = vst [vmem:[%s373 + $0x48] sm:%s365] %v392
                %v394 = vld [vmem:[%s372 + $0xf0] sm:%s365]
                %395 = vst [vmem:[%s373 + $0x50] sm:%s365] %v394
                %v396 = vld [vmem:[%s372 + $0x108] sm:%s365]
                %397 = vst [vmem:[%s373 + $0x58] sm:%s365] %v396
                %v398 = vld [vmem:[%s372 + $0x120] sm:%s365]
                %399 = vst [vmem:[%s373 + $0x60] sm:%s365] %v398
                %v400 = vld [vmem:[%s372 + $0x138] sm:%s365]
                %401 = vst [vmem:[%s373 + $0x68] sm:%s365] %v400
                %v402 = vld [vmem:[%s372 + $0x150] sm:%s365]
                %403 = vst [vmem:[%s373 + $0x70] sm:%s365] %v402
                %v404 = vld [vmem:[%s372 + $0x168] sm:%s365]
                %405 = vst [vmem:[%s373 + $0x78] sm:%s365] %v404
                %v406 = vld [vmem:[%s372 + $0x180] sm:%s365]
                %407 = vst [vmem:[%s373 + $0x80] sm:%s365] %v406
                %v408 = vld [vmem:[%s372 + $0x198] sm:%s365]
                %409 = vst [vmem:[%s373 + $0x88] sm:%s365] %v408
                %v410 = vld [vmem:[%s372 + $0x1b0] sm:%s365]
                %411 = vst [vmem:[%s373 + $0x90] sm:%s365] %v410
                %v412 = vld [vmem:[%s372 + $0x1c8] sm:%s365]
                %413 = vst [vmem:[%s373 + $0x98] sm:%s365] %v412
                %v414 = vld [vmem:[%s372 + $0x1e0] sm:%s365]
                %415 = vst [vmem:[%s373 + $0xa0] sm:%s365] %v414
                %v416 = vld [vmem:[%s372 + $0x1f8] sm:%s365]
                %417 = vst [vmem:[%s373 + $0xa8] sm:%s365] %v416
                %v418 = vld [vmem:[%s372 + $0x210] sm:%s365]
                %419 = vst [vmem:[%s373 + $0xb0] sm:%s365] %v418
                %v420 = vld [vmem:[%s372 + $0x228] sm:%s365]
                %421 = vst [vmem:[%s373 + $0xb8] sm:%s365] %v420
                %v422 = vld [vmem:[%s372 + $0x240] sm:%s365]
                %423 = vst [vmem:[%s373 + $0xc0] sm:%s365] %v422
                %v424 = vld [vmem:[%s372 + $0x258] sm:%s365]
                %425 = vst [vmem:[%s373 + $0xc8] sm:%s365] %v424
                %v426 = vld [vmem:[%s372 + $0x270] sm:%s365]
                %427 = vst [vmem:[%s373 + $0xd0] sm:%s365] %v426
                %v428 = vld [vmem:[%s372 + $0x288] sm:%s365]
                %429 = vst [vmem:[%s373 + $0xd8] sm:%s365] %v428
                %v430 = vld [vmem:[%s372 + $0x2a0] sm:%s365]
                %431 = vst [vmem:[%s373 + $0xe0] sm:%s365] %v430
                %v432 = vld [vmem:[%s372 + $0x2b8] sm:%s365]
                %433 = vst [vmem:[%s373 + $0xe8] sm:%s365] %v432
                %v434 = vld [vmem:[%s372 + $0x2d0] sm:%s365]
                %435 = vst [vmem:[%s373 + $0xf0] sm:%s365] %v434
                %v436 = vld [vmem:[%s372 + $0x2e8] sm:%s365]
                %437 = vst [vmem:[%s373 + $0xf8] sm:%s365] %v436
              $region83: #{transformer_forward.14} parent=77 // loop_footer
                %s371 = sadd.s32 1, %s367
              $region84: #{transformer_forward.14} parent=77 // loop_footer_branch
                %366 = sbr.rel target = $region80
              $region85: #{transformer_forward.14} parent=77 // loop_exit
                _
            $region78: #{transformer_forward.14} parent=69 // pred_fallthru
              _
          $region70: #{transformer_forward.14} parent=65 // pred_fallthru
            _
          %514 = vnop
        $region66: #{transformer_forward.14} parent=23 // pred_fallthru
          _
      $region24: #{transformer_forward.14} parent=5 // pred_fallthru
        _
      %p515 = scmp.le.s32.totalorder 1, %s10
      %p516 = scmp.lt.s32.totalorder %s10, 4
      %p517 = pnand %p515, %p516
      %p518 = pneg %p517
      // Predicated region
      $region101: #{transformer_forward.14} parent=5 // pred_check
        _
      $region102: #{transformer_forward.14} parent=5 // pred_check_branch
        %520 = sbr.rel (%p517) target = $region104
      $region103: #{transformer_forward.14} parent=5 // pred_region
        %s521 = ssub.s32 %s10, 1
        %s522 = sand.u32 %s82, 1
        %s523 = sand.u32 %s82, 1
        %s524 = smul.addr %s523, 256
        %s525 = scalar_lea.vmem [#allocation3], %s524
        // Predicated region
        $region105: #{transformer_forward.14} parent=103 // pred_check
          %p526 = pneg %p95
        $region106: #{transformer_forward.14} parent=103 // pred_check_branch
          %528 = sbr.rel (%p526) target = $region108
        $region107: #{transformer_forward.14} parent=103 // pred_region
          _
        $region108: #{transformer_forward.14} parent=103 // pred_fallthru
          _
        %s529 = sand.u32 %s108, 1
        %s530 = sand.u32 %s108, 1
        %s531 = smul.addr %s530, 256
        %s532 = scalar_lea.vmem [#allocation4], %s531
        // Predicated region
        $region109: #{transformer_forward.14} parent=103 // pred_check
          %p533 = pneg %p121
        $region110: #{transformer_forward.14} parent=103 // pred_check_branch
          %535 = sbr.rel (%p533) target = $region112
        $region111: #{transformer_forward.14} parent=103 // pred_region
          _
        $region112: #{transformer_forward.14} parent=103 // pred_fallthru
          _
        %s536 = smul.u32 2, %s19
        %p537 = scmp.lt.s32.totalorder %s536, 1
        %s538 = scalar_select %p537, %s536, 1
        %s539 = smul.addr %s538, 2
        %s540 = smul.addr %s539, 4
        %s541 = scalar_lea.vmem %s0, %s540
        %p542 = pneg %p48
        %p543 = pneg %p45
        %p544 = pneg %p69
        %p545 = pneg %p66
        %s546 = sand.u32 %s82, 1
        %s547 = sand.u32 %s82, 1
        %s548 = smul.addr %s547, 256
        %s549 = scalar_lea.vmem [#allocation3], %s548
        %p550 = pneg %p95
        %p551 = pneg %p92
        %s552 = sand.u32 %s108, 1
        %s553 = sand.u32 %s108, 1
        %s554 = smul.addr %s553, 256
        %s555 = scalar_lea.vmem [#allocation4], %s554
        %p556 = pneg %p121
        %p557 = pneg %p118
        %p558 = pneg %p149
        %p559 = pneg %p146
        %s560 = sand.u32 %s136, 1
        %s561 = sand.u32 %s136, 1
        %s562 = smul.addr %s561, 16
        %s563 = scalar_lea.vmem [#allocation5], %s562
        %s564 = smul.u32 2, %s19
        %p565 = scmp.lt.s32.totalorder %s564, 1
        %s566 = scalar_select %p565, %s564, 1
        %s567 = smul.addr %s566, 2
        %s568 = smul.addr %s567, 4
        %s569 = scalar_lea.vmem %s0, %s568
        %s570 = smul.u32 2, %s19
        %s571 = smul.u32 2, %s20
        %s572 = smul.u32 2, %s20
        %s573 = smul.u32 2, %s19
        %s574 = smul.u32 2, %s20
        %p575 = scmp.eq.s32.totalorder %s20, 0
        // Predicated region
        $region113: #{transformer_forward.14} parent=103 // pred_check
          %p576 = pneg %p575
        $region114: #{transformer_forward.14} parent=103 // pred_check_branch
          %578 = sbr.rel (%p576) target = $region116
        $region115: #{transformer_forward.14} parent=103 // pred_region
          %v579 = vld [vmem:[%s569] sm:$0xff]
          %v580 = vld [vmem:[%s569 + $0x8] sm:$0xff]
          %v581 = vunpack.c.l.bf16 %v579
          %v582 = vunpack.c.h.bf16 %v579
          %v583 = vunpack.c.l.bf16 %v580
          %v584 = vunpack.c.h.bf16 %v580
          %v585 = vmul.f32 %v581, %v581
          %v586 = vmul.f32 %v582, %v582
          %v587 = vmul.f32 %v583, %v583
          %v588 = vmul.f32 %v584, %v584
          %v589 = vadd.f32 %v585, %v586
          %590 = vadd.xlane.f32.xlu0 %v589
          %v591 = vpop.xlane.xlu0 %590
          %v592 = vadd.f32 %v587, %v588
          %593 = vadd.xlane.f32.xlu0 %v592
          %v594 = vpop.xlane.xlu0 %593
          %v595 = vrcp.pop 256.0
          %v596 = vmul.f32 %v591, %v595
          %v597 = vmul.f32 %v594, %v595
          %v598 = vadd.f32 %v596, 1e-06
          %v599 = vadd.f32 %v597, 1e-06
          %v600 = vrsqrt.pop %v598
          %v601 = vrsqrt.pop %v599
          %v602 = vmul.f32 %v581, %v600
          %v603 = vmul.f32 %v582, %v600
          %v604 = vmul.f32 %v583, %v601
          %v605 = vmul.f32 %v584, %v601
          %v606 = vpack.c.bf16 %v604, %v602
          %v607 = vpack.c.bf16 %v605, %v603
          %v608 = vld [vmem:[%s1] sm:$0x3]
          %v611 = vunpack.c.l.s4 1966171168
          %v612 = vunpack.c.0.s8 %v611
          %v613 = vlaneseq
          %v614 = vshrl.u32 %v613, 7
          %v615 = vsub.s32 %v612, %v614
          %v616 = vrot.slane %v608, %v615
          %v617 = vcombine.high %v616, %v616
          %v619 = vunpack.c.l.s4 1966171168
          %v620 = vunpack.c.0.s8 %v619
          %v621 = vlaneseq
          %v622 = vshrl.u32 %v621, 7
          %v623 = vsub.s32 %v620, %v622
          %v624 = vrot.slane %v616, %v623
          %v626 = vunpack.c.l.s4 1966171168
          %v627 = vunpack.c.0.s8 %v626
          %v628 = vlaneseq
          %v629 = vshrl.u32 %v628, 7
          %v630 = vsub.s32 %v627, %v629
          %v631 = vrot.slane %v617, %v630
          %v633 = vpack.i.b16 %v624, %v624
          %v635 = vlaneseq
          %v636 = vshrl.u32 %v635, 7
          %v637 = vsub.s32 0, %v636
          %v638 = vrot.slane %v633, %v637
          %v640 = vpack.i.b16 %v631, %v631
          %v642 = vlaneseq
          %v643 = vshrl.u32 %v642, 7
          %v644 = vsub.s32 0, %v643
          %v645 = vrot.slane %v640, %v644
          %v646 = vmul.bf16 %v606, %v638
          %v647 = vmul.bf16 %v607, %v645
          %v650 = vunpack.c.l.b16 %v646
          %v651 = vunpack.c.l.b16 %v647
          %v652 = vunpack.c.h.b16 %v646
          %v653 = vunpack.c.h.b16 %v647
          %v654 = vpack.c.b16 %v651, %v650
          %v655 = vpack.c.b16 %v653, %v652
          %658 = vst [vmem:[#allocation2] sm:$0xff] %v654
          %659 = vst [vmem:[#allocation2 + $0x8] sm:$0xff] %v655
        $region116: #{transformer_forward.14} parent=103 // pred_fallthru
          _
        %v660 = vld [vmem:[#allocation2] sm:$0xff]
        %v661 = vld [vmem:[#allocation2 + $0x8] sm:$0xff]
        %v662 = vld [vmem:[%s525] sm:$0xff]
        %v663 = vld [vmem:[%s525 + $0x8] sm:$0xff]
        %v664 = vld [vmem:[%s525 + $0x10] sm:$0xff]
        %v665 = vld [vmem:[%s525 + $0x18] sm:$0xff]
        %v666 = vld [vmem:[%s525 + $0x20] sm:$0xff]
        %v667 = vld [vmem:[%s525 + $0x28] sm:$0xff]
        %v668 = vld [vmem:[%s525 + $0x30] sm:$0xff]
        %v669 = vld [vmem:[%s525 + $0x38] sm:$0xff]
        %v670 = vld [vmem:[%s525 + $0x40] sm:$0xff]
        %v671 = vld [vmem:[%s525 + $0x48] sm:$0xff]
        %v672 = vld [vmem:[%s525 + $0x50] sm:$0xff]
        %v673 = vld [vmem:[%s525 + $0x58] sm:$0xff]
        %v674 = vld [vmem:[%s525 + $0x60] sm:$0xff]
        %v675 = vld [vmem:[%s525 + $0x68] sm:$0xff]
        %v676 = vld [vmem:[%s525 + $0x70] sm:$0xff]
        %v677 = vld [vmem:[%s525 + $0x78] sm:$0xff]
        %v678 = vld [vmem:[%s525 + $0x80] sm:$0xff]
        %v679 = vld [vmem:[%s525 + $0x88] sm:$0xff]
        %v680 = vld [vmem:[%s525 + $0x90] sm:$0xff]
        %v681 = vld [vmem:[%s525 + $0x98] sm:$0xff]
        %v682 = vld [vmem:[%s525 + $0xa0] sm:$0xff]
        %v683 = vld [vmem:[%s525 + $0xa8] sm:$0xff]
        %v684 = vld [vmem:[%s525 + $0xb0] sm:$0xff]
        %v685 = vld [vmem:[%s525 + $0xb8] sm:$0xff]
        %v686 = vld [vmem:[%s525 + $0xc0] sm:$0xff]
        %v687 = vld [vmem:[%s525 + $0xc8] sm:$0xff]
        %v688 = vld [vmem:[%s525 + $0xd0] sm:$0xff]
        %v689 = vld [vmem:[%s525 + $0xd8] sm:$0xff]
        %v690 = vld [vmem:[%s525 + $0xe0] sm:$0xff]
        %v691 = vld [vmem:[%s525 + $0xe8] sm:$0xff]
        %v692 = vld [vmem:[%s525 + $0xf0] sm:$0xff]
        %v693 = vld [vmem:[%s525 + $0xf8] sm:$0xff]
        %v696 = vunpack.c.l.b16 %v660
        %v697 = vunpack.c.h.b16 %v660
        %v698 = vunpack.c.l.b16 %v661
        %v699 = vunpack.c.h.b16 %v661
        %v700 = vpack.c.b16 %v698, %v696
        %v701 = vpack.c.b16 %v699, %v697
        %v736 = vunpack.c.l.b16 %v662
        %v737 = vunpack.c.h.b16 %v662
        %v738 = vunpack.c.l.b16 %v663
        %v739 = vunpack.c.h.b16 %v663
        %v740 = vunpack.c.l.b16 %v664
        %v741 = vunpack.c.h.b16 %v664
        %v742 = vunpack.c.l.b16 %v665
        %v743 = vunpack.c.h.b16 %v665
        %v744 = vunpack.c.l.b16 %v666
        %v745 = vunpack.c.h.b16 %v666
        %v746 = vunpack.c.l.b16 %v667
        %v747 = vunpack.c.h.b16 %v667
        %v748 = vunpack.c.l.b16 %v668
        %v749 = vunpack.c.h.b16 %v668
        %v750 = vunpack.c.l.b16 %v669
        %v751 = vunpack.c.h.b16 %v669
        %v752 = vunpack.c.l.b16 %v670
        %v753 = vunpack.c.h.b16 %v670
        %v754 = vunpack.c.l.b16 %v671
        %v755 = vunpack.c.h.b16 %v671
        %v756 = vunpack.c.l.b16 %v672
        %v757 = vunpack.c.h.b16 %v672
        %v758 = vunpack.c.l.b16 %v673
        %v759 = vunpack.c.h.b16 %v673
        %v760 = vunpack.c.l.b16 %v674
        %v761 = vunpack.c.h.b16 %v674
        %v762 = vunpack.c.l.b16 %v675
        %v763 = vunpack.c.h.b16 %v675
        %v764 = vunpack.c.l.b16 %v676
        %v765 = vunpack.c.h.b16 %v676
        %v766 = vunpack.c.l.b16 %v677
        %v767 = vunpack.c.h.b16 %v677
        %v768 = vunpack.c.l.b16 %v678
        %v769 = vunpack.c.h.b16 %v678
        %v770 = vunpack.c.l.b16 %v679
        %v771 = vunpack.c.h.b16 %v679
        %v772 = vunpack.c.l.b16 %v680
        %v773 = vunpack.c.h.b16 %v680
        %v774 = vunpack.c.l.b16 %v681
        %v775 = vunpack.c.h.b16 %v681
        %v776 = vunpack.c.l.b16 %v682
        %v777 = vunpack.c.h.b16 %v682
        %v778 = vunpack.c.l.b16 %v683
        %v779 = vunpack.c.h.b16 %v683
        %v780 = vunpack.c.l.b16 %v684
        %v781 = vunpack.c.h.b16 %v684
        %v782 = vunpack.c.l.b16 %v685
        %v783 = vunpack.c.h.b16 %v685
        %v784 = vunpack.c.l.b16 %v686
        %v785 = vunpack.c.h.b16 %v686
        %v786 = vunpack.c.l.b16 %v687
        %v787 = vunpack.c.h.b16 %v687
        %v788 = vunpack.c.l.b16 %v688
        %v789 = vunpack.c.h.b16 %v688
        %v790 = vunpack.c.l.b16 %v689
        %v791 = vunpack.c.h.b16 %v689
        %v792 = vunpack.c.l.b16 %v690
        %v793 = vunpack.c.h.b16 %v690
        %v794 = vunpack.c.l.b16 %v691
        %v795 = vunpack.c.h.b16 %v691
        %v796 = vunpack.c.l.b16 %v692
        %v797 = vunpack.c.h.b16 %v692
        %v798 = vunpack.c.l.b16 %v693
        %v799 = vunpack.c.h.b16 %v693
        %v800 = vpack.c.b16 %v738, %v736
        %v801 = vpack.c.b16 %v739, %v737
        %v802 = vpack.c.b16 %v742, %v740
        %v803 = vpack.c.b16 %v743, %v741
        %v804 = vpack.c.b16 %v746, %v744
        %v805 = vpack.c.b16 %v747, %v745
        %v806 = vpack.c.b16 %v750, %v748
        %v807 = vpack.c.b16 %v751, %v749
        %v808 = vpack.c.b16 %v754, %v752
        %v809 = vpack.c.b16 %v755, %v753
        %v810 = vpack.c.b16 %v758, %v756
        %v811 = vpack.c.b16 %v759, %v757
        %v812 = vpack.c.b16 %v762, %v760
        %v813 = vpack.c.b16 %v763, %v761
        %v814 = vpack.c.b16 %v766, %v764
        %v815 = vpack.c.b16 %v767, %v765
        %v816 = vpack.c.b16 %v770, %v768
        %v817 = vpack.c.b16 %v771, %v769
        %v818 = vpack.c.b16 %v774, %v772
        %v819 = vpack.c.b16 %v775, %v773
        %v820 = vpack.c.b16 %v778, %v776
        %v821 = vpack.c.b16 %v779, %v777
        %v822 = vpack.c.b16 %v782, %v780
        %v823 = vpack.c.b16 %v783, %v781
        %v824 = vpack.c.b16 %v786, %v784
        %v825 = vpack.c.b16 %v787, %v785
        %v826 = vpack.c.b16 %v790, %v788
        %v827 = vpack.c.b16 %v791, %v789
        %v828 = vpack.c.b16 %v794, %v792
        %v829 = vpack.c.b16 %v795, %v793
        %v830 = vpack.c.b16 %v798, %v796
        %v831 = vpack.c.b16 %v799, %v797
        %864 = vmatprep.subr.bf16.mxu0 %v815
        %865 = vmatpush1.bf16.msra.mxu0 %v814
        %866 = vmatprep.subr.bf16.mxu0 %v813
        %867 = vmatpush1.bf16.msra.mxu0 %v812
        %868 = vmatprep.subr.bf16.mxu0 %v811
        %869 = vmatpush1.bf16.msra.mxu0 %v810
        %870 = vmatprep.subr.bf16.mxu0 %v809
        %871 = vmatpush1.bf16.msra.mxu0 %v808
        %872 = vmatprep.subr.bf16.mxu0 %v807
        %873 = vmatpush1.bf16.msra.mxu0 %v806
        %874 = vmatprep.subr.bf16.mxu0 %v805
        %875 = vmatpush1.bf16.msra.mxu0 %v804
        %876 = vmatprep.subr.bf16.mxu0 %v803
        %877 = vmatpush1.bf16.msra.mxu0 %v802
        %878 = vmatprep.subr.bf16.mxu0 %v801
        %879 = vmatpush1.bf16.msra.mxu0 %v800
        %880 = vmatprep.subr.bf16.mxu0 %v831
        %881 = vmatpush2.bf16.msra.mxu0 %v830
        %882 = vmatprep.subr.bf16.mxu0 %v829
        %883 = vmatpush2.bf16.msra.mxu0 %v828
        %884 = vmatprep.subr.bf16.mxu0 %v827
        %885 = vmatpush2.bf16.msra.mxu0 %v826
        %886 = vmatprep.subr.bf16.mxu0 %v825
        %887 = vmatpush2.bf16.msra.mxu0 %v824
        %888 = vmatprep.subr.bf16.mxu0 %v823
        %889 = vmatpush2.bf16.msra.mxu0 %v822
        %890 = vmatprep.subr.bf16.mxu0 %v821
        %891 = vmatpush2.bf16.msra.mxu0 %v820
        %892 = vmatprep.subr.bf16.mxu0 %v819
        %893 = vmatpush2.bf16.msra.mxu0 %v818
        %894 = vmatprep.subr.bf16.mxu0 %v817
        %895 = vmatpush2.bf16.msra.mxu0 %v816
        %896 = vmatprep.mubr.bf16.mxu0 %v701
        %897 = vmatmul.mubr.bf16.gmra.mxu0 %v700
        %v898 = vpop.f32.mrf.mxu0
        %v899 = vadd.f32 0.0, %v898
        %v900 = vpop.f32.mrf.mxu0
        %v901 = vadd.f32 0.0, %v900
        %v902 = vpop.f32.mrf.mxu0
        %v903 = vadd.f32 0.0, %v902
        %v904 = vpop.f32.mrf.mxu0
        %v905 = vadd.f32 0.0, %v904
        %906 = vdwg.mxu0
        %v907 = vld [vmem:[%s532] sm:$0xff]
        %v908 = vld [vmem:[%s532 + $0x8] sm:$0xff]
        %v909 = vld [vmem:[%s532 + $0x10] sm:$0xff]
        %v910 = vld [vmem:[%s532 + $0x18] sm:$0xff]
        %v911 = vld [vmem:[%s532 + $0x20] sm:$0xff]
        %v912 = vld [vmem:[%s532 + $0x28] sm:$0xff]
        %v913 = vld [vmem:[%s532 + $0x30] sm:$0xff]
        %v914 = vld [vmem:[%s532 + $0x38] sm:$0xff]
        %v915 = vld [vmem:[%s532 + $0x40] sm:$0xff]
        %v916 = vld [vmem:[%s532 + $0x48] sm:$0xff]
        %v917 = vld [vmem:[%s532 + $0x50] sm:$0xff]
        %v918 = vld [vmem:[%s532 + $0x58] sm:$0xff]
        %v919 = vld [vmem:[%s532 + $0x60] sm:$0xff]
        %v920 = vld [vmem:[%s532 + $0x68] sm:$0xff]
        %v921 = vld [vmem:[%s532 + $0x70] sm:$0xff]
        %v922 = vld [vmem:[%s532 + $0x78] sm:$0xff]
        %v923 = vld [vmem:[%s532 + $0x80] sm:$0xff]
        %v924 = vld [vmem:[%s532 + $0x88] sm:$0xff]
        %v925 = vld [vmem:[%s532 + $0x90] sm:$0xff]
        %v926 = vld [vmem:[%s532 + $0x98] sm:$0xff]
        %v927 = vld [vmem:[%s532 + $0xa0] sm:$0xff]
        %v928 = vld [vmem:[%s532 + $0xa8] sm:$0xff]
        %v929 = vld [vmem:[%s532 + $0xb0] sm:$0xff]
        %v930 = vld [vmem:[%s532 + $0xb8] sm:$0xff]
        %v931 = vld [vmem:[%s532 + $0xc0] sm:$0xff]
        %v932 = vld [vmem:[%s532 + $0xc8] sm:$0xff]
        %v933 = vld [vmem:[%s532 + $0xd0] sm:$0xff]
        %v934 = vld [vmem:[%s532 + $0xd8] sm:$0xff]
        %v935 = vld [vmem:[%s532 + $0xe0] sm:$0xff]
        %v936 = vld [vmem:[%s532 + $0xe8] sm:$0xff]
        %v937 = vld [vmem:[%s532 + $0xf0] sm:$0xff]
        %v938 = vld [vmem:[%s532 + $0xf8] sm:$0xff]
        %v971 = vunpack.c.l.b16 %v907
        %v972 = vunpack.c.h.b16 %v907
        %v973 = vunpack.c.l.b16 %v908
        %v974 = vunpack.c.h.b16 %v908
        %v975 = vunpack.c.l.b16 %v909
        %v976 = vunpack.c.h.b16 %v909
        %v977 = vunpack.c.l.b16 %v910
        %v978 = vunpack.c.h.b16 %v910
        %v979 = vunpack.c.l.b16 %v911
        %v980 = vunpack.c.h.b16 %v911
        %v981 = vunpack.c.l.b16 %v912
        %v982 = vunpack.c.h.b16 %v912
        %v983 = vunpack.c.l.b16 %v913
        %v984 = vunpack.c.h.b16 %v913
        %v985 = vunpack.c.l.b16 %v914
        %v986 = vunpack.c.h.b16 %v914
        %v987 = vunpack.c.l.b16 %v915
        %v988 = vunpack.c.h.b16 %v915
        %v989 = vunpack.c.l.b16 %v916
        %v990 = vunpack.c.h.b16 %v916
        %v991 = vunpack.c.l.b16 %v917
        %v992 = vunpack.c.h.b16 %v917
        %v993 = vunpack.c.l.b16 %v918
        %v994 = vunpack.c.h.b16 %v918
        %v995 = vunpack.c.l.b16 %v919
        %v996 = vunpack.c.h.b16 %v919
        %v997 = vunpack.c.l.b16 %v920
        %v998 = vunpack.c.h.b16 %v920
        %v999 = vunpack.c.l.b16 %v921
        %v1000 = vunpack.c.h.b16 %v921
        %v1001 = vunpack.c.l.b16 %v922
        %v1002 = vunpack.c.h.b16 %v922
        %v1003 = vunpack.c.l.b16 %v923
        %v1004 = vunpack.c.h.b16 %v923
        %v1005 = vunpack.c.l.b16 %v924
        %v1006 = vunpack.c.h.b16 %v924
        %v1007 = vunpack.c.l.b16 %v925
        %v1008 = vunpack.c.h.b16 %v925
        %v1009 = vunpack.c.l.b16 %v926
        %v1010 = vunpack.c.h.b16 %v926
        %v1011 = vunpack.c.l.b16 %v927
        %v1012 = vunpack.c.h.b16 %v927
        %v1013 = vunpack.c.l.b16 %v928
        %v1014 = vunpack.c.h.b16 %v928
        %v1015 = vunpack.c.l.b16 %v929
        %v1016 = vunpack.c.h.b16 %v929
        %v1017 = vunpack.c.l.b16 %v930
        %v1018 = vunpack.c.h.b16 %v930
        %v1019 = vunpack.c.l.b16 %v931
        %v1020 = vunpack.c.h.b16 %v931
        %v1021 = vunpack.c.l.b16 %v932
        %v1022 = vunpack.c.h.b16 %v932
        %v1023 = vunpack.c.l.b16 %v933
        %v1024 = vunpack.c.h.b16 %v933
        %v1025 = vunpack.c.l.b16 %v934
        %v1026 = vunpack.c.h.b16 %v934
        %v1027 = vunpack.c.l.b16 %v935
        %v1028 = vunpack.c.h.b16 %v935
        %v1029 = vunpack.c.l.b16 %v936
        %v1030 = vunpack.c.h.b16 %v936
        %v1031 = vunpack.c.l.b16 %v937
        %v1032 = vunpack.c.h.b16 %v937
        %v1033 = vunpack.c.l.b16 %v938
        %v1034 = vunpack.c.h.b16 %v938
        %v1035 = vpack.c.b16 %v973, %v971
        %v1036 = vpack.c.b16 %v974, %v972
        %v1037 = vpack.c.b16 %v977, %v975
        %v1038 = vpack.c.b16 %v978, %v976
        %v1039 = vpack.c.b16 %v981, %v979
        %v1040 = vpack.c.b16 %v982, %v980
        %v1041 = vpack.c.b16 %v985, %v983
        %v1042 = vpack.c.b16 %v986, %v984
        %v1043 = vpack.c.b16 %v989, %v987
        %v1044 = vpack.c.b16 %v990, %v988
        %v1045 = vpack.c.b16 %v993, %v991
        %v1046 = vpack.c.b16 %v994, %v992
        %v1047 = vpack.c.b16 %v997, %v995
        %v1048 = vpack.c.b16 %v998, %v996
        %v1049 = vpack.c.b16 %v1001, %v999
        %v1050 = vpack.c.b16 %v1002, %v1000
        %v1051 = vpack.c.b16 %v1005, %v1003
        %v1052 = vpack.c.b16 %v1006, %v1004
        %v1053 = vpack.c.b16 %v1009, %v1007
        %v1054 = vpack.c.b16 %v1010, %v1008
        %v1055 = vpack.c.b16 %v1013, %v1011
        %v1056 = vpack.c.b16 %v1014, %v1012
        %v1057 = vpack.c.b16 %v1017, %v1015
        %v1058 = vpack.c.b16 %v1018, %v1016
        %v1059 = vpack.c.b16 %v1021, %v1019
        %v1060 = vpack.c.b16 %v1022, %v1020
        %v1061 = vpack.c.b16 %v1025, %v1023
        %v1062 = vpack.c.b16 %v1026, %v1024
        %v1063 = vpack.c.b16 %v1029, %v1027
        %v1064 = vpack.c.b16 %v1030, %v1028
        %v1065 = vpack.c.b16 %v1033, %v1031
        %v1066 = vpack.c.b16 %v1034, %v1032
        %1099 = vmatprep.subr.bf16.mxu0 %v1050
        %1100 = vmatpush1.bf16.msra.mxu0 %v1049
        %1101 = vmatprep.subr.bf16.mxu0 %v1048
        %1102 = vmatpush1.bf16.msra.mxu0 %v1047
        %1103 = vmatprep.subr.bf16.mxu0 %v1046
        %1104 = vmatpush1.bf16.msra.mxu0 %v1045
        %1105 = vmatprep.subr.bf16.mxu0 %v1044
        %1106 = vmatpush1.bf16.msra.mxu0 %v1043
        %1107 = vmatprep.subr.bf16.mxu0 %v1042
        %1108 = vmatpush1.bf16.msra.mxu0 %v1041
        %1109 = vmatprep.subr.bf16.mxu0 %v1040
        %1110 = vmatpush1.bf16.msra.mxu0 %v1039
        %1111 = vmatprep.subr.bf16.mxu0 %v1038
        %1112 = vmatpush1.bf16.msra.mxu0 %v1037
        %1113 = vmatprep.subr.bf16.mxu0 %v1036
        %1114 = vmatpush1.bf16.msra.mxu0 %v1035
        %1115 = vmatprep.subr.bf16.mxu0 %v1066
        %1116 = vmatpush2.bf16.msra.mxu0 %v1065
        %1117 = vmatprep.subr.bf16.mxu0 %v1064
        %1118 = vmatpush2.bf16.msra.mxu0 %v1063
        %1119 = vmatprep.subr.bf16.mxu0 %v1062
        %1120 = vmatpush2.bf16.msra.mxu0 %v1061
        %1121 = vmatprep.subr.bf16.mxu0 %v1060
        %1122 = vmatpush2.bf16.msra.mxu0 %v1059
        %1123 = vmatprep.subr.bf16.mxu0 %v1058
        %1124 = vmatpush2.bf16.msra.mxu0 %v1057
        %1125 = vmatprep.subr.bf16.mxu0 %v1056
        %1126 = vmatpush2.bf16.msra.mxu0 %v1055
        %1127 = vmatprep.subr.bf16.mxu0 %v1054
        %1128 = vmatpush2.bf16.msra.mxu0 %v1053
        %1129 = vmatprep.subr.bf16.mxu0 %v1052
        %1130 = vmatpush2.bf16.msra.mxu0 %v1051
        %1131 = vmatprep.mubr.bf16.mxu0 %v701
        %1132 = vmatmul.mubr.bf16.gmra.mxu0 %v700
        %v1133 = vpop.f32.mrf.mxu0
        %v1134 = vadd.f32 0.0, %v1133
        %v1135 = vpop.f32.mrf.mxu0
        %v1136 = vadd.f32 0.0, %v1135
        %v1137 = vpop.f32.mrf.mxu0
        %v1138 = vadd.f32 0.0, %v1137
        %v1139 = vpop.f32.mrf.mxu0
        %v1140 = vadd.f32 0.0, %v1139
        %1141 = vdwg.mxu0
        %v1142 = vxor.u32 %v899, 2147483648
        %v1143 = vxor.u32 %v901, 2147483648
        %v1144 = vxor.u32 %v903, 2147483648
        %v1145 = vxor.u32 %v905, 2147483648
        %v1146 = vmul.f32 %v1142, 1.442695
        %v1147 = vpow.pop %v1146
        %v1148 = vmul.f32 %v1143, 1.442695
        %v1149 = vpow.pop %v1148
        %v1150 = vmul.f32 %v1144, 1.442695
        %v1151 = vpow.pop %v1150
        %v1152 = vmul.f32 %v1145, 1.442695
        %v1153 = vpow.pop %v1152
        %v1154 = vadd.f32 %v1147, 1.0
        %v1155 = vadd.f32 %v1149, 1.0
        %v1156 = vadd.f32 %v1151, 1.0
        %v1157 = vadd.f32 %v1153, 1.0
        %v1158 = vrcp.pop %v1154
        %v1159 = vmul.f32 1.0, %v1158
        %v1160 = vrcp.pop %v1155
        %v1161 = vmul.f32 1.0, %v1160
        %v1162 = vrcp.pop %v1156
        %v1163 = vmul.f32 1.0, %v1162
        %v1164 = vrcp.pop %v1157
        %v1165 = vmul.f32 1.0, %v1164
        %v1166 = vmul.f32 %v899, %v1159
        %v1167 = vmul.f32 %v901, %v1161
        %v1168 = vmul.f32 %v903, %v1163
        %v1169 = vmul.f32 %v905, %v1165
        %v1170 = vmul.f32 %v1166, %v1134
        %v1171 = vmul.f32 %v1167, %v1136
        %v1172 = vmul.f32 %v1168, %v1138
        %v1173 = vmul.f32 %v1169, %v1140
        %v1174 = vpack.c.bf16 %v1172, %v1170
        %v1175 = vpack.c.bf16 %v1173, %v1171
        %v1178 = vunpack.c.l.b16 %v1174
        %v1179 = vunpack.c.l.b16 %v1175
        %v1180 = vunpack.c.h.b16 %v1174
        %v1181 = vunpack.c.h.b16 %v1175
        %v1182 = vpack.c.b16 %v1179, %v1178
        %v1183 = vpack.c.b16 %v1181, %v1180
        %1186 = vst [vmem:[%s563] sm:$0xff] %v1182
        %1187 = vst [vmem:[%s563 + $0x8] sm:$0xff] %v1183
        %s1188 = sand.u32 %s136, 1
        %s1189 = sand.u32 %s136, 1
        %s1190 = smul.addr %s1189, 16
        %s1191 = scalar_lea.vmem [#allocation5], %s1190
        // Predicated region
        $region117: #{transformer_forward.14} parent=103 // pred_check
          %p1192 = pneg %p146
        $region118: #{transformer_forward.14} parent=103 // pred_check_branch
          %1194 = sbr.rel (%p1192) target = $region120
        $region119: #{transformer_forward.14} parent=103 // pred_region
          %s1195 = smul.u32 2, %s19
          %s1196 = smul.u32 2, %s20
          %s1197 = smul.addr %s1195, 6
          %s1198 = sadd.s32 %s1196, %s1197
          %s1199 = smul.addr %s1198, 4
          %s1200 = scalar_lea.vmem %s4, %s1199
          // Predicated region
          $region121: #{transformer_forward.14} parent=119 // pred_check
            _
          $region122: #{transformer_forward.14} parent=119 // pred_check_branch
            %1202 = sbr.rel (0) target = $region124
          $region123: #{transformer_forward.14} parent=119 // pred_region
            // Predicated region
            $region125: #{transformer_forward.14} parent=123 // pred_check
              _
            $region126: #{transformer_forward.14} parent=123 // pred_check_branch
              %1204 = sbr.rel (0) target = $region128
            $region127: #{transformer_forward.14} parent=123 // pred_region
              // Predicated region
              $region140: #{transformer_forward.14} parent=127 // pred_check
                _
              $region141: #{transformer_forward.14} parent=127 // pred_check_branch
                %1222 = sbr.rel (0) target = $region143
              $region142: #{transformer_forward.14} parent=127 // pred_region
                loop: start=0, step=1, limit=1
                $region144: #{transformer_forward.14} parent=142 // loop_pre_header
                  _
                $region145: #{transformer_forward.14} parent=142 // loop_header
                  %s1224 = sphi 0, %s1228
                  %p1225 = scmp.ge.s32.totalorder %s1224, 1
                  %s1229 = sphi %s1191, %s1191
                  %s1230 = sphi %s1200, %s1200
                $region146: #{transformer_forward.14} parent=142 // loop_header_branch
                  %1227 = sbr.rel (%p1225) target = $region150
                $region147: #{transformer_forward.14} parent=142 // loop_body
                  %v1231 = vld [vmem:[%s1229] sm:$0xff]
                  %1232 = vst [vmem:[%s1230] sm:$0xff] %v1231
                  %v1233 = vld [vmem:[%s1229 + $0x8] sm:$0xff]
                  %1234 = vst [vmem:[%s1230 + $0x18] sm:$0xff] %v1233
                $region148: #{transformer_forward.14} parent=142 // loop_footer
                  %s1228 = sadd.s32 1, %s1224
                $region149: #{transformer_forward.14} parent=142 // loop_footer_branch
                  %1223 = sbr.rel target = $region145
                $region150: #{transformer_forward.14} parent=142 // loop_exit
                  _
              $region143: #{transformer_forward.14} parent=127 // pred_fallthru
                _
              // Predicated region
              $region151: #{transformer_forward.14} parent=127 // pred_check
                _
              $region152: #{transformer_forward.14} parent=127 // pred_check_branch
                %1236 = sbr.rel target = $region154
              $region153: #{transformer_forward.14} parent=127 // pred_region
                _
              $region154: #{transformer_forward.14} parent=127 // pred_fallthru
                _
            $region128: #{transformer_forward.14} parent=123 // pred_fallthru
              _
            // Predicated region
            $region129: #{transformer_forward.14} parent=123 // pred_check
              _
            $region130: #{transformer_forward.14} parent=123 // pred_check_branch
              %1206 = sbr.rel target = $region132
            $region131: #{transformer_forward.14} parent=123 // pred_region
              %s1208 = ssub.s32 256, 1
              loop: start=0, step=1, limit=1
              $region133: #{transformer_forward.14} parent=131 // loop_pre_header
                _
              $region134: #{transformer_forward.14} parent=131 // loop_header
                %s1210 = sphi 0, %s1214
                %p1211 = scmp.ge.s32.totalorder %s1210, 1
                %s1215 = sphi %s1191, %s1191
                %s1216 = sphi %s1200, %s1200
              $region135: #{transformer_forward.14} parent=131 // loop_header_branch
                %1213 = sbr.rel (%p1211) target = $region139
              $region136: #{transformer_forward.14} parent=131 // loop_body
                %v1217 = vld [vmem:[%s1215] sm:%s1208]
                %1218 = vst [vmem:[%s1216] sm:%s1208] %v1217
                %v1219 = vld [vmem:[%s1215 + $0x8] sm:%s1208]
                %1220 = vst [vmem:[%s1216 + $0x18] sm:%s1208] %v1219
              $region137: #{transformer_forward.14} parent=131 // loop_footer
                %s1214 = sadd.s32 1, %s1210
              $region138: #{transformer_forward.14} parent=131 // loop_footer_branch
                %1209 = sbr.rel target = $region134
              $region139: #{transformer_forward.14} parent=131 // loop_exit
                _
            $region132: #{transformer_forward.14} parent=123 // pred_fallthru
              _
          $region124: #{transformer_forward.14} parent=119 // pred_fallthru
            _
          %1237 = vnop
        $region120: #{transformer_forward.14} parent=103 // pred_fallthru
          _
      $region104: #{transformer_forward.14} parent=5 // pred_fallthru
        _
      %p1238 = scmp.le.s32.totalorder 2, %s10
      // Predicated region
      $region155: #{transformer_forward.14} parent=5 // pred_check
        %p1239 = pneg %p1238
      $region156: #{transformer_forward.14} parent=5 // pred_check_branch
        %1241 = sbr.rel (%p1239) target = $region158
      $region157: #{transformer_forward.14} parent=5 // pred_region
        %s1242 = ssub.s32 %s10, 2
        // Predicated region
        $region159: #{transformer_forward.14} parent=157 // pred_check
          %p1243 = pneg %p152
        $region160: #{transformer_forward.14} parent=157 // pred_check_branch
          %1245 = sbr.rel (%p1243) target = $region162
        $region161: #{transformer_forward.14} parent=157 // pred_region
          %s1246 = sand.u32 %s137, 1
          %s1247 = sand.u32 %s137, 1
          %s1248 = smul.addr %s1247, 16
          %s1249 = scalar_lea.vmem [#allocation5], %s1248
        $region162: #{transformer_forward.14} parent=157 // pred_fallthru
          _
      $region158: #{transformer_forward.14} parent=5 // pred_fallthru
        _
    $region6: #{transformer_forward.14} parent=1 // loop_footer
      %s14 = sadd.s32 1, %s10
    $region7: #{transformer_forward.14} parent=1 // loop_footer_branch
      %9 = sbr.rel target = $region3
    $region8: #{transformer_forward.14} parent=1 // loop_exit
      _

// kernel: transformer_forward.15
$region0: #{transformer_forward.15}
  #allocation0 [shape = 'u32[]', space=smem, size = 0x4, offset = 0x4, fixed_abs, tag = 'smem constant byte address 0x4 - core index']
  #allocation1 [shape = 'u32[144,128]{1,0:T(1,128)}', space=vmem, size = 0x12000, scoped, tag = 'internal scratch']
  #allocation2 [shape = 'f32[16,256]{1,0:T(8,128)}', space=vmem, size = 0x4000, scoped, tag = 'scratch operand']
  %s0 = inlined_call_operand.vmem [shape: bf16[16,768], index: 0, kind: input, shape index: {}]
  %s1 = inlined_call_operand.vmem [shape: bf16[768,256], index: 1, kind: input, shape index: {}]
  %s2 = inlined_call_operand.vmem [shape: bf16[16,256], index: 2, kind: input, shape index: {}]
  %s3 = inlined_call_operand.vmem [shape: bf16[16,256], index: 3, kind: output, shape index: {}]
  %s4 = sld [smem:[#allocation0]]
  $region79: #{transformer_forward.15} parent=0
    _
  %s6 = ssub.s32 1, %s4
  %s7 = scalar_select 0, %s6, %s4
  $region1: #{transformer_forward.15} parent=0
    #allocation3 [shape = 'u8[24576]{0}', space=vmem, size = 0x6000, scoped, tag = 'input window, operand 0']
    loop: start=0, step=1, limit=4
    $region2: #{transformer_forward.15} parent=1 // loop_pre_header
      _
    $region3: #{transformer_forward.15} parent=1 // loop_header
      %s9 = sphi 0, %s13
      %p10 = scmp.ge.s32.totalorder %s9, 4
      %s16 = sphi 0, %s35
      %s17 = sphi 0, %s31
      %s18 = sphi 0, %s27
      %s19 = sphi 0, %s16
      %s20 = sphi 0, %s17
      %s21 = sphi 0, %s18
      %s22 = sphi 0, %s19
      %s23 = sphi 0, %s20
      %s24 = sphi 0, %s21
      %s40 = sphi 0, %s42
      %s43 = sphi 0, %s40
      %s44 = sphi 0, %s43
      %s60 = sphi 0, %s44
      %s68 = sphi 0, %s70
      %s71 = sphi 0, %s68
      %s72 = sphi 0, %s71
      %s88 = sphi 0, %s72
      %s96 = sphi 0, %s98
      %s99 = sphi 0, %s96
      %s100 = sphi 0, %s99
      %s116 = sphi 0, %s100
      %s124 = sphi 0, %s126
      %s127 = sphi 0, %s124
      %s128 = sphi 0, %s127
      %s144 = sphi 0, %s128
    $region4: #{transformer_forward.15} parent=1 // loop_header_branch
      %12 = sbr.rel (%p10) target = $region8
    $region5: #{transformer_forward.15} parent=1 // loop_body
      %s14 = ssub.s32 %s9, 1
      %s15 = ssub.s32 %s9, 2
      %s25 = sadd.s32 1, %s18
      %p26 = scmp.ge.s32.totalorder %s25, 2
      %s27 = scalar_select %p26, 0, %s25
      %s28 = sadd.s32 1, %s17
      %s29 = scalar_select %p26, %s28, %s17
      %p30 = scmp.ge.s32.totalorder %s29, 1
      %s31 = scalar_select %p30, 0, %s29
      %s32 = sadd.s32 1, %s16
      %s33 = scalar_select %p30, %s32, %s16
      %p34 = scmp.ge.s32.totalorder %s33, 1
      %s35 = scalar_select %p34, 0, %s33
      %s36 = ssub.s32 %s16, %s35
      %s37 = ssub.s32 %s18, %s27
      %s38 = sor.u32 %s36, %s37
      %p39 = scmp.eq.s32.totalorder %s38, 0
      %s41 = sadd.s32 %s40, 1
      %s42 = scalar_select %p39, %s40, %s41
      %p45 = pneg %p39
      %p46 = scmp.eq.s32.totalorder %s9, 1
      %p47 = por %p45, %p46
      %p48 = scmp.ne.s32.totalorder %s40, %s43
      %p49 = scmp.eq.s32.totalorder %s9, 0
      %p50 = por %p48, %p49
      %p51 = scmp.ne.s32.totalorder %s40, %s43
      %p52 = scmp.eq.s32.totalorder %s14, 1
      %p53 = por %p51, %p52
      %p54 = scmp.ne.s32.totalorder %s43, %s44
      %p55 = scmp.eq.s32.totalorder %s14, 0
      %p56 = por %p54, %p55
      %p57 = scmp.ne.s32.totalorder %s43, %s44
      %p58 = scmp.eq.s32.totalorder %s15, 1
      %p59 = por %p57, %p58
      %p61 = scmp.ne.s32.totalorder %s44, %s60
      %p62 = scmp.eq.s32.totalorder %s15, 0
      %p63 = por %p61, %p62
      %s64 = ssub.s32 %s18, %s27
      %s65 = ssub.s32 %s17, %s31
      %s66 = sor.u32 %s64, %s65
      %p67 = scmp.eq.s32.totalorder %s66, 0
      %s69 = sadd.s32 %s68, 1
      %s70 = scalar_select %p67, %s68, %s69
      %p73 = pneg %p67
      %p74 = scmp.eq.s32.totalorder %s9, 1
      %p75 = por %p73, %p74
      %p76 = scmp.ne.s32.totalorder %s68, %s71
      %p77 = scmp.eq.s32.totalorder %s9, 0
      %p78 = por %p76, %p77
      %p79 = scmp.ne.s32.totalorder %s68, %s71
      %p80 = scmp.eq.s32.totalorder %s14, 1
      %p81 = por %p79, %p80
      %p82 = scmp.ne.s32.totalorder %s71, %s72
      %p83 = scmp.eq.s32.totalorder %s14, 0
      %p84 = por %p82, %p83
      %p85 = scmp.ne.s32.totalorder %s71, %s72
      %p86 = scmp.eq.s32.totalorder %s15, 1
      %p87 = por %p85, %p86
      %p89 = scmp.ne.s32.totalorder %s72, %s88
      %p90 = scmp.eq.s32.totalorder %s15, 0
      %p91 = por %p89, %p90
      %s92 = ssub.s32 %s16, %s35
      %s93 = ssub.s32 %s17, %s31
      %s94 = sor.u32 %s92, %s93
      %p95 = scmp.eq.s32.totalorder %s94, 0
      %s97 = sadd.s32 %s96, 1
      %s98 = scalar_select %p95, %s96, %s97
      %p101 = pneg %p95
      %p102 = scmp.eq.s32.totalorder %s9, 1
      %p103 = por %p101, %p102
      %p104 = scmp.ne.s32.totalorder %s96, %s99
      %p105 = scmp.eq.s32.totalorder %s9, 0
      %p106 = por %p104, %p105
      %p107 = scmp.ne.s32.totalorder %s96, %s99
      %p108 = scmp.eq.s32.totalorder %s14, 1
      %p109 = por %p107, %p108
      %p110 = scmp.ne.s32.totalorder %s99, %s100
      %p111 = scmp.eq.s32.totalorder %s14, 0
      %p112 = por %p110, %p111
      %p113 = scmp.ne.s32.totalorder %s99, %s100
      %p114 = scmp.eq.s32.totalorder %s15, 1
      %p115 = por %p113, %p114
      %p117 = scmp.ne.s32.totalorder %s100, %s116
      %p118 = scmp.eq.s32.totalorder %s15, 0
      %p119 = por %p117, %p118
      %s120 = ssub.s32 %s16, %s35
      %s121 = ssub.s32 %s17, %s31
      %s122 = sor.u32 %s120, %s121
      %p123 = scmp.eq.s32.totalorder %s122, 0
      %s125 = sadd.s32 %s124, 1
      %s126 = scalar_select %p123, %s124, %s125
      %p129 = pneg %p123
      %p130 = scmp.eq.s32.totalorder %s9, 1
      %p131 = por %p129, %p130
      %p132 = scmp.ne.s32.totalorder %s124, %s127
      %p133 = scmp.eq.s32.totalorder %s9, 0
      %p134 = por %p132, %p133
      %p135 = scmp.ne.s32.totalorder %s124, %s127
      %p136 = scmp.eq.s32.totalorder %s14, 1
      %p137 = por %p135, %p136
      %p138 = scmp.ne.s32.totalorder %s127, %s128
      %p139 = scmp.eq.s32.totalorder %s14, 0
      %p140 = por %p138, %p139
      %p141 = scmp.ne.s32.totalorder %s127, %s128
      %p142 = scmp.eq.s32.totalorder %s15, 1
      %p143 = por %p141, %p142
      %p145 = scmp.ne.s32.totalorder %s128, %s144
      %p146 = scmp.eq.s32.totalorder %s15, 0
      %p147 = por %p145, %p146
      %p148 = scmp.le.s32.totalorder 1, %s9
      %p149 = scmp.lt.s32.totalorder %s9, 3
      %p150 = pnand %p148, %p149
      %p151 = pneg %p150
      // Predicated region
      $region9: #{transformer_forward.15} parent=5 // pred_check
        _
      $region10: #{transformer_forward.15} parent=5 // pred_check_branch
        %153 = sbr.rel (%p150) target = $region12
      $region11: #{transformer_forward.15} parent=5 // pred_region
        %s154 = ssub.s32 %s9, 1
        // Predicated region
        $region13: #{transformer_forward.15} parent=11 // pred_check
          %p155 = pneg %p112
        $region14: #{transformer_forward.15} parent=11 // pred_check_branch
          %157 = sbr.rel (%p155) target = $region16
        $region15: #{transformer_forward.15} parent=11 // pred_region
          %s158 = smul.u32 2, %s19
          %s159 = smul.u32 2, %s20
          %p160 = scmp.lt.s32.totalorder %s158, 1
          %s161 = scalar_select %p160, %s158, 1
          %p162 = scmp.lt.s32.totalorder %s159, 1
          %s163 = scalar_select %p162, %s159, 1
          %s164 = smul.addr %s161, 2
          %s165 = sadd.s32 %s163, %s164
          %s166 = smul.addr %s165, 4
          %s167 = scalar_lea.vmem %s2, %s166
          %s168 = smul.u32 2, %s19
          %s169 = smul.u32 2, %s20
        $region16: #{transformer_forward.15} parent=11 // pred_fallthru
          _
      $region12: #{transformer_forward.15} parent=5 // pred_fallthru
        _
      %p170 = scmp.lt.s32.totalorder %s9, 2
      // Predicated region
      $region17: #{transformer_forward.15} parent=5 // pred_check
        %p171 = pneg %p170
      $region18: #{transformer_forward.15} parent=5 // pred_check_branch
        %173 = sbr.rel (%p171) target = $region20
      $region19: #{transformer_forward.15} parent=5 // pred_region
        // Predicated region
        $region21: #{transformer_forward.15} parent=19 // pred_check
          %p174 = pneg %p50
        $region22: #{transformer_forward.15} parent=19 // pred_check_branch
          %176 = sbr.rel (%p174) target = $region24
        $region23: #{transformer_forward.15} parent=19 // pred_region
          %s177 = sand.u32 %s40, 1
          %s178 = sand.u32 %s40, 1
          %s179 = smul.addr %s178, 24
          %s180 = scalar_lea.vmem [#allocation3], %s179
          %s181 = smul.u32 2, %s16
          %s182 = smul.u32 3, %s18
          %s183 = smul.addr %s181, 6
          %s184 = sadd.s32 %s182, %s183
          %s185 = smul.addr %s184, 4
          %s186 = scalar_lea.vmem %s0, %s185
          // Predicated region
          $region25: #{transformer_forward.15} parent=23 // pred_check
            _
          $region26: #{transformer_forward.15} parent=23 // pred_check_branch
            %188 = sbr.rel (0) target = $region28
          $region27: #{transformer_forward.15} parent=23 // pred_region
            // Predicated region
            $region29: #{transformer_forward.15} parent=27 // pred_check
              _
            $region30: #{transformer_forward.15} parent=27 // pred_check_branch
              %190 = sbr.rel (0) target = $region32
            $region31: #{transformer_forward.15} parent=27 // pred_region
              %s191 = scalar_lea.vmem %s186, 8
              %s192 = scalar_lea.vmem %s180, 8 [#allocation3]
              loop: start=0, step=1, limit=1
              $region33: #{transformer_forward.15} parent=31 // loop_pre_header
                _
              $region34: #{transformer_forward.15} parent=31 // loop_header
                %s194 = sphi 0, %s198
                %p195 = scmp.ge.s32.totalorder %s194, 1
                %s199 = sphi %s186, %s186
                %s200 = sphi %s180, %s180
              $region35: #{transformer_forward.15} parent=31 // loop_header_branch
                %197 = sbr.rel (%p195) target = $region39
              $region36: #{transformer_forward.15} parent=31 // loop_body
                %v201 = vld [vmem:[%s199] sm:$0xff]
                %202 = vst [vmem:[%s200] sm:$0xff] %v201
                %v203 = vld [vmem:[%s199 + $0x18] sm:$0xff]
                %204 = vst [vmem:[%s200 + $0xc] sm:$0xff] %v203
              $region37: #{transformer_forward.15} parent=31 // loop_footer
                %s198 = sadd.s32 1, %s194
              $region38: #{transformer_forward.15} parent=31 // loop_footer_branch
                %193 = sbr.rel target = $region34
              $region39: #{transformer_forward.15} parent=31 // loop_exit
                _
              %s206 = ssub.s32 16, 1
              loop: start=0, step=1, limit=1
              $region40: #{transformer_forward.15} parent=31 // loop_pre_header
                _
              $region41: #{transformer_forward.15} parent=31 // loop_header
                %s208 = sphi 0, %s212
                %p209 = scmp.ge.s32.totalorder %s208, 1
                %s213 = sphi %s191, %s191
                %s214 = sphi %s192, %s192
              $region42: #{transformer_forward.15} parent=31 // loop_header_branch
                %211 = sbr.rel (%p209) target = $region46
              $region43: #{transformer_forward.15} parent=31 // loop_body
                %v215 = vld [vmem:[%s213] sm:%s206]
                %216 = vst [vmem:[%s214] sm:%s206] %v215
                %v217 = vld [vmem:[%s213 + $0x18] sm:%s206]
                %218 = vst [vmem:[%s214 + $0xc] sm:%s206] %v217
              $region44: #{transformer_forward.15} parent=31 // loop_footer
                %s212 = sadd.s32 1, %s208
              $region45: #{transformer_forward.15} parent=31 // loop_footer_branch
                %207 = sbr.rel target = $region41
              $region46: #{transformer_forward.15} parent=31 // loop_exit
                _
            $region32: #{transformer_forward.15} parent=27 // pred_fallthru
              _
          $region28: #{transformer_forward.15} parent=23 // pred_fallthru
            _
          %219 = vnop
        $region24: #{transformer_forward.15} parent=19 // pred_fallthru
          _
        // Predicated region
        $region47: #{transformer_forward.15} parent=19 // pred_check
          %p220 = pneg %p78
        $region48: #{transformer_forward.15} parent=19 // pred_check_branch
          %222 = sbr.rel (%p220) target = $region50
        $region49: #{transformer_forward.15} parent=19 // pred_region
          %s223 = smul.u32 48, %s18
          %s224 = smul.u32 2, %s17
          %p225 = scmp.lt.s32.totalorder %s223, 95
          %s226 = scalar_select %p225, %s223, 95
          %p227 = scmp.lt.s32.totalorder %s224, 1
          %s228 = scalar_select %p227, %s224, 1
          %s229 = smul.addr %s226, 2
          %s230 = sadd.s32 %s228, %s229
          %s231 = smul.addr %s230, 4
          %s232 = scalar_lea.vmem %s1, %s231
          %s233 = smul.u32 48, %s18
          %s234 = smul.u32 2, %s17
        $region50: #{transformer_forward.15} parent=19 // pred_fallthru
          _
      $region20: #{transformer_forward.15} parent=5 // pred_fallthru
        _
      %p235 = scmp.le.s32.totalorder 1, %s9
      %p236 = scmp.lt.s32.totalorder %s9, 3
      %p237 = pnand %p235, %p236
      %p238 = pneg %p237
      // Predicated region
      $region51: #{transformer_forward.15} parent=5 // pred_check
        _
      $region52: #{transformer_forward.15} parent=5 // pred_check_branch
        %240 = sbr.rel (%p237) target = $region54
      $region53: #{transformer_forward.15} parent=5 // pred_region
        %s241 = ssub.s32 %s9, 1
        %s242 = sand.u32 %s43, 1
        %s243 = sand.u32 %s43, 1
        %s244 = smul.addr %s243, 24
        %s245 = scalar_lea.vmem [#allocation3], %s244
        // Predicated region
        $region55: #{transformer_forward.15} parent=53 // pred_check
          %p246 = pneg %p56
        $region56: #{transformer_forward.15} parent=53 // pred_check_branch
          %248 = sbr.rel (%p246) target = $region58
        $region57: #{transformer_forward.15} parent=53 // pred_region
          _
        $region58: #{transformer_forward.15} parent=53 // pred_fallthru
          _
        %s249 = sand.u32 %s43, 1
        %s250 = sand.u32 %s43, 1
        %s251 = smul.addr %s250, 24
        %s252 = scalar_lea.vmem [#allocation3], %s251
        %p253 = pneg %p56
        %p254 = pneg %p53
        %s255 = smul.u32 48, %s21
        %s256 = smul.u32 2, %s20
        %p257 = scmp.lt.s32.totalorder %s255, 95
        %s258 = scalar_select %p257, %s255, 95
        %p259 = scmp.lt.s32.totalorder %s256, 1
        %s260 = scalar_select %p259, %s256, 1
        %s261 = smul.addr %s258, 2
        %s262 = sadd.s32 %s260, %s261
        %s263 = smul.addr %s262, 4
        %s264 = scalar_lea.vmem %s1, %s263
        %p265 = pneg %p84
        %p266 = pneg %p81
        %s267 = smul.u32 2, %s19
        %s268 = smul.u32 2, %s20
        %p269 = scmp.lt.s32.totalorder %s267, 1
        %s270 = scalar_select %p269, %s267, 1
        %p271 = scmp.lt.s32.totalorder %s268, 1
        %s272 = scalar_select %p271, %s268, 1
        %s273 = smul.addr %s270, 2
        %s274 = sadd.s32 %s272, %s273
        %s275 = smul.addr %s274, 4
        %s276 = scalar_lea.vmem %s2, %s275
        %p277 = pneg %p112
        %p278 = pneg %p109
        %p279 = pneg %p140
        %p280 = pneg %p137
        %s281 = smul.u32 2, %s19
        %s282 = smul.u32 2, %s20
        %p283 = scmp.lt.s32.totalorder %s281, 1
        %s284 = scalar_select %p283, %s281, 1
        %p285 = scmp.lt.s32.totalorder %s282, 1
        %s286 = scalar_select %p285, %s282, 1
        %s287 = smul.addr %s284, 2
        %s288 = sadd.s32 %s286, %s287
        %s289 = smul.addr %s288, 4
        %s290 = scalar_lea.vmem %s3, %s289
        %s291 = smul.u32 2, %s19
        %s292 = smul.u32 3, %s21
        %s293 = smul.u32 48, %s21
        %s294 = smul.u32 2, %s20
        %p295 = scmp.lt.s32.totalorder %s293, 95
        %s296 = scalar_select %p295, %s293, 95
        %p297 = scmp.lt.s32.totalorder %s294, 1
        %s298 = scalar_select %p297, %s294, 1
        %s299 = smul.addr %s296, 2
        %s300 = sadd.s32 %s298, %s299
        %s301 = smul.addr %s300, 4
        %s302 = scalar_lea.vmem %s1, %s301
        %s303 = smul.u32 48, %s21
        %s304 = smul.u32 2, %s20
        %s305 = smul.u32 2, %s19
        %s306 = smul.u32 2, %s20
        %p307 = scmp.lt.s32.totalorder %s305, 1
        %s308 = scalar_select %p307, %s305, 1
        %p309 = scmp.lt.s32.totalorder %s306, 1
        %s310 = scalar_select %p309, %s306, 1
        %s311 = smul.addr %s308, 2
        %s312 = sadd.s32 %s310, %s311
        %s313 = smul.addr %s312, 4
        %s314 = scalar_lea.vmem %s2, %s313
        %s315 = smul.u32 2, %s19
        %s316 = smul.u32 2, %s20
        %s317 = smul.u32 2, %s19
        %s318 = smul.u32 2, %s20
        %p319 = scmp.lt.s32.totalorder %s317, 1
        %s320 = scalar_select %p319, %s317, 1
        %p321 = scmp.lt.s32.totalorder %s318, 1
        %s322 = scalar_select %p321, %s318, 1
        %s323 = smul.addr %s320, 2
        %s324 = sadd.s32 %s322, %s323
        %s325 = smul.addr %s324, 4
        %s326 = scalar_lea.vmem %s3, %s325
        %s327 = smul.u32 2, %s19
        %s328 = smul.u32 2, %s20
        %p330 = scmp.eq.s32.totalorder %s21, 0
        // Predicated region
        $region59: #{transformer_forward.15} parent=53 // pred_check
          %p331 = pneg %p330
        $region60: #{transformer_forward.15} parent=53 // pred_check_branch
          %333 = sbr.rel (%p331) target = $region62
        $region61: #{transformer_forward.15} parent=53 // pred_region
          %334 = vst [vmem:[#allocation2] sm:$0xff] 0.0
          %335 = vst [vmem:[#allocation2 + $0x8] sm:$0xff] 0.0
          %336 = vst [vmem:[#allocation2 + $0x10] sm:$0xff] 0.0
          %337 = vst [vmem:[#allocation2 + $0x18] sm:$0xff] 0.0
        $region62: #{transformer_forward.15} parent=53 // pred_fallthru
          _
        %v338 = vld [vmem:[#allocation2] sm:$0xff]
        %v339 = vld [vmem:[#allocation2 + $0x8] sm:$0xff]
        %v340 = vld [vmem:[#allocation2 + $0x10] sm:$0xff]
        %v341 = vld [vmem:[#allocation2 + $0x18] sm:$0xff]
        %v342 = vld [vmem:[%s245] sm:$0xff]
        %v343 = vld [vmem:[%s245 + $0x8] sm:$0xf]
        %v344 = vld [vmem:[%s245 + $0xc] sm:$0xff]
        %v345 = vld [vmem:[%s245 + $0x14] sm:$0xf]
        %v346 = vld [vmem:[%s302] sm:$0xff]
        %v347 = vld [vmem:[%s302 + $0x8] sm:$0xff]
        %v348 = vld [vmem:[%s302 + $0x10] sm:$0xff]
        %v349 = vld [vmem:[%s302 + $0x18] sm:$0xff]
        %v350 = vld [vmem:[%s302 + $0x20] sm:$0xff]
        %v351 = vld [vmem:[%s302 + $0x28] sm:$0xff]
        %v352 = vld [vmem:[%s302 + $0x30] sm:$0xff]
        %v353 = vld [vmem:[%s302 + $0x38] sm:$0xff]
        %v354 = vld [vmem:[%s302 + $0x40] sm:$0xff]
        %v355 = vld [vmem:[%s302 + $0x48] sm:$0xff]
        %v356 = vld [vmem:[%s302 + $0x50] sm:$0xff]
        %v357 = vld [vmem:[%s302 + $0x58] sm:$0xff]
        %v358 = vld [vmem:[%s302 + $0x60] sm:$0xff]
        %v359 = vld [vmem:[%s302 + $0x68] sm:$0xff]
        %v360 = vld [vmem:[%s302 + $0x70] sm:$0xff]
        %v361 = vld [vmem:[%s302 + $0x78] sm:$0xff]
        %v362 = vld [vmem:[%s302 + $0x80] sm:$0xff]
        %v363 = vld [vmem:[%s302 + $0x88] sm:$0xff]
        %v364 = vld [vmem:[%s302 + $0x90] sm:$0xff]
        %v365 = vld [vmem:[%s302 + $0x98] sm:$0xff]
        %v366 = vld [vmem:[%s302 + $0xa0] sm:$0xff]
        %v367 = vld [vmem:[%s302 + $0xa8] sm:$0xff]
        %v368 = vld [vmem:[%s302 + $0xb0] sm:$0xff]
        %v369 = vld [vmem:[%s302 + $0xb8] sm:$0xff]
        %v370 = vld [vmem:[%s302 + $0xc0] sm:$0xff]
        %v371 = vld [vmem:[%s302 + $0xc8] sm:$0xff]
        %v372 = vld [vmem:[%s302 + $0xd0] sm:$0xff]
        %v373 = vld [vmem:[%s302 + $0xd8] sm:$0xff]
        %v374 = vld [vmem:[%s302 + $0xe0] sm:$0xff]
        %v375 = vld [vmem:[%s302 + $0xe8] sm:$0xff]
        %v376 = vld [vmem:[%s302 + $0xf0] sm:$0xff]
        %v377 = vld [vmem:[%s302 + $0xf8] sm:$0xff]
        %v378 = vld [vmem:[%s302 + $0x100] sm:$0xff]
        %v379 = vld [vmem:[%s302 + $0x108] sm:$0xff]
        %v380 = vld [vmem:[%s302 + $0x110] sm:$0xff]
        %v381 = vld [vmem:[%s302 + $0x118] sm:$0xff]
        %v382 = vld [vmem:[%s302 + $0x120] sm:$0xff]
        %v383 = vld [vmem:[%s302 + $0x128] sm:$0xff]
        %v384 = vld [vmem:[%s302 + $0x130] sm:$0xff]
        %v385 = vld [vmem:[%s302 + $0x138] sm:$0xff]
        %v386 = vld [vmem:[%s302 + $0x140] sm:$0xff]
        %v387 = vld [vmem:[%s302 + $0x148] sm:$0xff]
        %v388 = vld [vmem:[%s302 + $0x150] sm:$0xff]
        %v389 = vld [vmem:[%s302 + $0x158] sm:$0xff]
        %v390 = vld [vmem:[%s302 + $0x160] sm:$0xff]
        %v391 = vld [vmem:[%s302 + $0x168] sm:$0xff]
        %v392 = vld [vmem:[%s302 + $0x170] sm:$0xff]
        %v393 = vld [vmem:[%s302 + $0x178] sm:$0xff]
        %v398 = vunpack.c.l.b16 %v342
        %v399 = vunpack.c.h.b16 %v342
        %v400 = vunpack.c.l.b16 %v343
        %v401 = vunpack.c.l.b16 %v344
        %v402 = vunpack.c.h.b16 %v344
        %v403 = vunpack.c.l.b16 %v345
        %v404 = vpack.c.b16 %v401, %v398
        %v405 = vpack.c.b16 %v402, %v399
        %v406 = vpack.c.b16 %v403, %v400
        %v458 = vunpack.c.l.b16 %v346
        %v459 = vunpack.c.h.b16 %v346
        %v460 = vunpack.c.l.b16 %v347
        %v461 = vunpack.c.h.b16 %v347
        %v462 = vunpack.c.l.b16 %v348
        %v463 = vunpack.c.h.b16 %v348
        %v464 = vunpack.c.l.b16 %v349
        %v465 = vunpack.c.h.b16 %v349
        %v466 = vunpack.c.l.b16 %v350
        %v467 = vunpack.c.h.b16 %v350
        %v468 = vunpack.c.l.b16 %v351
        %v469 = vunpack.c.h.b16 %v351
        %v470 = vunpack.c.l.b16 %v352
        %v471 = vunpack.c.h.b16 %v352
        %v472 = vunpack.c.l.b16 %v353
        %v473 = vunpack.c.h.b16 %v353
        %v474 = vunpack.c.l.b16 %v354
        %v475 = vunpack.c.h.b16 %v354
        %v476 = vunpack.c.l.b16 %v355
        %v477 = vunpack.c.h.b16 %v355
        %v478 = vunpack.c.l.b16 %v356
        %v479 = vunpack.c.h.b16 %v356
        %v480 = vunpack.c.l.b16 %v357
        %v481 = vunpack.c.h.b16 %v357
        %v482 = vunpack.c.l.b16 %v358
        %v483 = vunpack.c.h.b16 %v358
        %v484 = vunpack.c.l.b16 %v359
        %v485 = vunpack.c.h.b16 %v359
        %v486 = vunpack.c.l.b16 %v360
        %v487 = vunpack.c.h.b16 %v360
        %v488 = vunpack.c.l.b16 %v361
        %v489 = vunpack.c.h.b16 %v361
        %v490 = vunpack.c.l.b16 %v362
        %v491 = vunpack.c.h.b16 %v362
        %v492 = vunpack.c.l.b16 %v363
        %v493 = vunpack.c.h.b16 %v363
        %v494 = vunpack.c.l.b16 %v364
        %v495 = vunpack.c.h.b16 %v364
        %v496 = vunpack.c.l.b16 %v365
        %v497 = vunpack.c.h.b16 %v365
        %v498 = vunpack.c.l.b16 %v366
        %v499 = vunpack.c.h.b16 %v366
        %v500 = vunpack.c.l.b16 %v367
        %v501 = vunpack.c.h.b16 %v367
        %v502 = vunpack.c.l.b16 %v368
        %v503 = vunpack.c.h.b16 %v368
        %v504 = vunpack.c.l.b16 %v369
        %v505 = vunpack.c.h.b16 %v369
        %v506 = vunpack.c.l.b16 %v370
        %v507 = vunpack.c.h.b16 %v370
        %v508 = vunpack.c.l.b16 %v371
        %v509 = vunpack.c.h.b16 %v371
        %v510 = vunpack.c.l.b16 %v372
        %v511 = vunpack.c.h.b16 %v372
        %v512 = vunpack.c.l.b16 %v373
        %v513 = vunpack.c.h.b16 %v373
        %v514 = vunpack.c.l.b16 %v374
        %v515 = vunpack.c.h.b16 %v374
        %v516 = vunpack.c.l.b16 %v375
        %v517 = vunpack.c.h.b16 %v375
        %v518 = vunpack.c.l.b16 %v376
        %v519 = vunpack.c.h.b16 %v376
        %v520 = vunpack.c.l.b16 %v377
        %v521 = vunpack.c.h.b16 %v377
        %v522 = vunpack.c.l.b16 %v378
        %v523 = vunpack.c.h.b16 %v378
        %v524 = vunpack.c.l.b16 %v379
        %v525 = vunpack.c.h.b16 %v379
        %v526 = vunpack.c.l.b16 %v380
        %v527 = vunpack.c.h.b16 %v380
        %v528 = vunpack.c.l.b16 %v381
        %v529 = vunpack.c.h.b16 %v381
        %v530 = vunpack.c.l.b16 %v382
        %v531 = vunpack.c.h.b16 %v382
        %v532 = vunpack.c.l.b16 %v383
        %v533 = vunpack.c.h.b16 %v383
        %v534 = vunpack.c.l.b16 %v384
        %v535 = vunpack.c.h.b16 %v384
        %v536 = vunpack.c.l.b16 %v385
        %v537 = vunpack.c.h.b16 %v385
        %v538 = vunpack.c.l.b16 %v386
        %v539 = vunpack.c.h.b16 %v386
        %v540 = vunpack.c.l.b16 %v387
        %v541 = vunpack.c.h.b16 %v387
        %v542 = vunpack.c.l.b16 %v388
        %v543 = vunpack.c.h.b16 %v388
        %v544 = vunpack.c.l.b16 %v389
        %v545 = vunpack.c.h.b16 %v389
        %v546 = vunpack.c.l.b16 %v390
        %v547 = vunpack.c.h.b16 %v390
        %v548 = vunpack.c.l.b16 %v391
        %v549 = vunpack.c.h.b16 %v391
        %v550 = vunpack.c.l.b16 %v392
        %v551 = vunpack.c.h.b16 %v392
        %v552 = vunpack.c.l.b16 %v393
        %v553 = vunpack.c.h.b16 %v393
        %v554 = vpack.c.b16 %v460, %v458
        %v555 = vpack.c.b16 %v461, %v459
        %v556 = vpack.c.b16 %v464, %v462
        %v557 = vpack.c.b16 %v465, %v463
        %v558 = vpack.c.b16 %v468, %v466
        %v559 = vpack.c.b16 %v469, %v467
        %v560 = vpack.c.b16 %v472, %v470
        %v561 = vpack.c.b16 %v473, %v471
        %v562 = vpack.c.b16 %v476, %v474
        %v563 = vpack.c.b16 %v477, %v475
        %v564 = vpack.c.b16 %v480, %v478
        %v565 = vpack.c.b16 %v481, %v479
        %v566 = vpack.c.b16 %v484, %v482
        %v567 = vpack.c.b16 %v485, %v483
        %v568 = vpack.c.b16 %v488, %v486
        %v569 = vpack.c.b16 %v489, %v487
        %v570 = vpack.c.b16 %v492, %v490
        %v571 = vpack.c.b16 %v493, %v491
        %v572 = vpack.c.b16 %v496, %v494
        %v573 = vpack.c.b16 %v497, %v495
        %v574 = vpack.c.b16 %v500, %v498
        %v575 = vpack.c.b16 %v501, %v499
        %v576 = vpack.c.b16 %v504, %v502
        %v577 = vpack.c.b16 %v505, %v503
        %v578 = vpack.c.b16 %v508, %v506
        %v579 = vpack.c.b16 %v509, %v507
        %v580 = vpack.c.b16 %v512, %v510
        %v581 = vpack.c.b16 %v513, %v511
        %v582 = vpack.c.b16 %v516, %v514
        %v583 = vpack.c.b16 %v517, %v515
        %v584 = vpack.c.b16 %v520, %v518
        %v585 = vpack.c.b16 %v521, %v519
        %v586 = vpack.c.b16 %v524, %v522
        %v587 = vpack.c.b16 %v525, %v523
        %v588 = vpack.c.b16 %v528, %v526
        %v589 = vpack.c.b16 %v529, %v527
        %v590 = vpack.c.b16 %v532, %v530
        %v591 = vpack.c.b16 %v533, %v531
        %v592 = vpack.c.b16 %v536, %v534
        %v593 = vpack.c.b16 %v537, %v535
        %v594 = vpack.c.b16 %v540, %v538
        %v595 = vpack.c.b16 %v541, %v539
        %v596 = vpack.c.b16 %v544, %v542
        %v597 = vpack.c.b16 %v545, %v543
        %v598 = vpack.c.b16 %v548, %v546
        %v599 = vpack.c.b16 %v549, %v547
        %v600 = vpack.c.b16 %v552, %v550
        %v601 = vpack.c.b16 %v553, %v551
        %650 = vmatprep.subr.bf16.mxu0 %v569
        %651 = vmatpush1.bf16.msra.mxu0 %v568
        %652 = vmatprep.subr.bf16.mxu0 %v567
        %653 = vmatpush1.bf16.msra.mxu0 %v566
        %654 = vmatprep.subr.bf16.mxu0 %v565
        %655 = vmatpush1.bf16.msra.mxu0 %v564
        %656 = vmatprep.subr.bf16.mxu0 %v563
        %657 = vmatpush1.bf16.msra.mxu0 %v562
        %658 = vmatprep.subr.bf16.mxu0 %v561
        %659 = vmatpush1.bf16.msra.mxu0 %v560
        %660 = vmatprep.subr.bf16.mxu0 %v559
        %661 = vmatpush1.bf16.msra.mxu0 %v558
        %662 = vmatprep.subr.bf16.mxu0 %v557
        %663 = vmatpush1.bf16.msra.mxu0 %v556
        %664 = vmatprep.subr.bf16.mxu0 %v555
        %665 = vmatpush1.bf16.msra.mxu0 %v554
        %666 = vmatprep.subr.bf16.mxu0 %v585
        %667 = vmatpush2.bf16.msra.mxu0 %v584
        %668 = vmatprep.subr.bf16.mxu0 %v583
        %669 = vmatpush2.bf16.msra.mxu0 %v582
        %670 = vmatprep.subr.bf16.mxu0 %v581
        %671 = vmatpush2.bf16.msra.mxu0 %v580
        %672 = vmatprep.subr.bf16.mxu0 %v579
        %673 = vmatpush2.bf16.msra.mxu0 %v578
        %674 = vmatprep.subr.bf16.mxu0 %v577
        %675 = vmatpush2.bf16.msra.mxu0 %v576
        %676 = vmatprep.subr.bf16.mxu0 %v575
        %677 = vmatpush2.bf16.msra.mxu0 %v574
        %678 = vmatprep.subr.bf16.mxu0 %v573
        %679 = vmatpush2.bf16.msra.mxu0 %v572
        %680 = vmatprep.subr.bf16.mxu0 %v571
        %681 = vmatpush2.bf16.msra.mxu0 %v570
        %682 = vmatprep.mubr.bf16.mxu0 %v405
        %683 = vmatmul.mubr.bf16.gmra.mxu0 %v404
        %v684 = vpop.f32.mrf.mxu0
        %v685 = vadd.f32 0.0, %v684
        %v686 = vpop.f32.mrf.mxu0
        %v687 = vadd.f32 0.0, %v686
        %v688 = vpop.f32.mrf.mxu0
        %v689 = vadd.f32 0.0, %v688
        %v690 = vpop.f32.mrf.mxu0
        %v691 = vadd.f32 0.0, %v690
        %692 = vdwg.mxu0
        %693 = vmatprep.subr.bf16.mxu0 %v601
        %694 = vmatpush1.bf16.msra.mxu0 %v600
        %695 = vmatprep.subr.bf16.mxu0 %v599
        %696 = vmatpush1.bf16.msra.mxu0 %v598
        %697 = vmatprep.subr.bf16.mxu0 %v597
        %698 = vmatpush1.bf16.msra.mxu0 %v596
        %699 = vmatprep.subr.bf16.mxu0 %v595
        %700 = vmatpush1.bf16.msra.mxu0 %v594
        %701 = vmatprep.subr.bf16.mxu0 %v593
        %702 = vmatpush1.bf16.msra.mxu0 %v592
        %703 = vmatprep.subr.bf16.mxu0 %v591
        %704 = vmatpush1.bf16.msra.mxu0 %v590
        %705 = vmatprep.subr.bf16.mxu0 %v589
        %706 = vmatpush1.bf16.msra.mxu0 %v588
        %707 = vmatprep.subr.bf16.mxu0 %v587
        %708 = vmatpush1.bf16.msra.mxu0 %v586
        %709 = vmatprep.subr.bf16.mxu0 0
        %710 = vmatpush2.bf16.msra.mxu0 0
        %711 = vmatprep.subr.bf16.mxu0 0
        %712 = vmatpush2.bf16.msra.mxu0 0
        %713 = vmatprep.subr.bf16.mxu0 0
        %714 = vmatpush2.bf16.msra.mxu0 0
        %715 = vmatprep.subr.bf16.mxu0 0
        %716 = vmatpush2.bf16.msra.mxu0 0
        %717 = vmatprep.subr.bf16.mxu0 0
        %718 = vmatpush2.bf16.msra.mxu0 0
        %719 = vmatprep.subr.bf16.mxu0 0
        %720 = vmatpush2.bf16.msra.mxu0 0
        %721 = vmatprep.subr.bf16.mxu0 0
        %722 = vmatpush2.bf16.msra.mxu0 0
        %723 = vmatprep.subr.bf16.mxu0 0
        %724 = vmatpush2.bf16.msra.mxu0 0
        %725 = vmatprep.mubr.bf16.mxu0 0
        %726 = vmatmul.mubr.bf16.gmra.mxu0 %v406
        %v727 = vpop.f32.mrf.mxu0
        %v728 = vadd.f32 %v685, %v727
        %v729 = vpop.f32.mrf.mxu0
        %v730 = vadd.f32 %v687, %v729
        %v731 = vpop.f32.mrf.mxu0
        %v732 = vadd.f32 %v689, %v731
        %v733 = vpop.f32.mrf.mxu0
        %v734 = vadd.f32 %v691, %v733
        %735 = vdwg.mxu0
        %v736 = vadd.f32 %v338, %v728
        %v737 = vadd.f32 %v339, %v730
        %v738 = vadd.f32 %v340, %v732
        %v739 = vadd.f32 %v341, %v734
        %740 = vst [vmem:[#allocation2] sm:$0xff] %v736
        %741 = vst [vmem:[#allocation2 + $0x8] sm:$0xff] %v737
        %742 = vst [vmem:[#allocation2 + $0x10] sm:$0xff] %v738
        %743 = vst [vmem:[#allocation2 + $0x18] sm:$0xff] %v739
        %p744 = scmp.eq.s32.totalorder %s21, 1
        // Predicated region
        $region63: #{transformer_forward.15} parent=53 // pred_check
          %p745 = pneg %p744
        $region64: #{transformer_forward.15} parent=53 // pred_check_branch
          %747 = sbr.rel (%p745) target = $region66
        $region65: #{transformer_forward.15} parent=53 // pred_region
          %v748 = vld [vmem:[%s314] sm:$0xff]
          %v749 = vld [vmem:[%s314 + $0x8] sm:$0xff]
          %v750 = vunpack.c.l.bf16 %v748
          %v751 = vunpack.c.h.bf16 %v748
          %v752 = vunpack.c.l.bf16 %v749
          %v753 = vunpack.c.h.bf16 %v749
          %v754 = vld [vmem:[#allocation2] sm:$0xff]
          %v755 = vld [vmem:[#allocation2 + $0x8] sm:$0xff]
          %v756 = vld [vmem:[#allocation2 + $0x10] sm:$0xff]
          %v757 = vld [vmem:[#allocation2 + $0x18] sm:$0xff]
          %v758 = vadd.f32 %v750, %v754
          %v759 = vadd.f32 %v751, %v755
          %v760 = vadd.f32 %v752, %v756
          %v761 = vadd.f32 %v753, %v757
          %v762 = vpack.c.bf16 %v760, %v758
          %v763 = vpack.c.bf16 %v761, %v759
          %v766 = vunpack.c.l.b16 %v762
          %v767 = vunpack.c.l.b16 %v763
          %v768 = vunpack.c.h.b16 %v762
          %v769 = vunpack.c.h.b16 %v763
          %v770 = vpack.c.b16 %v767, %v766
          %v771 = vpack.c.b16 %v769, %v768
          %774 = vst [vmem:[%s326] sm:$0xff] %v770
          %775 = vst [vmem:[%s326 + $0x8] sm:$0xff] %v771
        $region66: #{transformer_forward.15} parent=53 // pred_fallthru
          _
        %s776 = smul.u32 2, %s19
        %s777 = smul.u32 2, %s20
        %p778 = scmp.lt.s32.totalorder %s776, 1
        %s779 = scalar_select %p778, %s776, 1
        %p780 = scmp.lt.s32.totalorder %s777, 1
        %s781 = scalar_select %p780, %s777, 1
        %s782 = smul.addr %s779, 2
        %s783 = sadd.s32 %s781, %s782
        %s784 = smul.addr %s783, 4
        %s785 = scalar_lea.vmem %s3, %s784
        // Predicated region
        $region67: #{transformer_forward.15} parent=53 // pred_check
          %p786 = pneg %p137
        $region68: #{transformer_forward.15} parent=53 // pred_check_branch
          %788 = sbr.rel (%p786) target = $region70
        $region69: #{transformer_forward.15} parent=53 // pred_region
          %s789 = smul.u32 2, %s19
          %s790 = smul.u32 2, %s20
        $region70: #{transformer_forward.15} parent=53 // pred_fallthru
          _
        // Predicated region
        $region71: #{transformer_forward.15} parent=53 // pred_check
          %p791 = pneg %p137
        $region72: #{transformer_forward.15} parent=53 // pred_check_branch
          %793 = sbr.rel (%p791) target = $region74
        $region73: #{transformer_forward.15} parent=53 // pred_region
          %s794 = smul.u32 2, %s19
          %s795 = smul.u32 2, %s20
          %p796 = scmp.lt.s32.totalorder %s794, 1
          %s797 = scalar_select %p796, %s794, 1
          %p798 = scmp.lt.s32.totalorder %s795, 1
          %s799 = scalar_select %p798, %s795, 1
          %s800 = smul.addr %s797, 2
          %s801 = sadd.s32 %s799, %s800
          %s802 = smul.addr %s801, 4
          %s803 = scalar_lea.vmem %s3, %s802
        $region74: #{transformer_forward.15} parent=53 // pred_fallthru
          _
      $region54: #{transformer_forward.15} parent=5 // pred_fallthru
        _
      %p804 = scmp.le.s32.totalorder 2, %s9
      // Predicated region
      $region75: #{transformer_forward.15} parent=5 // pred_check
        %p805 = pneg %p804
      $region76: #{transformer_forward.15} parent=5 // pred_check_branch
        %807 = sbr.rel (%p805) target = $region78
      $region77: #{transformer_forward.15} parent=5 // pred_region
        %s808 = ssub.s32 %s9, 2
      $region78: #{transformer_forward.15} parent=5 // pred_fallthru
        _
    $region6: #{transformer_forward.15} parent=1 // loop_footer
      %s13 = sadd.s32 1, %s9
    $region7: #{transformer_forward.15} parent=1 // loop_footer_branch
      %8 = sbr.rel target = $region3
    $region8: #{transformer_forward.15} parent=1 // loop_exit
      _

// kernel: transformer_forward.16
$region0: #{transformer_forward.16}
  #allocation0 [shape = 'u32[]', space=smem, size = 0x4, offset = 0x4, fixed_abs, tag = 'smem constant byte address 0x4 - core index']
  #allocation1 [shape = 'u32[144,128]{1,0:T(1,128)}', space=vmem, size = 0x12000, scoped, tag = 'internal scratch']
  #allocation2 [shape = 'bf16[16,256]{1,0:T(8,128)(2,1)}', space=vmem, size = 0x2000, scoped, tag = 'scratch operand']
  %s0 = inlined_call_operand.vmem [shape: bf16[16,256], index: 0, kind: input, shape index: {}]
  %s1 = inlined_call_operand.vmem [shape: bf16[1,256], index: 1, kind: input, shape index: {}]
  %s2 = inlined_call_operand.vmem [shape: bf16[256,768], index: 2, kind: input, shape index: {}]
  %s3 = inlined_call_operand.vmem [shape: bf16[16,768], index: 3, kind: output, shape index: {}]
  %s4 = sld [smem:[#allocation0]]
  $region97: #{transformer_forward.16} parent=0
    _
  %s6 = ssub.s32 1, %s4
  %s7 = scalar_select 0, %s6, %s4
  $region1: #{transformer_forward.16} parent=0
    #allocation3 [shape = 'u8[393216]{0}', space=vmem, size = 0x60000, scoped, tag = 'input window, operand 2']
    #allocation4 [shape = 'u8[24576]{0}', space=vmem, size = 0x6000, scoped, tag = 'output window, operand 0']
    loop: start=0, step=1, limit=4
    $region2: #{transformer_forward.16} parent=1 // loop_pre_header
      _
    $region3: #{transformer_forward.16} parent=1 // loop_header
      %s9 = sphi 0, %s13
      %p10 = scmp.ge.s32.totalorder %s9, 4
      %s16 = sphi 0, %s28
      %s17 = sphi 0, %s24
      %s18 = sphi 0, %s16
      %s19 = sphi 0, %s17
      %s20 = sphi 0, %s18
      %s21 = sphi 0, %s19
      %s31 = sphi 0, %s33
      %s34 = sphi 0, %s31
      %s35 = sphi 0, %s34
      %s51 = sphi 0, %s35
      %s55 = sphi 0, %s55
      %s57 = sphi 0, %s55
      %s58 = sphi 0, %s57
      %s72 = sphi 0, %s58
      %s78 = sphi 0, %s80
      %s81 = sphi 0, %s78
      %s82 = sphi 0, %s81
      %s98 = sphi 0, %s82
      %s106 = sphi 0, %s108
      %s109 = sphi 0, %s106
      %s110 = sphi 0, %s109
      %s126 = sphi 0, %s110
    $region4: #{transformer_forward.16} parent=1 // loop_header_branch
      %12 = sbr.rel (%p10) target = $region8
    $region5: #{transformer_forward.16} parent=1 // loop_body
      %s14 = ssub.s32 %s9, 1
      %s15 = ssub.s32 %s9, 2
      %s22 = sadd.s32 1, %s17
      %p23 = scmp.ge.s32.totalorder %s22, 2
      %s24 = scalar_select %p23, 0, %s22
      %s25 = sadd.s32 1, %s16
      %s26 = scalar_select %p23, %s25, %s16
      %p27 = scmp.ge.s32.totalorder %s26, 1
      %s28 = scalar_select %p27, 0, %s26
      %s29 = ssub.s32 %s16, %s28
      %p30 = scmp.eq.s32.totalorder %s29, 0
      %s32 = sadd.s32 %s31, 1
      %s33 = scalar_select %p30, %s31, %s32
      %p36 = pneg %p30
      %p37 = scmp.eq.s32.totalorder %s9, 1
      %p38 = por %p36, %p37
      %p39 = scmp.ne.s32.totalorder %s31, %s34
      %p40 = scmp.eq.s32.totalorder %s9, 0
      %p41 = por %p39, %p40
      %p42 = scmp.ne.s32.totalorder %s31, %s34
      %p43 = scmp.eq.s32.totalorder %s14, 1
      %p44 = por %p42, %p43
      %p45 = scmp.ne.s32.totalorder %s34, %s35
      %p46 = scmp.eq.s32.totalorder %s14, 0
      %p47 = por %p45, %p46
      %p48 = scmp.ne.s32.totalorder %s34, %s35
      %p49 = scmp.eq.s32.totalorder %s15, 1
      %p50 = por %p48, %p49
      %p52 = scmp.ne.s32.totalorder %s35, %s51
      %p53 = scmp.eq.s32.totalorder %s15, 0
      %p54 = por %p52, %p53
      %s56 = sadd.s32 %s55, 1
      %p59 = scmp.eq.s32.totalorder %s9, 1
      %p60 = scmp.ne.s32.totalorder %s55, %s57
      %p61 = scmp.eq.s32.totalorder %s9, 0
      %p62 = por %p60, %p61
      %p63 = scmp.ne.s32.totalorder %s55, %s57
      %p64 = scmp.eq.s32.totalorder %s14, 1
      %p65 = por %p63, %p64
      %p66 = scmp.ne.s32.totalorder %s57, %s58
      %p67 = scmp.eq.s32.totalorder %s14, 0
      %p68 = por %p66, %p67
      %p69 = scmp.ne.s32.totalorder %s57, %s58
      %p70 = scmp.eq.s32.totalorder %s15, 1
      %p71 = por %p69, %p70
      %p73 = scmp.ne.s32.totalorder %s58, %s72
      %p74 = scmp.eq.s32.totalorder %s15, 0
      %p75 = por %p73, %p74
      %s76 = ssub.s32 %s17, %s24
      %p77 = scmp.eq.s32.totalorder %s76, 0
      %s79 = sadd.s32 %s78, 1
      %s80 = scalar_select %p77, %s78, %s79
      %p83 = pneg %p77
      %p84 = scmp.eq.s32.totalorder %s9, 1
      %p85 = por %p83, %p84
      %p86 = scmp.ne.s32.totalorder %s78, %s81
      %p87 = scmp.eq.s32.totalorder %s9, 0
      %p88 = por %p86, %p87
      %p89 = scmp.ne.s32.totalorder %s78, %s81
      %p90 = scmp.eq.s32.totalorder %s14, 1
      %p91 = por %p89, %p90
      %p92 = scmp.ne.s32.totalorder %s81, %s82
      %p93 = scmp.eq.s32.totalorder %s14, 0
      %p94 = por %p92, %p93
      %p95 = scmp.ne.s32.totalorder %s81, %s82
      %p96 = scmp.eq.s32.totalorder %s15, 1
      %p97 = por %p95, %p96
      %p99 = scmp.ne.s32.totalorder %s82, %s98
      %p100 = scmp.eq.s32.totalorder %s15, 0
      %p101 = por %p99, %p100
      %s102 = ssub.s32 %s16, %s28
      %s103 = ssub.s32 %s17, %s24
      %s104 = sor.u32 %s102, %s103
      %p105 = scmp.eq.s32.totalorder %s104, 0
      %s107 = sadd.s32 %s106, 1
      %s108 = scalar_select %p105, %s106, %s107
      %p111 = pneg %p105
      %p112 = scmp.eq.s32.totalorder %s9, 1
      %p113 = por %p111, %p112
      %p114 = scmp.ne.s32.totalorder %s106, %s109
      %p115 = scmp.eq.s32.totalorder %s9, 0
      %p116 = por %p114, %p115
      %p117 = scmp.ne.s32.totalorder %s106, %s109
      %p118 = scmp.eq.s32.totalorder %s14, 1
      %p119 = por %p117, %p118
      %p120 = scmp.ne.s32.totalorder %s109, %s110
      %p121 = scmp.eq.s32.totalorder %s14, 0
      %p122 = por %p120, %p121
      %p123 = scmp.ne.s32.totalorder %s109, %s110
      %p124 = scmp.eq.s32.totalorder %s15, 1
      %p125 = por %p123, %p124
      %p127 = scmp.ne.s32.totalorder %s110, %s126
      %p128 = scmp.eq.s32.totalorder %s15, 0
      %p129 = por %p127, %p128
      %p130 = scmp.le.s32.totalorder 1, %s9
      %p131 = scmp.lt.s32.totalorder %s9, 3
      %p132 = pnand %p130, %p131
      %p133 = pneg %p132
      // Predicated region
      $region9: #{transformer_forward.16} parent=5 // pred_check
        _
      $region10: #{transformer_forward.16} parent=5 // pred_check_branch
        %135 = sbr.rel (%p132) target = $region12
      $region11: #{transformer_forward.16} parent=5 // pred_region
        %s136 = ssub.s32 %s9, 1
        // Predicated region
        $region13: #{transformer_forward.16} parent=11 // pred_check
          %p137 = pneg %p47
        $region14: #{transformer_forward.16} parent=11 // pred_check_branch
          %139 = sbr.rel (%p137) target = $region16
        $region15: #{transformer_forward.16} parent=11 // pred_region
          %s140 = smul.u32 2, %s18
          %p141 = scmp.lt.s32.totalorder %s140, 1
          %s142 = scalar_select %p141, %s140, 1
          %s143 = smul.addr %s142, 2
          %s144 = smul.addr %s143, 4
          %s145 = scalar_lea.vmem %s0, %s144
          %s146 = smul.u32 2, %s18
        $region16: #{transformer_forward.16} parent=11 // pred_fallthru
          _
        // Predicated region
        $region17: #{transformer_forward.16} parent=11 // pred_check
          %p147 = pneg %p68
        $region18: #{transformer_forward.16} parent=11 // pred_check_branch
          %149 = sbr.rel (%p147) target = $region20
        $region19: #{transformer_forward.16} parent=11 // pred_region
          _
        $region20: #{transformer_forward.16} parent=11 // pred_fallthru
          _
      $region12: #{transformer_forward.16} parent=5 // pred_fallthru
        _
      %p150 = scmp.lt.s32.totalorder %s9, 2
      // Predicated region
      $region21: #{transformer_forward.16} parent=5 // pred_check
        %p151 = pneg %p150
      $region22: #{transformer_forward.16} parent=5 // pred_check_branch
        %153 = sbr.rel (%p151) target = $region24
      $region23: #{transformer_forward.16} parent=5 // pred_region
        // Predicated region
        $region25: #{transformer_forward.16} parent=23 // pred_check
          %p154 = pneg %p88
        $region26: #{transformer_forward.16} parent=23 // pred_check_branch
          %156 = sbr.rel (%p154) target = $region28
        $region27: #{transformer_forward.16} parent=23 // pred_region
          %s157 = sand.u32 %s78, 1
          %s158 = sand.u32 %s78, 1
          %s159 = smul.addr %s158, 384
          %s160 = scalar_lea.vmem [#allocation3], %s159
          %s161 = smul.u32 3, %s17
          %s162 = smul.addr %s161, 4
          %s163 = scalar_lea.vmem %s2, %s162
          // Predicated region
          $region29: #{transformer_forward.16} parent=27 // pred_check
            _
          $region30: #{transformer_forward.16} parent=27 // pred_check_branch
            %165 = sbr.rel (0) target = $region32
          $region31: #{transformer_forward.16} parent=27 // pred_region
            // Predicated region
            $region33: #{transformer_forward.16} parent=31 // pred_check
              _
            $region34: #{transformer_forward.16} parent=31 // pred_check_branch
              %167 = sbr.rel (0) target = $region36
            $region35: #{transformer_forward.16} parent=31 // pred_region
              %s168 = scalar_lea.vmem %s163, 8
              %s169 = scalar_lea.vmem %s160, 8 [#allocation3]
              loop: start=0, step=1, limit=1
              $region37: #{transformer_forward.16} parent=35 // loop_pre_header
                _
              $region38: #{transformer_forward.16} parent=35 // loop_header
                %s171 = sphi 0, %s175
                %p172 = scmp.ge.s32.totalorder %s171, 1
                %s176 = sphi %s163, %s163
                %s177 = sphi %s160, %s160
              $region39: #{transformer_forward.16} parent=35 // loop_header_branch
                %174 = sbr.rel (%p172) target = $region43
              $region40: #{transformer_forward.16} parent=35 // loop_body
                %v178 = vld [vmem:[%s176] sm:$0xff]
                %179 = vst [vmem:[%s177] sm:$0xff] %v178
                %v180 = vld [vmem:[%s176 + $0x18] sm:$0xff]
                %181 = vst [vmem:[%s177 + $0xc] sm:$0xff] %v180
                %v182 = vld [vmem:[%s176 + $0x30] sm:$0xff]
                %183 = vst [vmem:[%s177 + $0x18] sm:$0xff] %v182
                %v184 = vld [vmem:[%s176 + $0x48] sm:$0xff]
                %185 = vst [vmem:[%s177 + $0x24] sm:$0xff] %v184
                %v186 = vld [vmem:[%s176 + $0x60] sm:$0xff]
                %187 = vst [vmem:[%s177 + $0x30] sm:$0xff] %v186
                %v188 = vld [vmem:[%s176 + $0x78] sm:$0xff]
                %189 = vst [vmem:[%s177 + $0x3c] sm:$0xff] %v188
                %v190 = vld [vmem:[%s176 + $0x90] sm:$0xff]
                %191 = vst [vmem:[%s177 + $0x48] sm:$0xff] %v190
                %v192 = vld [vmem:[%s176 + $0xa8] sm:$0xff]
                %193 = vst [vmem:[%s177 + $0x54] sm:$0xff] %v192
                %v194 = vld [vmem:[%s176 + $0xc0] sm:$0xff]
                %195 = vst [vmem:[%s177 + $0x60] sm:$0xff] %v194
                %v196 = vld [vmem:[%s176 + $0xd8] sm:$0xff]
                %197 = vst [vmem:[%s177 + $0x6c] sm:$0xff] %v196
                %v198 = vld [vmem:[%s176 + $0xf0] sm:$0xff]
                %199 = vst [vmem:[%s177 + $0x78] sm:$0xff] %v198
                %v200 = vld [vmem:[%s176 + $0x108] sm:$0xff]
                %201 = vst [vmem:[%s177 + $0x84] sm:$0xff] %v200
                %v202 = vld [vmem:[%s176 + $0x120] sm:$0xff]
                %203 = vst [vmem:[%s177 + $0x90] sm:$0xff] %v202
                %v204 = vld [vmem:[%s176 + $0x138] sm:$0xff]
                %205 = vst [vmem:[%s177 + $0x9c] sm:$0xff] %v204
                %v206 = vld [vmem:[%s176 + $0x150] sm:$0xff]
                %207 = vst [vmem:[%s177 + $0xa8] sm:$0xff] %v206
                %v208 = vld [vmem:[%s176 + $0x168] sm:$0xff]
                %209 = vst [vmem:[%s177 + $0xb4] sm:$0xff] %v208
                %v210 = vld [vmem:[%s176 + $0x180] sm:$0xff]
                %211 = vst [vmem:[%s177 + $0xc0] sm:$0xff] %v210
                %v212 = vld [vmem:[%s176 + $0x198] sm:$0xff]
                %213 = vst [vmem:[%s177 + $0xcc] sm:$0xff] %v212
                %v214 = vld [vmem:[%s176 + $0x1b0] sm:$0xff]
                %215 = vst [vmem:[%s177 + $0xd8] sm:$0xff] %v214
                %v216 = vld [vmem:[%s176 + $0x1c8] sm:$0xff]
                %217 = vst [vmem:[%s177 + $0xe4] sm:$0xff] %v216
                %v218 = vld [vmem:[%s176 + $0x1e0] sm:$0xff]
                %219 = vst [vmem:[%s177 + $0xf0] sm:$0xff] %v218
                %v220 = vld [vmem:[%s176 + $0x1f8] sm:$0xff]
                %221 = vst [vmem:[%s177 + $0xfc] sm:$0xff] %v220
                %v222 = vld [vmem:[%s176 + $0x210] sm:$0xff]
                %223 = vst [vmem:[%s177 + $0x108] sm:$0xff] %v222
                %v224 = vld [vmem:[%s176 + $0x228] sm:$0xff]
                %225 = vst [vmem:[%s177 + $0x114] sm:$0xff] %v224
                %v226 = vld [vmem:[%s176 + $0x240] sm:$0xff]
                %227 = vst [vmem:[%s177 + $0x120] sm:$0xff] %v226
                %v228 = vld [vmem:[%s176 + $0x258] sm:$0xff]
                %229 = vst [vmem:[%s177 + $0x12c] sm:$0xff] %v228
                %v230 = vld [vmem:[%s176 + $0x270] sm:$0xff]
                %231 = vst [vmem:[%s177 + $0x138] sm:$0xff] %v230
                %v232 = vld [vmem:[%s176 + $0x288] sm:$0xff]
                %233 = vst [vmem:[%s177 + $0x144] sm:$0xff] %v232
                %v234 = vld [vmem:[%s176 + $0x2a0] sm:$0xff]
                %235 = vst [vmem:[%s177 + $0x150] sm:$0xff] %v234
                %v236 = vld [vmem:[%s176 + $0x2b8] sm:$0xff]
                %237 = vst [vmem:[%s177 + $0x15c] sm:$0xff] %v236
                %v238 = vld [vmem:[%s176 + $0x2d0] sm:$0xff]
                %239 = vst [vmem:[%s177 + $0x168] sm:$0xff] %v238
                %v240 = vld [vmem:[%s176 + $0x2e8] sm:$0xff]
                %241 = vst [vmem:[%s177 + $0x174] sm:$0xff] %v240
              $region41: #{transformer_forward.16} parent=35 // loop_footer
                %s175 = sadd.s32 1, %s171
              $region42: #{transformer_forward.16} parent=35 // loop_footer_branch
                %170 = sbr.rel target = $region38
              $region43: #{transformer_forward.16} parent=35 // loop_exit
                _
              %s243 = ssub.s32 16, 1
              loop: start=0, step=1, limit=1
              $region44: #{transformer_forward.16} parent=35 // loop_pre_header
                _
              $region45: #{transformer_forward.16} parent=35 // loop_header
                %s245 = sphi 0, %s249
                %p246 = scmp.ge.s32.totalorder %s245, 1
                %s250 = sphi %s168, %s168
                %s251 = sphi %s169, %s169
              $region46: #{transformer_forward.16} parent=35 // loop_header_branch
                %248 = sbr.rel (%p246) target = $region50
              $region47: #{transformer_forward.16} parent=35 // loop_body
                %v252 = vld [vmem:[%s250] sm:%s243]
                %253 = vst [vmem:[%s251] sm:%s243] %v252
                %v254 = vld [vmem:[%s250 + $0x18] sm:%s243]
                %255 = vst [vmem:[%s251 + $0xc] sm:%s243] %v254
                %v256 = vld [vmem:[%s250 + $0x30] sm:%s243]
                %257 = vst [vmem:[%s251 + $0x18] sm:%s243] %v256
                %v258 = vld [vmem:[%s250 + $0x48] sm:%s243]
                %259 = vst [vmem:[%s251 + $0x24] sm:%s243] %v258
                %v260 = vld [vmem:[%s250 + $0x60] sm:%s243]
                %261 = vst [vmem:[%s251 + $0x30] sm:%s243] %v260
                %v262 = vld [vmem:[%s250 + $0x78] sm:%s243]
                %263 = vst [vmem:[%s251 + $0x3c] sm:%s243] %v262
                %v264 = vld [vmem:[%s250 + $0x90] sm:%s243]
                %265 = vst [vmem:[%s251 + $0x48] sm:%s243] %v264
                %v266 = vld [vmem:[%s250 + $0xa8] sm:%s243]
                %267 = vst [vmem:[%s251 + $0x54] sm:%s243] %v266
                %v268 = vld [vmem:[%s250 + $0xc0] sm:%s243]
                %269 = vst [vmem:[%s251 + $0x60] sm:%s243] %v268
                %v270 = vld [vmem:[%s250 + $0xd8] sm:%s243]
                %271 = vst [vmem:[%s251 + $0x6c] sm:%s243] %v270
                %v272 = vld [vmem:[%s250 + $0xf0] sm:%s243]
                %273 = vst [vmem:[%s251 + $0x78] sm:%s243] %v272
                %v274 = vld [vmem:[%s250 + $0x108] sm:%s243]
                %275 = vst [vmem:[%s251 + $0x84] sm:%s243] %v274
                %v276 = vld [vmem:[%s250 + $0x120] sm:%s243]
                %277 = vst [vmem:[%s251 + $0x90] sm:%s243] %v276
                %v278 = vld [vmem:[%s250 + $0x138] sm:%s243]
                %279 = vst [vmem:[%s251 + $0x9c] sm:%s243] %v278
                %v280 = vld [vmem:[%s250 + $0x150] sm:%s243]
                %281 = vst [vmem:[%s251 + $0xa8] sm:%s243] %v280
                %v282 = vld [vmem:[%s250 + $0x168] sm:%s243]
                %283 = vst [vmem:[%s251 + $0xb4] sm:%s243] %v282
                %v284 = vld [vmem:[%s250 + $0x180] sm:%s243]
                %285 = vst [vmem:[%s251 + $0xc0] sm:%s243] %v284
                %v286 = vld [vmem:[%s250 + $0x198] sm:%s243]
                %287 = vst [vmem:[%s251 + $0xcc] sm:%s243] %v286
                %v288 = vld [vmem:[%s250 + $0x1b0] sm:%s243]
                %289 = vst [vmem:[%s251 + $0xd8] sm:%s243] %v288
                %v290 = vld [vmem:[%s250 + $0x1c8] sm:%s243]
                %291 = vst [vmem:[%s251 + $0xe4] sm:%s243] %v290
                %v292 = vld [vmem:[%s250 + $0x1e0] sm:%s243]
                %293 = vst [vmem:[%s251 + $0xf0] sm:%s243] %v292
                %v294 = vld [vmem:[%s250 + $0x1f8] sm:%s243]
                %295 = vst [vmem:[%s251 + $0xfc] sm:%s243] %v294
                %v296 = vld [vmem:[%s250 + $0x210] sm:%s243]
                %297 = vst [vmem:[%s251 + $0x108] sm:%s243] %v296
                %v298 = vld [vmem:[%s250 + $0x228] sm:%s243]
                %299 = vst [vmem:[%s251 + $0x114] sm:%s243] %v298
                %v300 = vld [vmem:[%s250 + $0x240] sm:%s243]
                %301 = vst [vmem:[%s251 + $0x120] sm:%s243] %v300
                %v302 = vld [vmem:[%s250 + $0x258] sm:%s243]
                %303 = vst [vmem:[%s251 + $0x12c] sm:%s243] %v302
                %v304 = vld [vmem:[%s250 + $0x270] sm:%s243]
                %305 = vst [vmem:[%s251 + $0x138] sm:%s243] %v304
                %v306 = vld [vmem:[%s250 + $0x288] sm:%s243]
                %307 = vst [vmem:[%s251 + $0x144] sm:%s243] %v306
                %v308 = vld [vmem:[%s250 + $0x2a0] sm:%s243]
                %309 = vst [vmem:[%s251 + $0x150] sm:%s243] %v308
                %v310 = vld [vmem:[%s250 + $0x2b8] sm:%s243]
                %311 = vst [vmem:[%s251 + $0x15c] sm:%s243] %v310
                %v312 = vld [vmem:[%s250 + $0x2d0] sm:%s243]
                %313 = vst [vmem:[%s251 + $0x168] sm:%s243] %v312
                %v314 = vld [vmem:[%s250 + $0x2e8] sm:%s243]
                %315 = vst [vmem:[%s251 + $0x174] sm:%s243] %v314
              $region48: #{transformer_forward.16} parent=35 // loop_footer
                %s249 = sadd.s32 1, %s245
              $region49: #{transformer_forward.16} parent=35 // loop_footer_branch
                %244 = sbr.rel target = $region45
              $region50: #{transformer_forward.16} parent=35 // loop_exit
                _
            $region36: #{transformer_forward.16} parent=31 // pred_fallthru
              _
          $region32: #{transformer_forward.16} parent=27 // pred_fallthru
            _
          %316 = vnop
        $region28: #{transformer_forward.16} parent=23 // pred_fallthru
          _
      $region24: #{transformer_forward.16} parent=5 // pred_fallthru
        _
      %p317 = scmp.le.s32.totalorder 1, %s9
      %p318 = scmp.lt.s32.totalorder %s9, 3
      %p319 = pnand %p317, %p318
      %p320 = pneg %p319
      // Predicated region
      $region51: #{transformer_forward.16} parent=5 // pred_check
        _
      $region52: #{transformer_forward.16} parent=5 // pred_check_branch
        %322 = sbr.rel (%p319) target = $region54
      $region53: #{transformer_forward.16} parent=5 // pred_region
        %s323 = ssub.s32 %s9, 1
        %s324 = sand.u32 %s81, 1
        %s325 = sand.u32 %s81, 1
        %s326 = smul.addr %s325, 384
        %s327 = scalar_lea.vmem [#allocation3], %s326
        // Predicated region
        $region55: #{transformer_forward.16} parent=53 // pred_check
          %p328 = pneg %p94
        $region56: #{transformer_forward.16} parent=53 // pred_check_branch
          %330 = sbr.rel (%p328) target = $region58
        $region57: #{transformer_forward.16} parent=53 // pred_region
          _
        $region58: #{transformer_forward.16} parent=53 // pred_fallthru
          _
        %s331 = smul.u32 2, %s18
        %p332 = scmp.lt.s32.totalorder %s331, 1
        %s333 = scalar_select %p332, %s331, 1
        %s334 = smul.addr %s333, 2
        %s335 = smul.addr %s334, 4
        %s336 = scalar_lea.vmem %s0, %s335
        %p337 = pneg %p47
        %p338 = pneg %p44
        %p339 = pneg %p68
        %p340 = pneg %p65
        %s341 = sand.u32 %s81, 1
        %s342 = sand.u32 %s81, 1
        %s343 = smul.addr %s342, 384
        %s344 = scalar_lea.vmem [#allocation3], %s343
        %p345 = pneg %p94
        %p346 = pneg %p91
        %p347 = pneg %p122
        %p348 = pneg %p119
        %s349 = sand.u32 %s109, 1
        %s350 = sand.u32 %s109, 1
        %s351 = smul.addr %s350, 24
        %s352 = scalar_lea.vmem [#allocation4], %s351
        %s353 = smul.u32 2, %s18
        %p354 = scmp.lt.s32.totalorder %s353, 1
        %s355 = scalar_select %p354, %s353, 1
        %s356 = smul.addr %s355, 2
        %s357 = smul.addr %s356, 4
        %s358 = scalar_lea.vmem %s0, %s357
        %s359 = smul.u32 2, %s18
        %s360 = smul.u32 3, %s19
        %s361 = smul.u32 2, %s18
        %s362 = smul.u32 3, %s19
        %p364 = scmp.eq.s32.totalorder %s19, 0
        // Predicated region
        $region59: #{transformer_forward.16} parent=53 // pred_check
          %p365 = pneg %p364
        $region60: #{transformer_forward.16} parent=53 // pred_check_branch
          %367 = sbr.rel (%p365) target = $region62
        $region61: #{transformer_forward.16} parent=53 // pred_region
          %v368 = vld [vmem:[%s358] sm:$0xff]
          %v369 = vld [vmem:[%s358 + $0x8] sm:$0xff]
          %v370 = vunpack.c.l.bf16 %v368
          %v371 = vunpack.c.h.bf16 %v368
          %v372 = vunpack.c.l.bf16 %v369
          %v373 = vunpack.c.h.bf16 %v369
          %v374 = vmul.f32 %v370, %v370
          %v375 = vmul.f32 %v371, %v371
          %v376 = vmul.f32 %v372, %v372
          %v377 = vmul.f32 %v373, %v373
          %v378 = vadd.f32 %v374, %v375
          %379 = vadd.xlane.f32.xlu0 %v378
          %v380 = vpop.xlane.xlu0 %379
          %v381 = vadd.f32 %v376, %v377
          %382 = vadd.xlane.f32.xlu0 %v381
          %v383 = vpop.xlane.xlu0 %382
          %v384 = vrcp.pop 256.0
          %v385 = vmul.f32 %v380, %v384
          %v386 = vmul.f32 %v383, %v384
          %v387 = vadd.f32 %v385, 1e-06
          %v388 = vadd.f32 %v386, 1e-06
          %v389 = vrsqrt.pop %v387
          %v390 = vrsqrt.pop %v388
          %v391 = vmul.f32 %v370, %v389
          %v392 = vmul.f32 %v371, %v389
          %v393 = vmul.f32 %v372, %v390
          %v394 = vmul.f32 %v373, %v390
          %v395 = vpack.c.bf16 %v393, %v391
          %v396 = vpack.c.bf16 %v394, %v392
          %v397 = vld [vmem:[%s1] sm:$0x3]
          %v400 = vunpack.c.l.s4 1966171168
          %v401 = vunpack.c.0.s8 %v400
          %v402 = vlaneseq
          %v403 = vshrl.u32 %v402, 7
          %v404 = vsub.s32 %v401, %v403
          %v405 = vrot.slane %v397, %v404
          %v406 = vcombine.high %v405, %v405
          %v408 = vunpack.c.l.s4 1966171168
          %v409 = vunpack.c.0.s8 %v408
          %v410 = vlaneseq
          %v411 = vshrl.u32 %v410, 7
          %v412 = vsub.s32 %v409, %v411
          %v413 = vrot.slane %v405, %v412
          %v415 = vunpack.c.l.s4 1966171168
          %v416 = vunpack.c.0.s8 %v415
          %v417 = vlaneseq
          %v418 = vshrl.u32 %v417, 7
          %v419 = vsub.s32 %v416, %v418
          %v420 = vrot.slane %v406, %v419
          %v422 = vpack.i.b16 %v413, %v413
          %v424 = vlaneseq
          %v425 = vshrl.u32 %v424, 7
          %v426 = vsub.s32 0, %v425
          %v427 = vrot.slane %v422, %v426
          %v429 = vpack.i.b16 %v420, %v420
          %v431 = vlaneseq
          %v432 = vshrl.u32 %v431, 7
          %v433 = vsub.s32 0, %v432
          %v434 = vrot.slane %v429, %v433
          %v435 = vmul.bf16 %v395, %v427
          %v436 = vmul.bf16 %v396, %v434
          %v439 = vunpack.c.l.b16 %v435
          %v440 = vunpack.c.l.b16 %v436
          %v441 = vunpack.c.h.b16 %v435
          %v442 = vunpack.c.h.b16 %v436
          %v443 = vpack.c.b16 %v440, %v439
          %v444 = vpack.c.b16 %v442, %v441
          %447 = vst [vmem:[#allocation2] sm:$0xff] %v443
          %448 = vst [vmem:[#allocation2 + $0x8] sm:$0xff] %v444
        $region62: #{transformer_forward.16} parent=53 // pred_fallthru
          _
        %v449 = vld [vmem:[#allocation2] sm:$0xff]
        %v450 = vld [vmem:[#allocation2 + $0x8] sm:$0xff]
        %v451 = vld [vmem:[%s327] sm:$0xff]
        %v452 = vld [vmem:[%s327 + $0x8] sm:$0xf]
        %v453 = vld [vmem:[%s327 + $0xc] sm:$0xff]
        %v454 = vld [vmem:[%s327 + $0x14] sm:$0xf]
        %v455 = vld [vmem:[%s327 + $0x18] sm:$0xff]
        %v456 = vld [vmem:[%s327 + $0x20] sm:$0xf]
        %v457 = vld [vmem:[%s327 + $0x24] sm:$0xff]
        %v458 = vld [vmem:[%s327 + $0x2c] sm:$0xf]
        %v459 = vld [vmem:[%s327 + $0x30] sm:$0xff]
        %v460 = vld [vmem:[%s327 + $0x38] sm:$0xf]
        %v461 = vld [vmem:[%s327 + $0x3c] sm:$0xff]
        %v462 = vld [vmem:[%s327 + $0x44] sm:$0xf]
        %v463 = vld [vmem:[%s327 + $0x48] sm:$0xff]
        %v464 = vld [vmem:[%s327 + $0x50] sm:$0xf]
        %v465 = vld [vmem:[%s327 + $0x54] sm:$0xff]
        %v466 = vld [vmem:[%s327 + $0x5c] sm:$0xf]
        %v467 = vld [vmem:[%s327 + $0x60] sm:$0xff]
        %v468 = vld [vmem:[%s327 + $0x68] sm:$0xf]
        %v469 = vld [vmem:[%s327 + $0x6c] sm:$0xff]
        %v470 = vld [vmem:[%s327 + $0x74] sm:$0xf]
        %v471 = vld [vmem:[%s327 + $0x78] sm:$0xff]
        %v472 = vld [vmem:[%s327 + $0x80] sm:$0xf]
        %v473 = vld [vmem:[%s327 + $0x84] sm:$0xff]
        %v474 = vld [vmem:[%s327 + $0x8c] sm:$0xf]
        %v475 = vld [vmem:[%s327 + $0x90] sm:$0xff]
        %v476 = vld [vmem:[%s327 + $0x98] sm:$0xf]
        %v477 = vld [vmem:[%s327 + $0x9c] sm:$0xff]
        %v478 = vld [vmem:[%s327 + $0xa4] sm:$0xf]
        %v479 = vld [vmem:[%s327 + $0xa8] sm:$0xff]
        %v480 = vld [vmem:[%s327 + $0xb0] sm:$0xf]
        %v481 = vld [vmem:[%s327 + $0xb4] sm:$0xff]
        %v482 = vld [vmem:[%s327 + $0xbc] sm:$0xf]
        %v483 = vld [vmem:[%s327 + $0xc0] sm:$0xff]
        %v484 = vld [vmem:[%s327 + $0xc8] sm:$0xf]
        %v485 = vld [vmem:[%s327 + $0xcc] sm:$0xff]
        %v486 = vld [vmem:[%s327 + $0xd4] sm:$0xf]
        %v487 = vld [vmem:[%s327 + $0xd8] sm:$0xff]
        %v488 = vld [vmem:[%s327 + $0xe0] sm:$0xf]
        %v489 = vld [vmem:[%s327 + $0xe4] sm:$0xff]
        %v490 = vld [vmem:[%s327 + $0xec] sm:$0xf]
        %v491 = vld [vmem:[%s327 + $0xf0] sm:$0xff]
        %v492 = vld [vmem:[%s327 + $0xf8] sm:$0xf]
        %v493 = vld [vmem:[%s327 + $0xfc] sm:$0xff]
        %v494 = vld [vmem:[%s327 + $0x104] sm:$0xf]
        %v495 = vld [vmem:[%s327 + $0x108] sm:$0xff]
        %v496 = vld [vmem:[%s327 + $0x110] sm:$0xf]
        %v497 = vld [vmem:[%s327 + $0x114] sm:$0xff]
        %v498 = vld [vmem:[%s327 + $0x11c] sm:$0xf]
        %v499 = vld [vmem:[%s327 + $0x120] sm:$0xff]
        %v500 = vld [vmem:[%s327 + $0x128] sm:$0xf]
        %v501 = vld [vmem:[%s327 + $0x12c] sm:$0xff]
        %v502 = vld [vmem:[%s327 + $0x134] sm:$0xf]
        %v503 = vld [vmem:[%s327 + $0x138] sm:$0xff]
        %v504 = vld [vmem:[%s327 + $0x140] sm:$0xf]
        %v505 = vld [vmem:[%s327 + $0x144] sm:$0xff]
        %v506 = vld [vmem:[%s327 + $0x14c] sm:$0xf]
        %v507 = vld [vmem:[%s327 + $0x150] sm:$0xff]
        %v508 = vld [vmem:[%s327 + $0x158] sm:$0xf]
        %v509 = vld [vmem:[%s327 + $0x15c] sm:$0xff]
        %v510 = vld [vmem:[%s327 + $0x164] sm:$0xf]
        %v511 = vld [vmem:[%s327 + $0x168] sm:$0xff]
        %v512 = vld [vmem:[%s327 + $0x170] sm:$0xf]
        %v513 = vld [vmem:[%s327 + $0x174] sm:$0xff]
        %v514 = vld [vmem:[%s327 + $0x17c] sm:$0xf]
        %v517 = vunpack.c.l.b16 %v449
        %v518 = vunpack.c.h.b16 %v449
        %v519 = vunpack.c.l.b16 %v450
        %v520 = vunpack.c.h.b16 %v450
        %v521 = vpack.c.b16 %v519, %v517
        %v522 = vpack.c.b16 %v520, %v518
        %v589 = vunpack.c.l.b16 %v451
        %v590 = vunpack.c.h.b16 %v451
        %v591 = vunpack.c.l.b16 %v452
        %v592 = vunpack.c.l.b16 %v453
        %v593 = vunpack.c.h.b16 %v453
        %v594 = vunpack.c.l.b16 %v454
        %v595 = vunpack.c.l.b16 %v455
        %v596 = vunpack.c.h.b16 %v455
        %v597 = vunpack.c.l.b16 %v456
        %v598 = vunpack.c.l.b16 %v457
        %v599 = vunpack.c.h.b16 %v457
        %v600 = vunpack.c.l.b16 %v458
        %v601 = vunpack.c.l.b16 %v459
        %v602 = vunpack.c.h.b16 %v459
        %v603 = vunpack.c.l.b16 %v460
        %v604 = vunpack.c.l.b16 %v461
        %v605 = vunpack.c.h.b16 %v461
        %v606 = vunpack.c.l.b16 %v462
        %v607 = vunpack.c.l.b16 %v463
        %v608 = vunpack.c.h.b16 %v463
        %v609 = vunpack.c.l.b16 %v464
        %v610 = vunpack.c.l.b16 %v465
        %v611 = vunpack.c.h.b16 %v465
        %v612 = vunpack.c.l.b16 %v466
        %v613 = vunpack.c.l.b16 %v467
        %v614 = vunpack.c.h.b16 %v467
        %v615 = vunpack.c.l.b16 %v468
        %v616 = vunpack.c.l.b16 %v469
        %v617 = vunpack.c.h.b16 %v469
        %v618 = vunpack.c.l.b16 %v470
        %v619 = vunpack.c.l.b16 %v471
        %v620 = vunpack.c.h.b16 %v471
        %v621 = vunpack.c.l.b16 %v472
        %v622 = vunpack.c.l.b16 %v473
        %v623 = vunpack.c.h.b16 %v473
        %v624 = vunpack.c.l.b16 %v474
        %v625 = vunpack.c.l.b16 %v475
        %v626 = vunpack.c.h.b16 %v475
        %v627 = vunpack.c.l.b16 %v476
        %v628 = vunpack.c.l.b16 %v477
        %v629 = vunpack.c.h.b16 %v477
        %v630 = vunpack.c.l.b16 %v478
        %v631 = vunpack.c.l.b16 %v479
        %v632 = vunpack.c.h.b16 %v479
        %v633 = vunpack.c.l.b16 %v480
        %v634 = vunpack.c.l.b16 %v481
        %v635 = vunpack.c.h.b16 %v481
        %v636 = vunpack.c.l.b16 %v482
        %v637 = vunpack.c.l.b16 %v483
        %v638 = vunpack.c.h.b16 %v483
        %v639 = vunpack.c.l.b16 %v484
        %v640 = vunpack.c.l.b16 %v485
        %v641 = vunpack.c.h.b16 %v485
        %v642 = vunpack.c.l.b16 %v486
        %v643 = vunpack.c.l.b16 %v487
        %v644 = vunpack.c.h.b16 %v487
        %v645 = vunpack.c.l.b16 %v488
        %v646 = vunpack.c.l.b16 %v489
        %v647 = vunpack.c.h.b16 %v489
        %v648 = vunpack.c.l.b16 %v490
        %v649 = vunpack.c.l.b16 %v491
        %v650 = vunpack.c.h.b16 %v491
        %v651 = vunpack.c.l.b16 %v492
        %v652 = vunpack.c.l.b16 %v493
        %v653 = vunpack.c.h.b16 %v493
        %v654 = vunpack.c.l.b16 %v494
        %v655 = vunpack.c.l.b16 %v495
        %v656 = vunpack.c.h.b16 %v495
        %v657 = vunpack.c.l.b16 %v496
        %v658 = vunpack.c.l.b16 %v497
        %v659 = vunpack.c.h.b16 %v497
        %v660 = vunpack.c.l.b16 %v498
        %v661 = vunpack.c.l.b16 %v499
        %v662 = vunpack.c.h.b16 %v499
        %v663 = vunpack.c.l.b16 %v500
        %v664 = vunpack.c.l.b16 %v501
        %v665 = vunpack.c.h.b16 %v501
        %v666 = vunpack.c.l.b16 %v502
        %v667 = vunpack.c.l.b16 %v503
        %v668 = vunpack.c.h.b16 %v503
        %v669 = vunpack.c.l.b16 %v504
        %v670 = vunpack.c.l.b16 %v505
        %v671 = vunpack.c.h.b16 %v505
        %v672 = vunpack.c.l.b16 %v506
        %v673 = vunpack.c.l.b16 %v507
        %v674 = vunpack.c.h.b16 %v507
        %v675 = vunpack.c.l.b16 %v508
        %v676 = vunpack.c.l.b16 %v509
        %v677 = vunpack.c.h.b16 %v509
        %v678 = vunpack.c.l.b16 %v510
        %v679 = vunpack.c.l.b16 %v511
        %v680 = vunpack.c.h.b16 %v511
        %v681 = vunpack.c.l.b16 %v512
        %v682 = vunpack.c.l.b16 %v513
        %v683 = vunpack.c.h.b16 %v513
        %v684 = vunpack.c.l.b16 %v514
        %v685 = vpack.c.b16 %v592, %v589
        %v686 = vpack.c.b16 %v593, %v590
        %v687 = vpack.c.b16 %v594, %v591
        %v688 = vpack.c.b16 %v598, %v595
        %v689 = vpack.c.b16 %v599, %v596
        %v690 = vpack.c.b16 %v600, %v597
        %v691 = vpack.c.b16 %v604, %v601
        %v692 = vpack.c.b16 %v605, %v602
        %v693 = vpack.c.b16 %v606, %v603
        %v694 = vpack.c.b16 %v610, %v607
        %v695 = vpack.c.b16 %v611, %v608
        %v696 = vpack.c.b16 %v612, %v609
        %v697 = vpack.c.b16 %v616, %v613
        %v698 = vpack.c.b16 %v617, %v614
        %v699 = vpack.c.b16 %v618, %v615
        %v700 = vpack.c.b16 %v622, %v619
        %v701 = vpack.c.b16 %v623, %v620
        %v702 = vpack.c.b16 %v624, %v621
        %v703 = vpack.c.b16 %v628, %v625
        %v704 = vpack.c.b16 %v629, %v626
        %v705 = vpack.c.b16 %v630, %v627
        %v706 = vpack.c.b16 %v634, %v631
        %v707 = vpack.c.b16 %v635, %v632
        %v708 = vpack.c.b16 %v636, %v633
        %v709 = vpack.c.b16 %v640, %v637
        %v710 = vpack.c.b16 %v641, %v638
        %v711 = vpack.c.b16 %v642, %v639
        %v712 = vpack.c.b16 %v646, %v643
        %v713 = vpack.c.b16 %v647, %v644
        %v714 = vpack.c.b16 %v648, %v645
        %v715 = vpack.c.b16 %v652, %v649
        %v716 = vpack.c.b16 %v653, %v650
        %v717 = vpack.c.b16 %v654, %v651
        %v718 = vpack.c.b16 %v658, %v655
        %v719 = vpack.c.b16 %v659, %v656
        %v720 = vpack.c.b16 %v660, %v657
        %v721 = vpack.c.b16 %v664, %v661
        %v722 = vpack.c.b16 %v665, %v662
        %v723 = vpack.c.b16 %v666, %v663
        %v724 = vpack.c.b16 %v670, %v667
        %v725 = vpack.c.b16 %v671, %v668
        %v726 = vpack.c.b16 %v672, %v669
        %v727 = vpack.c.b16 %v676, %v673
        %v728 = vpack.c.b16 %v677, %v674
        %v729 = vpack.c.b16 %v678, %v675
        %v730 = vpack.c.b16 %v682, %v679
        %v731 = vpack.c.b16 %v683, %v680
        %v732 = vpack.c.b16 %v684, %v681
        %781 = vmatprep.subr.bf16.mxu0 %v707
        %782 = vmatpush1.bf16.msra.mxu0 %v706
        %783 = vmatprep.subr.bf16.mxu0 %v704
        %784 = vmatpush1.bf16.msra.mxu0 %v703
        %785 = vmatprep.subr.bf16.mxu0 %v701
        %786 = vmatpush1.bf16.msra.mxu0 %v700
        %787 = vmatprep.subr.bf16.mxu0 %v698
        %788 = vmatpush1.bf16.msra.mxu0 %v697
        %789 = vmatprep.subr.bf16.mxu0 %v695
        %790 = vmatpush1.bf16.msra.mxu0 %v694
        %791 = vmatprep.subr.bf16.mxu0 %v692
        %792 = vmatpush1.bf16.msra.mxu0 %v691
        %793 = vmatprep.subr.bf16.mxu0 %v689
        %794 = vmatpush1.bf16.msra.mxu0 %v688
        %795 = vmatprep.subr.bf16.mxu0 %v686
        %796 = vmatpush1.bf16.msra.mxu0 %v685
        %797 = vmatprep.subr.bf16.mxu0 %v731
        %798 = vmatpush2.bf16.msra.mxu0 %v730
        %799 = vmatprep.subr.bf16.mxu0 %v728
        %800 = vmatpush2.bf16.msra.mxu0 %v727
        %801 = vmatprep.subr.bf16.mxu0 %v725
        %802 = vmatpush2.bf16.msra.mxu0 %v724
        %803 = vmatprep.subr.bf16.mxu0 %v722
        %804 = vmatpush2.bf16.msra.mxu0 %v721
        %805 = vmatprep.subr.bf16.mxu0 %v719
        %806 = vmatpush2.bf16.msra.mxu0 %v718
        %807 = vmatprep.subr.bf16.mxu0 %v716
        %808 = vmatpush2.bf16.msra.mxu0 %v715
        %809 = vmatprep.subr.bf16.mxu0 %v713
        %810 = vmatpush2.bf16.msra.mxu0 %v712
        %811 = vmatprep.subr.bf16.mxu0 %v710
        %812 = vmatpush2.bf16.msra.mxu0 %v709
        %813 = vmatprep.mubr.bf16.mxu0 %v522
        %814 = vmatmul.mubr.bf16.gmra.mxu0 %v521
        %v815 = vpop.f32.mrf.mxu0
        %v816 = vadd.f32 0.0, %v815
        %v817 = vpop.f32.mrf.mxu0
        %v818 = vadd.f32 0.0, %v817
        %v819 = vpop.f32.mrf.mxu0
        %v820 = vadd.f32 0.0, %v819
        %v821 = vpop.f32.mrf.mxu0
        %v822 = vadd.f32 0.0, %v821
        %823 = vdwg.mxu0
        %824 = vmatprep.subr.bf16.mxu0 0
        %825 = vmatpush1.bf16.msra.mxu0 %v708
        %826 = vmatprep.subr.bf16.mxu0 0
        %827 = vmatpush1.bf16.msra.mxu0 %v705
        %828 = vmatprep.subr.bf16.mxu0 0
        %829 = vmatpush1.bf16.msra.mxu0 %v702
        %830 = vmatprep.subr.bf16.mxu0 0
        %831 = vmatpush1.bf16.msra.mxu0 %v699
        %832 = vmatprep.subr.bf16.mxu0 0
        %833 = vmatpush1.bf16.msra.mxu0 %v696
        %834 = vmatprep.subr.bf16.mxu0 0
        %835 = vmatpush1.bf16.msra.mxu0 %v693
        %836 = vmatprep.subr.bf16.mxu0 0
        %837 = vmatpush1.bf16.msra.mxu0 %v690
        %838 = vmatprep.subr.bf16.mxu0 0
        %839 = vmatpush1.bf16.msra.mxu0 %v687
        %840 = vmatprep.subr.bf16.mxu0 0
        %841 = vmatpush2.bf16.msra.mxu0 %v732
        %842 = vmatprep.subr.bf16.mxu0 0
        %843 = vmatpush2.bf16.msra.mxu0 %v729
        %844 = vmatprep.subr.bf16.mxu0 0
        %845 = vmatpush2.bf16.msra.mxu0 %v726
        %846 = vmatprep.subr.bf16.mxu0 0
        %847 = vmatpush2.bf16.msra.mxu0 %v723
        %848 = vmatprep.subr.bf16.mxu0 0
        %849 = vmatpush2.bf16.msra.mxu0 %v720
        %850 = vmatprep.subr.bf16.mxu0 0
        %851 = vmatpush2.bf16.msra.mxu0 %v717
        %852 = vmatprep.subr.bf16.mxu0 0
        %853 = vmatpush2.bf16.msra.mxu0 %v714
        %854 = vmatprep.subr.bf16.mxu0 0
        %855 = vmatpush2.bf16.msra.mxu0 %v711
        %856 = vmatprep.mubr.bf16.mxu0 %v522
        %857 = vmatmul.mubr.bf16.gmra.mxu0 %v521
        %v858 = vpop.f32.mrf.mxu0
        %v859 = vadd.f32 0.0, %v858
        %v860 = vpop.f32.mrf.mxu0
        %v861 = vpop.f32.mrf.mxu0
        %v862 = vadd.f32 0.0, %v861
        %v863 = vpop.f32.mrf.mxu0
        %864 = vdwg.mxu0
        %v865 = vpack.c.bf16 %v820, %v816
        %v866 = vpack.c.bf16 %v822, %v818
        %v867 = vpack.c.bf16 %v862, %v859
        %v871 = vunpack.c.l.b16 %v865
        %v872 = vunpack.c.l.b16 %v866
        %v873 = vunpack.c.l.b16 %v867
        %v874 = vunpack.c.h.b16 %v865
        %v875 = vunpack.c.h.b16 %v866
        %v876 = vunpack.c.h.b16 %v867
        %v877 = vpack.c.b16 %v872, %v871
        %v878 = vpack.c.b16 %v873, %v873
        %v879 = vpack.c.b16 %v875, %v874
        %v880 = vpack.c.b16 %v876, %v876
        %885 = vst [vmem:[%s352] sm:$0xff] %v877
        %886 = vst [vmem:[%s352 + $0x8] sm:$0xf] %v878
        %887 = vst [vmem:[%s352 + $0xc] sm:$0xff] %v879
        %888 = vst [vmem:[%s352 + $0x14] sm:$0xf] %v880
        %s889 = sand.u32 %s109, 1
        %s890 = sand.u32 %s109, 1
        %s891 = smul.addr %s890, 24
        %s892 = scalar_lea.vmem [#allocation4], %s891
        // Predicated region
        $region63: #{transformer_forward.16} parent=53 // pred_check
          %p893 = pneg %p119
        $region64: #{transformer_forward.16} parent=53 // pred_check_branch
          %895 = sbr.rel (%p893) target = $region66
        $region65: #{transformer_forward.16} parent=53 // pred_region
          %s896 = smul.u32 2, %s18
          %s897 = smul.u32 3, %s19
          %s898 = smul.addr %s896, 6
          %s899 = sadd.s32 %s897, %s898
          %s900 = smul.addr %s899, 4
          %s901 = scalar_lea.vmem %s3, %s900
          // Predicated region
          $region67: #{transformer_forward.16} parent=65 // pred_check
            _
          $region68: #{transformer_forward.16} parent=65 // pred_check_branch
            %903 = sbr.rel (0) target = $region70
          $region69: #{transformer_forward.16} parent=65 // pred_region
            // Predicated region
            $region71: #{transformer_forward.16} parent=69 // pred_check
              _
            $region72: #{transformer_forward.16} parent=69 // pred_check_branch
              %905 = sbr.rel (0) target = $region74
            $region73: #{transformer_forward.16} parent=69 // pred_region
              %s906 = scalar_lea.vmem %s892, 8 [#allocation4]
              %s907 = scalar_lea.vmem %s901, 8
              loop: start=0, step=1, limit=1
              $region75: #{transformer_forward.16} parent=73 // loop_pre_header
                _
              $region76: #{transformer_forward.16} parent=73 // loop_header
                %s909 = sphi 0, %s913
                %p910 = scmp.ge.s32.totalorder %s909, 1
                %s914 = sphi %s892, %s892
                %s915 = sphi %s901, %s901
              $region77: #{transformer_forward.16} parent=73 // loop_header_branch
                %912 = sbr.rel (%p910) target = $region81
              $region78: #{transformer_forward.16} parent=73 // loop_body
                %v916 = vld [vmem:[%s914] sm:$0xff]
                %917 = vst [vmem:[%s915] sm:$0xff] %v916
                %v918 = vld [vmem:[%s914 + $0xc] sm:$0xff]
                %919 = vst [vmem:[%s915 + $0x18] sm:$0xff] %v918
              $region79: #{transformer_forward.16} parent=73 // loop_footer
                %s913 = sadd.s32 1, %s909
              $region80: #{transformer_forward.16} parent=73 // loop_footer_branch
                %908 = sbr.rel target = $region76
              $region81: #{transformer_forward.16} parent=73 // loop_exit
                _
              %s921 = ssub.s32 16, 1
              loop: start=0, step=1, limit=1
              $region82: #{transformer_forward.16} parent=73 // loop_pre_header
                _
              $region83: #{transformer_forward.16} parent=73 // loop_header
                %s923 = sphi 0, %s927
                %p924 = scmp.ge.s32.totalorder %s923, 1
                %s928 = sphi %s906, %s906
                %s929 = sphi %s907, %s907
              $region84: #{transformer_forward.16} parent=73 // loop_header_branch
                %926 = sbr.rel (%p924) target = $region88
              $region85: #{transformer_forward.16} parent=73 // loop_body
                %v930 = vld [vmem:[%s928] sm:%s921]
                %931 = vst [vmem:[%s929] sm:%s921] %v930
                %v932 = vld [vmem:[%s928 + $0xc] sm:%s921]
                %933 = vst [vmem:[%s929 + $0x18] sm:%s921] %v932
              $region86: #{transformer_forward.16} parent=73 // loop_footer
                %s927 = sadd.s32 1, %s923
              $region87: #{transformer_forward.16} parent=73 // loop_footer_branch
                %922 = sbr.rel target = $region83
              $region88: #{transformer_forward.16} parent=73 // loop_exit
                _
            $region74: #{transformer_forward.16} parent=69 // pred_fallthru
              _
          $region70: #{transformer_forward.16} parent=65 // pred_fallthru
            _
          %934 = vnop
        $region66: #{transformer_forward.16} parent=53 // pred_fallthru
          _
      $region54: #{transformer_forward.16} parent=5 // pred_fallthru
        _
      %p935 = scmp.le.s32.totalorder 2, %s9
      // Predicated region
      $region89: #{transformer_forward.16} parent=5 // pred_check
        %p936 = pneg %p935
      $region90: #{transformer_forward.16} parent=5 // pred_check_branch
        %938 = sbr.rel (%p936) target = $region92
      $region91: #{transformer_forward.16} parent=5 // pred_region
        %s939 = ssub.s32 %s9, 2
        // Predicated region
        $region93: #{transformer_forward.16} parent=91 // pred_check
          %p940 = pneg %p125
        $region94: #{transformer_forward.16} parent=91 // pred_check_branch
          %942 = sbr.rel (%p940) target = $region96
        $region95: #{transformer_forward.16} parent=91 // pred_region
          %s943 = sand.u32 %s110, 1
          %s944 = sand.u32 %s110, 1
          %s945 = smul.addr %s944, 24
          %s946 = scalar_lea.vmem [#allocation4], %s945
        $region96: #{transformer_forward.16} parent=91 // pred_fallthru
          _
      $region92: #{transformer_forward.16} parent=5 // pred_fallthru
        _
    $region6: #{transformer_forward.16} parent=1 // loop_footer
      %s13 = sadd.s32 1, %s9
    $region7: #{transformer_forward.16} parent=1 // loop_footer_branch
      %8 = sbr.rel target = $region3
    $region8: #{transformer_forward.16} parent=1 // loop_exit
      _

// kernel: transformer_forward.18
$region0: #{transformer_forward.18}
  #allocation0 [shape = 'u32[]', space=smem, size = 0x4, offset = 0x4, fixed_abs, tag = 'smem constant byte address 0x4 - core index']
  #allocation1 [shape = 'u32[144,128]{1,0:T(1,128)}', space=vmem, size = 0x12000, scoped, tag = 'internal scratch']
  #allocation2 [shape = 'f32[16,256]{1,0:T(8,128)}', space=vmem, size = 0x4000, scoped, tag = 'scratch operand']
  %s0 = inlined_call_operand.vmem [shape: bf16[16,256], index: 0, kind: input, shape index: {}]
  %s1 = inlined_call_operand.vmem [shape: bf16[256,256], index: 1, kind: input, shape index: {}]
  %s2 = inlined_call_operand.vmem [shape: bf16[16,256], index: 2, kind: input, shape index: {}]
  %s3 = inlined_call_operand.vmem [shape: bf16[16,256], index: 3, kind: output, shape index: {}]
  %s4 = sld [smem:[#allocation0]]
  $region30: #{transformer_forward.18} parent=0
    _
  %s6 = ssub.s32 1, %s4
  %s7 = scalar_select 0, %s6, %s4
  // Predicated region
  $region2: #{transformer_forward.18} parent=0 // pred_check
    _
  $region3: #{transformer_forward.18} parent=0 // pred_check_branch
    %9 = sbr.rel (0) target = $region5
  $region4: #{transformer_forward.18} parent=0 // pred_region
    _
  $region5: #{transformer_forward.18} parent=0 // pred_fallthru
    _
  // Predicated region
  $region6: #{transformer_forward.18} parent=0 // pred_check
    _
  $region7: #{transformer_forward.18} parent=0 // pred_check_branch
    %11 = sbr.rel (0) target = $region9
  $region8: #{transformer_forward.18} parent=0 // pred_region
    _
  $region9: #{transformer_forward.18} parent=0 // pred_fallthru
    _
  // Predicated region
  $region10: #{transformer_forward.18} parent=0 // pred_check
    _
  $region11: #{transformer_forward.18} parent=0 // pred_check_branch
    %13 = sbr.rel (0) target = $region13
  $region12: #{transformer_forward.18} parent=0 // pred_region
    _
  $region13: #{transformer_forward.18} parent=0 // pred_fallthru
    _
  %p14 = scmp.eq.s32.totalorder 0, 0
  // Predicated region
  $region14: #{transformer_forward.18} parent=0 // pred_check
    %p15 = pneg %p14
  $region15: #{transformer_forward.18} parent=0 // pred_check_branch
    %17 = sbr.rel (%p15) target = $region17
  $region16: #{transformer_forward.18} parent=0 // pred_region
    %18 = vst [vmem:[#allocation2] sm:$0xff] 0.0
    %19 = vst [vmem:[#allocation2 + $0x8] sm:$0xff] 0.0
    %20 = vst [vmem:[#allocation2 + $0x10] sm:$0xff] 0.0
    %21 = vst [vmem:[#allocation2 + $0x18] sm:$0xff] 0.0
  $region17: #{transformer_forward.18} parent=0 // pred_fallthru
    _
  %v22 = vld [vmem:[#allocation2] sm:$0xff]
  %v23 = vld [vmem:[#allocation2 + $0x8] sm:$0xff]
  %v24 = vld [vmem:[#allocation2 + $0x10] sm:$0xff]
  %v25 = vld [vmem:[#allocation2 + $0x18] sm:$0xff]
  %v26 = vld [vmem:[%s0] sm:$0xff]
  %v27 = vld [vmem:[%s0 + $0x8] sm:$0xff]
  %v28 = vld [vmem:[%s1] sm:$0xff]
  %v29 = vld [vmem:[%s1 + $0x8] sm:$0xff]
  %v30 = vld [vmem:[%s1 + $0x10] sm:$0xff]
  %v31 = vld [vmem:[%s1 + $0x18] sm:$0xff]
  %v32 = vld [vmem:[%s1 + $0x20] sm:$0xff]
  %v33 = vld [vmem:[%s1 + $0x28] sm:$0xff]
  %v34 = vld [vmem:[%s1 + $0x30] sm:$0xff]
  %v35 = vld [vmem:[%s1 + $0x38] sm:$0xff]
  %v36 = vld [vmem:[%s1 + $0x40] sm:$0xff]
  %v37 = vld [vmem:[%s1 + $0x48] sm:$0xff]
  %v38 = vld [vmem:[%s1 + $0x50] sm:$0xff]
  %v39 = vld [vmem:[%s1 + $0x58] sm:$0xff]
  %v40 = vld [vmem:[%s1 + $0x60] sm:$0xff]
  %v41 = vld [vmem:[%s1 + $0x68] sm:$0xff]
  %v42 = vld [vmem:[%s1 + $0x70] sm:$0xff]
  %v43 = vld [vmem:[%s1 + $0x78] sm:$0xff]
  %v44 = vld [vmem:[%s1 + $0x80] sm:$0xff]
  %v45 = vld [vmem:[%s1 + $0x88] sm:$0xff]
  %v46 = vld [vmem:[%s1 + $0x90] sm:$0xff]
  %v47 = vld [vmem:[%s1 + $0x98] sm:$0xff]
  %v48 = vld [vmem:[%s1 + $0xa0] sm:$0xff]
  %v49 = vld [vmem:[%s1 + $0xa8] sm:$0xff]
  %v50 = vld [vmem:[%s1 + $0xb0] sm:$0xff]
  %v51 = vld [vmem:[%s1 + $0xb8] sm:$0xff]
  %v52 = vld [vmem:[%s1 + $0xc0] sm:$0xff]
  %v53 = vld [vmem:[%s1 + $0xc8] sm:$0xff]
  %v54 = vld [vmem:[%s1 + $0xd0] sm:$0xff]
  %v55 = vld [vmem:[%s1 + $0xd8] sm:$0xff]
  %v56 = vld [vmem:[%s1 + $0xe0] sm:$0xff]
  %v57 = vld [vmem:[%s1 + $0xe8] sm:$0xff]
  %v58 = vld [vmem:[%s1 + $0xf0] sm:$0xff]
  %v59 = vld [vmem:[%s1 + $0xf8] sm:$0xff]
  %v62 = vunpack.c.l.b16 %v26
  %v63 = vunpack.c.h.b16 %v26
  %v64 = vunpack.c.l.b16 %v27
  %v65 = vunpack.c.h.b16 %v27
  %v66 = vpack.c.b16 %v64, %v62
  %v67 = vpack.c.b16 %v65, %v63
  %v102 = vunpack.c.l.b16 %v28
  %v103 = vunpack.c.h.b16 %v28
  %v104 = vunpack.c.l.b16 %v29
  %v105 = vunpack.c.h.b16 %v29
  %v106 = vunpack.c.l.b16 %v30
  %v107 = vunpack.c.h.b16 %v30
  %v108 = vunpack.c.l.b16 %v31
  %v109 = vunpack.c.h.b16 %v31
  %v110 = vunpack.c.l.b16 %v32
  %v111 = vunpack.c.h.b16 %v32
  %v112 = vunpack.c.l.b16 %v33
  %v113 = vunpack.c.h.b16 %v33
  %v114 = vunpack.c.l.b16 %v34
  %v115 = vunpack.c.h.b16 %v34
  %v116 = vunpack.c.l.b16 %v35
  %v117 = vunpack.c.h.b16 %v35
  %v118 = vunpack.c.l.b16 %v36
  %v119 = vunpack.c.h.b16 %v36
  %v120 = vunpack.c.l.b16 %v37
  %v121 = vunpack.c.h.b16 %v37
  %v122 = vunpack.c.l.b16 %v38
  %v123 = vunpack.c.h.b16 %v38
  %v124 = vunpack.c.l.b16 %v39
  %v125 = vunpack.c.h.b16 %v39
  %v126 = vunpack.c.l.b16 %v40
  %v127 = vunpack.c.h.b16 %v40
  %v128 = vunpack.c.l.b16 %v41
  %v129 = vunpack.c.h.b16 %v41
  %v130 = vunpack.c.l.b16 %v42
  %v131 = vunpack.c.h.b16 %v42
  %v132 = vunpack.c.l.b16 %v43
  %v133 = vunpack.c.h.b16 %v43
  %v134 = vunpack.c.l.b16 %v44
  %v135 = vunpack.c.h.b16 %v44
  %v136 = vunpack.c.l.b16 %v45
  %v137 = vunpack.c.h.b16 %v45
  %v138 = vunpack.c.l.b16 %v46
  %v139 = vunpack.c.h.b16 %v46
  %v140 = vunpack.c.l.b16 %v47
  %v141 = vunpack.c.h.b16 %v47
  %v142 = vunpack.c.l.b16 %v48
  %v143 = vunpack.c.h.b16 %v48
  %v144 = vunpack.c.l.b16 %v49
  %v145 = vunpack.c.h.b16 %v49
  %v146 = vunpack.c.l.b16 %v50
  %v147 = vunpack.c.h.b16 %v50
  %v148 = vunpack.c.l.b16 %v51
  %v149 = vunpack.c.h.b16 %v51
  %v150 = vunpack.c.l.b16 %v52
  %v151 = vunpack.c.h.b16 %v52
  %v152 = vunpack.c.l.b16 %v53
  %v153 = vunpack.c.h.b16 %v53
  %v154 = vunpack.c.l.b16 %v54
  %v155 = vunpack.c.h.b16 %v54
  %v156 = vunpack.c.l.b16 %v55
  %v157 = vunpack.c.h.b16 %v55
  %v158 = vunpack.c.l.b16 %v56
  %v159 = vunpack.c.h.b16 %v56
  %v160 = vunpack.c.l.b16 %v57
  %v161 = vunpack.c.h.b16 %v57
  %v162 = vunpack.c.l.b16 %v58
  %v163 = vunpack.c.h.b16 %v58
  %v164 = vunpack.c.l.b16 %v59
  %v165 = vunpack.c.h.b16 %v59
  %v166 = vpack.c.b16 %v104, %v102
  %v167 = vpack.c.b16 %v105, %v103
  %v168 = vpack.c.b16 %v108, %v106
  %v169 = vpack.c.b16 %v109, %v107
  %v170 = vpack.c.b16 %v112, %v110
  %v171 = vpack.c.b16 %v113, %v111
  %v172 = vpack.c.b16 %v116, %v114
  %v173 = vpack.c.b16 %v117, %v115
  %v174 = vpack.c.b16 %v120, %v118
  %v175 = vpack.c.b16 %v121, %v119
  %v176 = vpack.c.b16 %v124, %v122
  %v177 = vpack.c.b16 %v125, %v123
  %v178 = vpack.c.b16 %v128, %v126
  %v179 = vpack.c.b16 %v129, %v127
  %v180 = vpack.c.b16 %v132, %v130
  %v181 = vpack.c.b16 %v133, %v131
  %v182 = vpack.c.b16 %v136, %v134
  %v183 = vpack.c.b16 %v137, %v135
  %v184 = vpack.c.b16 %v140, %v138
  %v185 = vpack.c.b16 %v141, %v139
  %v186 = vpack.c.b16 %v144, %v142
  %v187 = vpack.c.b16 %v145, %v143
  %v188 = vpack.c.b16 %v148, %v146
  %v189 = vpack.c.b16 %v149, %v147
  %v190 = vpack.c.b16 %v152, %v150
  %v191 = vpack.c.b16 %v153, %v151
  %v192 = vpack.c.b16 %v156, %v154
  %v193 = vpack.c.b16 %v157, %v155
  %v194 = vpack.c.b16 %v160, %v158
  %v195 = vpack.c.b16 %v161, %v159
  %v196 = vpack.c.b16 %v164, %v162
  %v197 = vpack.c.b16 %v165, %v163
  %230 = vmatprep.subr.bf16.mxu0 %v181
  %231 = vmatpush1.bf16.msra.mxu0 %v180
  %232 = vmatprep.subr.bf16.mxu0 %v179
  %233 = vmatpush1.bf16.msra.mxu0 %v178
  %234 = vmatprep.subr.bf16.mxu0 %v177
  %235 = vmatpush1.bf16.msra.mxu0 %v176
  %236 = vmatprep.subr.bf16.mxu0 %v175
  %237 = vmatpush1.bf16.msra.mxu0 %v174
  %238 = vmatprep.subr.bf16.mxu0 %v173
  %239 = vmatpush1.bf16.msra.mxu0 %v172
  %240 = vmatprep.subr.bf16.mxu0 %v171
  %241 = vmatpush1.bf16.msra.mxu0 %v170
  %242 = vmatprep.subr.bf16.mxu0 %v169
  %243 = vmatpush1.bf16.msra.mxu0 %v168
  %244 = vmatprep.subr.bf16.mxu0 %v167
  %245 = vmatpush1.bf16.msra.mxu0 %v166
  %246 = vmatprep.subr.bf16.mxu0 %v197
  %247 = vmatpush2.bf16.msra.mxu0 %v196
  %248 = vmatprep.subr.bf16.mxu0 %v195
  %249 = vmatpush2.bf16.msra.mxu0 %v194
  %250 = vmatprep.subr.bf16.mxu0 %v193
  %251 = vmatpush2.bf16.msra.mxu0 %v192
  %252 = vmatprep.subr.bf16.mxu0 %v191
  %253 = vmatpush2.bf16.msra.mxu0 %v190
  %254 = vmatprep.subr.bf16.mxu0 %v189
  %255 = vmatpush2.bf16.msra.mxu0 %v188
  %256 = vmatprep.subr.bf16.mxu0 %v187
  %257 = vmatpush2.bf16.msra.mxu0 %v186
  %258 = vmatprep.subr.bf16.mxu0 %v185
  %259 = vmatpush2.bf16.msra.mxu0 %v184
  %260 = vmatprep.subr.bf16.mxu0 %v183
  %261 = vmatpush2.bf16.msra.mxu0 %v182
  %262 = vmatprep.mubr.bf16.mxu0 %v67
  %263 = vmatmul.mubr.bf16.gmra.mxu0 %v66
  %v264 = vpop.f32.mrf.mxu0
  %v265 = vadd.f32 0.0, %v264
  %v266 = vpop.f32.mrf.mxu0
  %v267 = vadd.f32 0.0, %v266
  %v268 = vpop.f32.mrf.mxu0
  %v269 = vadd.f32 0.0, %v268
  %v270 = vpop.f32.mrf.mxu0
  %v271 = vadd.f32 0.0, %v270
  %272 = vdwg.mxu0
  %v273 = vadd.f32 %v22, %v265
  %v274 = vadd.f32 %v23, %v267
  %v275 = vadd.f32 %v24, %v269
  %v276 = vadd.f32 %v25, %v271
  %277 = vst [vmem:[#allocation2] sm:$0xff] %v273
  %278 = vst [vmem:[#allocation2 + $0x8] sm:$0xff] %v274
  %279 = vst [vmem:[#allocation2 + $0x10] sm:$0xff] %v275
  %280 = vst [vmem:[#allocation2 + $0x18] sm:$0xff] %v276
  // Predicated region
  $region18: #{transformer_forward.18} parent=0 // pred_check
    %p281 = pneg %p14
  $region19: #{transformer_forward.18} parent=0 // pred_check_branch
    %283 = sbr.rel (%p281) target = $region21
  $region20: #{transformer_forward.18} parent=0 // pred_region
    %v284 = vld [vmem:[%s2] sm:$0xff]
    %v285 = vld [vmem:[%s2 + $0x8] sm:$0xff]
    %v286 = vunpack.c.l.bf16 %v284
    %v287 = vunpack.c.h.bf16 %v284
    %v288 = vunpack.c.l.bf16 %v285
    %v289 = vunpack.c.h.bf16 %v285
    %v290 = vld [vmem:[#allocation2] sm:$0xff]
    %v291 = vld [vmem:[#allocation2 + $0x8] sm:$0xff]
    %v292 = vld [vmem:[#allocation2 + $0x10] sm:$0xff]
    %v293 = vld [vmem:[#allocation2 + $0x18] sm:$0xff]
    %v294 = vadd.f32 %v286, %v290
    %v295 = vadd.f32 %v287, %v291
    %v296 = vadd.f32 %v288, %v292
    %v297 = vadd.f32 %v289, %v293
    %v298 = vpack.c.bf16 %v296, %v294
    %v299 = vpack.c.bf16 %v297, %v295
    %v302 = vunpack.c.l.b16 %v298
    %v303 = vunpack.c.l.b16 %v299
    %v304 = vunpack.c.h.b16 %v298
    %v305 = vunpack.c.h.b16 %v299
    %v306 = vpack.c.b16 %v303, %v302
    %v307 = vpack.c.b16 %v305, %v304
    %310 = vst [vmem:[%s3] sm:$0xff] %v306
    %311 = vst [vmem:[%s3 + $0x8] sm:$0xff] %v307
  $region21: #{transformer_forward.18} parent=0 // pred_fallthru
    _
  // Predicated region
  $region22: #{transformer_forward.18} parent=0 // pred_check
    _
  $region23: #{transformer_forward.18} parent=0 // pred_check_branch
    %313 = sbr.rel (0) target = $region25
  $region24: #{transformer_forward.18} parent=0 // pred_region
    _
  $region25: #{transformer_forward.18} parent=0 // pred_fallthru
    _
  // Predicated region
  $region26: #{transformer_forward.18} parent=0 // pred_check
    _
  $region27: #{transformer_forward.18} parent=0 // pred_check_branch
    %315 = sbr.rel (0) target = $region29
  $region28: #{transformer_forward.18} parent=0 // pred_region
    _
  $region29: #{transformer_forward.18} parent=0 // pred_fallthru
    _

// kernel: transformer_forward.21
$region0: #{transformer_forward.21}
  #allocation0 [shape = 'u32[]', space=smem, size = 0x4, offset = 0x4, fixed_abs, tag = 'smem constant byte address 0x4 - core index']
  #allocation1 [shape = 'u32[144,128]{1,0:T(1,128)}', space=vmem, size = 0x12000, scoped, tag = 'internal scratch']
  #allocation2 [shape = 'bf16[16,256]{1,0:T(8,128)(2,1)}', space=vmem, size = 0x2000, scoped, tag = 'scratch operand']
  %s0 = inlined_call_operand.vmem [shape: bf16[16,256], index: 0, kind: input, shape index: {}]
  %s1 = inlined_call_operand.vmem [shape: bf16[1,256], index: 1, kind: input, shape index: {}]
  %s2 = inlined_call_operand.vmem [shape: bf16[256,512], index: 2, kind: input, shape index: {}]
  %s3 = inlined_call_operand.hbm [shape: f32[16,512], index: 3, kind: output, shape index: {}]
  %s4 = sld [smem:[#allocation0]]
  $region26: #{transformer_forward.21} parent=0
    _
  %s6 = ssub.s32 1, %s4
  %s7 = scalar_select 0, %s6, %s4
  $region1: #{transformer_forward.21} parent=0
    #allocation3 [shape = 'u8[32768]{0}', space=vmem, size = 0x8000, scoped, tag = 'output window, operand 0, single buffered']
    #allocation4 [shape = 's32[1]{0}', space=sflag, size = 0x4, scoped, tag = 'scoped memory for transformer_forward.21']
    %8 = vsyncpa [#allocation4], 0
    // Predicated region
    $region2: #{transformer_forward.21} parent=1 // pred_check
      _
    $region3: #{transformer_forward.21} parent=1 // pred_check_branch
      %10 = sbr.rel (0) target = $region5
    $region4: #{transformer_forward.21} parent=1 // pred_region
      _
    $region5: #{transformer_forward.21} parent=1 // pred_fallthru
      _
    // Predicated region
    $region6: #{transformer_forward.21} parent=1 // pred_check
      _
    $region7: #{transformer_forward.21} parent=1 // pred_check_branch
      %12 = sbr.rel (0) target = $region9
    $region8: #{transformer_forward.21} parent=1 // pred_region
      _
    $region9: #{transformer_forward.21} parent=1 // pred_fallthru
      _
    // Predicated region
    $region10: #{transformer_forward.21} parent=1 // pred_check
      _
    $region11: #{transformer_forward.21} parent=1 // pred_check_branch
      %14 = sbr.rel (0) target = $region13
    $region12: #{transformer_forward.21} parent=1 // pred_region
      _
    $region13: #{transformer_forward.21} parent=1 // pred_fallthru
      _
    %p15 = scmp.eq.s32.totalorder 0, 0
    // Predicated region
    $region14: #{transformer_forward.21} parent=1 // pred_check
      %p16 = pneg %p15
    $region15: #{transformer_forward.21} parent=1 // pred_check_branch
      %18 = sbr.rel (%p16) target = $region17
    $region16: #{transformer_forward.21} parent=1 // pred_region
      %v19 = vld [vmem:[%s0] sm:$0xff]
      %v20 = vld [vmem:[%s0 + $0x8] sm:$0xff]
      %v21 = vunpack.c.l.bf16 %v19
      %v22 = vunpack.c.h.bf16 %v19
      %v23 = vunpack.c.l.bf16 %v20
      %v24 = vunpack.c.h.bf16 %v20
      %v25 = vmul.f32 %v21, %v21
      %v26 = vmul.f32 %v22, %v22
      %v27 = vmul.f32 %v23, %v23
      %v28 = vmul.f32 %v24, %v24
      %v29 = vadd.f32 %v25, %v26
      %30 = vadd.xlane.f32.xlu0 %v29
      %v31 = vpop.xlane.xlu0 %30
      %v32 = vadd.f32 %v27, %v28
      %33 = vadd.xlane.f32.xlu0 %v32
      %v34 = vpop.xlane.xlu0 %33
      %v35 = vrcp.pop 256.0
      %v36 = vmul.f32 %v31, %v35
      %v37 = vmul.f32 %v34, %v35
      %v38 = vadd.f32 %v36, 1e-06
      %v39 = vadd.f32 %v37, 1e-06
      %v40 = vrsqrt.pop %v38
      %v41 = vrsqrt.pop %v39
      %v42 = vmul.f32 %v21, %v40
      %v43 = vmul.f32 %v22, %v40
      %v44 = vmul.f32 %v23, %v41
      %v45 = vmul.f32 %v24, %v41
      %v46 = vpack.c.bf16 %v44, %v42
      %v47 = vpack.c.bf16 %v45, %v43
      %v48 = vld [vmem:[%s1] sm:$0x3]
      %v51 = vunpack.c.l.s4 1966171168
      %v52 = vunpack.c.0.s8 %v51
      %v53 = vlaneseq
      %v54 = vshrl.u32 %v53, 7
      %v55 = vsub.s32 %v52, %v54
      %v56 = vrot.slane %v48, %v55
      %v57 = vcombine.high %v56, %v56
      %v59 = vunpack.c.l.s4 1966171168
      %v60 = vunpack.c.0.s8 %v59
      %v61 = vlaneseq
      %v62 = vshrl.u32 %v61, 7
      %v63 = vsub.s32 %v60, %v62
      %v64 = vrot.slane %v56, %v63
      %v66 = vunpack.c.l.s4 1966171168
      %v67 = vunpack.c.0.s8 %v66
      %v68 = vlaneseq
      %v69 = vshrl.u32 %v68, 7
      %v70 = vsub.s32 %v67, %v69
      %v71 = vrot.slane %v57, %v70
      %v73 = vpack.i.b16 %v64, %v64
      %v75 = vlaneseq
      %v76 = vshrl.u32 %v75, 7
      %v77 = vsub.s32 0, %v76
      %v78 = vrot.slane %v73, %v77
      %v80 = vpack.i.b16 %v71, %v71
      %v82 = vlaneseq
      %v83 = vshrl.u32 %v82, 7
      %v84 = vsub.s32 0, %v83
      %v85 = vrot.slane %v80, %v84
      %v86 = vmul.bf16 %v46, %v78
      %v87 = vmul.bf16 %v47, %v85
      %v90 = vunpack.c.l.b16 %v86
      %v91 = vunpack.c.l.b16 %v87
      %v92 = vunpack.c.h.b16 %v86
      %v93 = vunpack.c.h.b16 %v87
      %v94 = vpack.c.b16 %v91, %v90
      %v95 = vpack.c.b16 %v93, %v92
      %98 = vst [vmem:[#allocation2] sm:$0xff] %v94
      %99 = vst [vmem:[#allocation2 + $0x8] sm:$0xff] %v95
    $region17: #{transformer_forward.21} parent=1 // pred_fallthru
      _
    %v100 = vld [vmem:[#allocation2] sm:$0xff]
    %v101 = vld [vmem:[#allocation2 + $0x8] sm:$0xff]
    %v102 = vld [vmem:[%s2] sm:$0xff]
    %v103 = vld [vmem:[%s2 + $0x8] sm:$0xff]
    %v104 = vld [vmem:[%s2 + $0x10] sm:$0xff]
    %v105 = vld [vmem:[%s2 + $0x18] sm:$0xff]
    %v106 = vld [vmem:[%s2 + $0x20] sm:$0xff]
    %v107 = vld [vmem:[%s2 + $0x28] sm:$0xff]
    %v108 = vld [vmem:[%s2 + $0x30] sm:$0xff]
    %v109 = vld [vmem:[%s2 + $0x38] sm:$0xff]
    %v110 = vld [vmem:[%s2 + $0x40] sm:$0xff]
    %v111 = vld [vmem:[%s2 + $0x48] sm:$0xff]
    %v112 = vld [vmem:[%s2 + $0x50] sm:$0xff]
    %v113 = vld [vmem:[%s2 + $0x58] sm:$0xff]
    %v114 = vld [vmem:[%s2 + $0x60] sm:$0xff]
    %v115 = vld [vmem:[%s2 + $0x68] sm:$0xff]
    %v116 = vld [vmem:[%s2 + $0x70] sm:$0xff]
    %v117 = vld [vmem:[%s2 + $0x78] sm:$0xff]
    %v118 = vld [vmem:[%s2 + $0x80] sm:$0xff]
    %v119 = vld [vmem:[%s2 + $0x88] sm:$0xff]
    %v120 = vld [vmem:[%s2 + $0x90] sm:$0xff]
    %v121 = vld [vmem:[%s2 + $0x98] sm:$0xff]
    %v122 = vld [vmem:[%s2 + $0xa0] sm:$0xff]
    %v123 = vld [vmem:[%s2 + $0xa8] sm:$0xff]
    %v124 = vld [vmem:[%s2 + $0xb0] sm:$0xff]
    %v125 = vld [vmem:[%s2 + $0xb8] sm:$0xff]
    %v126 = vld [vmem:[%s2 + $0xc0] sm:$0xff]
    %v127 = vld [vmem:[%s2 + $0xc8] sm:$0xff]
    %v128 = vld [vmem:[%s2 + $0xd0] sm:$0xff]
    %v129 = vld [vmem:[%s2 + $0xd8] sm:$0xff]
    %v130 = vld [vmem:[%s2 + $0xe0] sm:$0xff]
    %v131 = vld [vmem:[%s2 + $0xe8] sm:$0xff]
    %v132 = vld [vmem:[%s2 + $0xf0] sm:$0xff]
    %v133 = vld [vmem:[%s2 + $0xf8] sm:$0xff]
    %v134 = vld [vmem:[%s2 + $0x100] sm:$0xff]
    %v135 = vld [vmem:[%s2 + $0x108] sm:$0xff]
    %v136 = vld [vmem:[%s2 + $0x110] sm:$0xff]
    %v137 = vld [vmem:[%s2 + $0x118] sm:$0xff]
    %v138 = vld [vmem:[%s2 + $0x120] sm:$0xff]
    %v139 = vld [vmem:[%s2 + $0x128] sm:$0xff]
    %v140 = vld [vmem:[%s2 + $0x130] sm:$0xff]
    %v141 = vld [vmem:[%s2 + $0x138] sm:$0xff]
    %v142 = vld [vmem:[%s2 + $0x140] sm:$0xff]
    %v143 = vld [vmem:[%s2 + $0x148] sm:$0xff]
    %v144 = vld [vmem:[%s2 + $0x150] sm:$0xff]
    %v145 = vld [vmem:[%s2 + $0x158] sm:$0xff]
    %v146 = vld [vmem:[%s2 + $0x160] sm:$0xff]
    %v147 = vld [vmem:[%s2 + $0x168] sm:$0xff]
    %v148 = vld [vmem:[%s2 + $0x170] sm:$0xff]
    %v149 = vld [vmem:[%s2 + $0x178] sm:$0xff]
    %v150 = vld [vmem:[%s2 + $0x180] sm:$0xff]
    %v151 = vld [vmem:[%s2 + $0x188] sm:$0xff]
    %v152 = vld [vmem:[%s2 + $0x190] sm:$0xff]
    %v153 = vld [vmem:[%s2 + $0x198] sm:$0xff]
    %v154 = vld [vmem:[%s2 + $0x1a0] sm:$0xff]
    %v155 = vld [vmem:[%s2 + $0x1a8] sm:$0xff]
    %v156 = vld [vmem:[%s2 + $0x1b0] sm:$0xff]
    %v157 = vld [vmem:[%s2 + $0x1b8] sm:$0xff]
    %v158 = vld [vmem:[%s2 + $0x1c0] sm:$0xff]
    %v159 = vld [vmem:[%s2 + $0x1c8] sm:$0xff]
    %v160 = vld [vmem:[%s2 + $0x1d0] sm:$0xff]
    %v161 = vld [vmem:[%s2 + $0x1d8] sm:$0xff]
    %v162 = vld [vmem:[%s2 + $0x1e0] sm:$0xff]
    %v163 = vld [vmem:[%s2 + $0x1e8] sm:$0xff]
    %v164 = vld [vmem:[%s2 + $0x1f0] sm:$0xff]
    %v165 = vld [vmem:[%s2 + $0x1f8] sm:$0xff]
    %v168 = vunpack.c.l.b16 %v100
    %v169 = vunpack.c.h.b16 %v100
    %v170 = vunpack.c.l.b16 %v101
    %v171 = vunpack.c.h.b16 %v101
    %v172 = vpack.c.b16 %v170, %v168
    %v173 = vpack.c.b16 %v171, %v169
    %v240 = vunpack.c.l.b16 %v102
    %v241 = vunpack.c.h.b16 %v102
    %v242 = vunpack.c.l.b16 %v103
    %v243 = vunpack.c.h.b16 %v103
    %v244 = vunpack.c.l.b16 %v104
    %v245 = vunpack.c.h.b16 %v104
    %v246 = vunpack.c.l.b16 %v105
    %v247 = vunpack.c.h.b16 %v105
    %v248 = vunpack.c.l.b16 %v106
    %v249 = vunpack.c.h.b16 %v106
    %v250 = vunpack.c.l.b16 %v107
    %v251 = vunpack.c.h.b16 %v107
    %v252 = vunpack.c.l.b16 %v108
    %v253 = vunpack.c.h.b16 %v108
    %v254 = vunpack.c.l.b16 %v109
    %v255 = vunpack.c.h.b16 %v109
    %v256 = vunpack.c.l.b16 %v110
    %v257 = vunpack.c.h.b16 %v110
    %v258 = vunpack.c.l.b16 %v111
    %v259 = vunpack.c.h.b16 %v111
    %v260 = vunpack.c.l.b16 %v112
    %v261 = vunpack.c.h.b16 %v112
    %v262 = vunpack.c.l.b16 %v113
    %v263 = vunpack.c.h.b16 %v113
    %v264 = vunpack.c.l.b16 %v114
    %v265 = vunpack.c.h.b16 %v114
    %v266 = vunpack.c.l.b16 %v115
    %v267 = vunpack.c.h.b16 %v115
    %v268 = vunpack.c.l.b16 %v116
    %v269 = vunpack.c.h.b16 %v116
    %v270 = vunpack.c.l.b16 %v117
    %v271 = vunpack.c.h.b16 %v117
    %v272 = vunpack.c.l.b16 %v118
    %v273 = vunpack.c.h.b16 %v118
    %v274 = vunpack.c.l.b16 %v119
    %v275 = vunpack.c.h.b16 %v119
    %v276 = vunpack.c.l.b16 %v120
    %v277 = vunpack.c.h.b16 %v120
    %v278 = vunpack.c.l.b16 %v121
    %v279 = vunpack.c.h.b16 %v121
    %v280 = vunpack.c.l.b16 %v122
    %v281 = vunpack.c.h.b16 %v122
    %v282 = vunpack.c.l.b16 %v123
    %v283 = vunpack.c.h.b16 %v123
    %v284 = vunpack.c.l.b16 %v124
    %v285 = vunpack.c.h.b16 %v124
    %v286 = vunpack.c.l.b16 %v125
    %v287 = vunpack.c.h.b16 %v125
    %v288 = vunpack.c.l.b16 %v126
    %v289 = vunpack.c.h.b16 %v126
    %v290 = vunpack.c.l.b16 %v127
    %v291 = vunpack.c.h.b16 %v127
    %v292 = vunpack.c.l.b16 %v128
    %v293 = vunpack.c.h.b16 %v128
    %v294 = vunpack.c.l.b16 %v129
    %v295 = vunpack.c.h.b16 %v129
    %v296 = vunpack.c.l.b16 %v130
    %v297 = vunpack.c.h.b16 %v130
    %v298 = vunpack.c.l.b16 %v131
    %v299 = vunpack.c.h.b16 %v131
    %v300 = vunpack.c.l.b16 %v132
    %v301 = vunpack.c.h.b16 %v132
    %v302 = vunpack.c.l.b16 %v133
    %v303 = vunpack.c.h.b16 %v133
    %v304 = vunpack.c.l.b16 %v134
    %v305 = vunpack.c.h.b16 %v134
    %v306 = vunpack.c.l.b16 %v135
    %v307 = vunpack.c.h.b16 %v135
    %v308 = vunpack.c.l.b16 %v136
    %v309 = vunpack.c.h.b16 %v136
    %v310 = vunpack.c.l.b16 %v137
    %v311 = vunpack.c.h.b16 %v137
    %v312 = vunpack.c.l.b16 %v138
    %v313 = vunpack.c.h.b16 %v138
    %v314 = vunpack.c.l.b16 %v139
    %v315 = vunpack.c.h.b16 %v139
    %v316 = vunpack.c.l.b16 %v140
    %v317 = vunpack.c.h.b16 %v140
    %v318 = vunpack.c.l.b16 %v141
    %v319 = vunpack.c.h.b16 %v141
    %v320 = vunpack.c.l.b16 %v142
    %v321 = vunpack.c.h.b16 %v142
    %v322 = vunpack.c.l.b16 %v143
    %v323 = vunpack.c.h.b16 %v143
    %v324 = vunpack.c.l.b16 %v144
    %v325 = vunpack.c.h.b16 %v144
    %v326 = vunpack.c.l.b16 %v145
    %v327 = vunpack.c.h.b16 %v145
    %v328 = vunpack.c.l.b16 %v146
    %v329 = vunpack.c.h.b16 %v146
    %v330 = vunpack.c.l.b16 %v147
    %v331 = vunpack.c.h.b16 %v147
    %v332 = vunpack.c.l.b16 %v148
    %v333 = vunpack.c.h.b16 %v148
    %v334 = vunpack.c.l.b16 %v149
    %v335 = vunpack.c.h.b16 %v149
    %v336 = vunpack.c.l.b16 %v150
    %v337 = vunpack.c.h.b16 %v150
    %v338 = vunpack.c.l.b16 %v151
    %v339 = vunpack.c.h.b16 %v151
    %v340 = vunpack.c.l.b16 %v152
    %v341 = vunpack.c.h.b16 %v152
    %v342 = vunpack.c.l.b16 %v153
    %v343 = vunpack.c.h.b16 %v153
    %v344 = vunpack.c.l.b16 %v154
    %v345 = vunpack.c.h.b16 %v154
    %v346 = vunpack.c.l.b16 %v155
    %v347 = vunpack.c.h.b16 %v155
    %v348 = vunpack.c.l.b16 %v156
    %v349 = vunpack.c.h.b16 %v156
    %v350 = vunpack.c.l.b16 %v157
    %v351 = vunpack.c.h.b16 %v157
    %v352 = vunpack.c.l.b16 %v158
    %v353 = vunpack.c.h.b16 %v158
    %v354 = vunpack.c.l.b16 %v159
    %v355 = vunpack.c.h.b16 %v159
    %v356 = vunpack.c.l.b16 %v160
    %v357 = vunpack.c.h.b16 %v160
    %v358 = vunpack.c.l.b16 %v161
    %v359 = vunpack.c.h.b16 %v161
    %v360 = vunpack.c.l.b16 %v162
    %v361 = vunpack.c.h.b16 %v162
    %v362 = vunpack.c.l.b16 %v163
    %v363 = vunpack.c.h.b16 %v163
    %v364 = vunpack.c.l.b16 %v164
    %v365 = vunpack.c.h.b16 %v164
    %v366 = vunpack.c.l.b16 %v165
    %v367 = vunpack.c.h.b16 %v165
    %v368 = vpack.c.b16 %v244, %v240
    %v369 = vpack.c.b16 %v245, %v241
    %v370 = vpack.c.b16 %v246, %v242
    %v371 = vpack.c.b16 %v247, %v243
    %v372 = vpack.c.b16 %v252, %v248
    %v373 = vpack.c.b16 %v253, %v249
    %v374 = vpack.c.b16 %v254, %v250
    %v375 = vpack.c.b16 %v255, %v251
    %v376 = vpack.c.b16 %v260, %v256
    %v377 = vpack.c.b16 %v261, %v257
    %v378 = vpack.c.b16 %v262, %v258
    %v379 = vpack.c.b16 %v263, %v259
    %v380 = vpack.c.b16 %v268, %v264
    %v381 = vpack.c.b16 %v269, %v265
    %v382 = vpack.c.b16 %v270, %v266
    %v383 = vpack.c.b16 %v271, %v267
    %v384 = vpack.c.b16 %v276, %v272
    %v385 = vpack.c.b16 %v277, %v273
    %v386 = vpack.c.b16 %v278, %v274
    %v387 = vpack.c.b16 %v279, %v275
    %v388 = vpack.c.b16 %v284, %v280
    %v389 = vpack.c.b16 %v285, %v281
    %v390 = vpack.c.b16 %v286, %v282
    %v391 = vpack.c.b16 %v287, %v283
    %v392 = vpack.c.b16 %v292, %v288
    %v393 = vpack.c.b16 %v293, %v289
    %v394 = vpack.c.b16 %v294, %v290
    %v395 = vpack.c.b16 %v295, %v291
    %v396 = vpack.c.b16 %v300, %v296
    %v397 = vpack.c.b16 %v301, %v297
    %v398 = vpack.c.b16 %v302, %v298
    %v399 = vpack.c.b16 %v303, %v299
    %v400 = vpack.c.b16 %v308, %v304
    %v401 = vpack.c.b16 %v309, %v305
    %v402 = vpack.c.b16 %v310, %v306
    %v403 = vpack.c.b16 %v311, %v307
    %v404 = vpack.c.b16 %v316, %v312
    %v405 = vpack.c.b16 %v317, %v313
    %v406 = vpack.c.b16 %v318, %v314
    %v407 = vpack.c.b16 %v319, %v315
    %v408 = vpack.c.b16 %v324, %v320
    %v409 = vpack.c.b16 %v325, %v321
    %v410 = vpack.c.b16 %v326, %v322
    %v411 = vpack.c.b16 %v327, %v323
    %v412 = vpack.c.b16 %v332, %v328
    %v413 = vpack.c.b16 %v333, %v329
    %v414 = vpack.c.b16 %v334, %v330
    %v415 = vpack.c.b16 %v335, %v331
    %v416 = vpack.c.b16 %v340, %v336
    %v417 = vpack.c.b16 %v341, %v337
    %v418 = vpack.c.b16 %v342, %v338
    %v419 = vpack.c.b16 %v343, %v339
    %v420 = vpack.c.b16 %v348, %v344
    %v421 = vpack.c.b16 %v349, %v345
    %v422 = vpack.c.b16 %v350, %v346
    %v423 = vpack.c.b16 %v351, %v347
    %v424 = vpack.c.b16 %v356, %v352
    %v425 = vpack.c.b16 %v357, %v353
    %v426 = vpack.c.b16 %v358, %v354
    %v427 = vpack.c.b16 %v359, %v355
    %v428 = vpack.c.b16 %v364, %v360
    %v429 = vpack.c.b16 %v365, %v361
    %v430 = vpack.c.b16 %v366, %v362
    %v431 = vpack.c.b16 %v367, %v363
    %496 = vmatprep.subr.bf16.mxu0 %v397
    %497 = vmatpush1.bf16.msra.mxu0 %v396
    %498 = vmatprep.subr.bf16.mxu0 %v393
    %499 = vmatpush1.bf16.msra.mxu0 %v392
    %500 = vmatprep.subr.bf16.mxu0 %v389
    %501 = vmatpush1.bf16.msra.mxu0 %v388
    %502 = vmatprep.subr.bf16.mxu0 %v385
    %503 = vmatpush1.bf16.msra.mxu0 %v384
    %504 = vmatprep.subr.bf16.mxu0 %v381
    %505 = vmatpush1.bf16.msra.mxu0 %v380
    %506 = vmatprep.subr.bf16.mxu0 %v377
    %507 = vmatpush1.bf16.msra.mxu0 %v376
    %508 = vmatprep.subr.bf16.mxu0 %v373
    %509 = vmatpush1.bf16.msra.mxu0 %v372
    %510 = vmatprep.subr.bf16.mxu0 %v369
    %511 = vmatpush1.bf16.msra.mxu0 %v368
    %512 = vmatprep.subr.bf16.mxu0 %v429
    %513 = vmatpush2.bf16.msra.mxu0 %v428
    %514 = vmatprep.subr.bf16.mxu0 %v425
    %515 = vmatpush2.bf16.msra.mxu0 %v424
    %516 = vmatprep.subr.bf16.mxu0 %v421
    %517 = vmatpush2.bf16.msra.mxu0 %v420
    %518 = vmatprep.subr.bf16.mxu0 %v417
    %519 = vmatpush2.bf16.msra.mxu0 %v416
    %520 = vmatprep.subr.bf16.mxu0 %v413
    %521 = vmatpush2.bf16.msra.mxu0 %v412
    %522 = vmatprep.subr.bf16.mxu0 %v409
    %523 = vmatpush2.bf16.msra.mxu0 %v408
    %524 = vmatprep.subr.bf16.mxu0 %v405
    %525 = vmatpush2.bf16.msra.mxu0 %v404
    %526 = vmatprep.subr.bf16.mxu0 %v401
    %527 = vmatpush2.bf16.msra.mxu0 %v400
    %528 = vmatprep.mubr.bf16.mxu0 %v173
    %529 = vmatmul.mubr.bf16.gmra.mxu0 %v172
    %v530 = vpop.f32.mrf.mxu0
    %v531 = vadd.f32 0.0, %v530
    %v532 = vpop.f32.mrf.mxu0
    %v533 = vadd.f32 0.0, %v532
    %v534 = vpop.f32.mrf.mxu0
    %v535 = vadd.f32 0.0, %v534
    %v536 = vpop.f32.mrf.mxu0
    %v537 = vadd.f32 0.0, %v536
    %538 = vdwg.mxu0
    %539 = vmatprep.subr.bf16.mxu0 %v399
    %540 = vmatpush1.bf16.msra.mxu0 %v398
    %541 = vmatprep.subr.bf16.mxu0 %v395
    %542 = vmatpush1.bf16.msra.mxu0 %v394
    %543 = vmatprep.subr.bf16.mxu0 %v391
    %544 = vmatpush1.bf16.msra.mxu0 %v390
    %545 = vmatprep.subr.bf16.mxu0 %v387
    %546 = vmatpush1.bf16.msra.mxu0 %v386
    %547 = vmatprep.subr.bf16.mxu0 %v383
    %548 = vmatpush1.bf16.msra.mxu0 %v382
    %549 = vmatprep.subr.bf16.mxu0 %v379
    %550 = vmatpush1.bf16.msra.mxu0 %v378
    %551 = vmatprep.subr.bf16.mxu0 %v375
    %552 = vmatpush1.bf16.msra.mxu0 %v374
    %553 = vmatprep.subr.bf16.mxu0 %v371
    %554 = vmatpush1.bf16.msra.mxu0 %v370
    %555 = vmatprep.subr.bf16.mxu0 %v431
    %556 = vmatpush2.bf16.msra.mxu0 %v430
    %557 = vmatprep.subr.bf16.mxu0 %v427
    %558 = vmatpush2.bf16.msra.mxu0 %v426
    %559 = vmatprep.subr.bf16.mxu0 %v423
    %560 = vmatpush2.bf16.msra.mxu0 %v422
    %561 = vmatprep.subr.bf16.mxu0 %v419
    %562 = vmatpush2.bf16.msra.mxu0 %v418
    %563 = vmatprep.subr.bf16.mxu0 %v415
    %564 = vmatpush2.bf16.msra.mxu0 %v414
    %565 = vmatprep.subr.bf16.mxu0 %v411
    %566 = vmatpush2.bf16.msra.mxu0 %v410
    %567 = vmatprep.subr.bf16.mxu0 %v407
    %568 = vmatpush2.bf16.msra.mxu0 %v406
    %569 = vmatprep.subr.bf16.mxu0 %v403
    %570 = vmatpush2.bf16.msra.mxu0 %v402
    %571 = vmatprep.mubr.bf16.mxu0 %v173
    %572 = vmatmul.mubr.bf16.gmra.mxu0 %v172
    %v573 = vpop.f32.mrf.mxu0
    %v574 = vadd.f32 0.0, %v573
    %v575 = vpop.f32.mrf.mxu0
    %v576 = vadd.f32 0.0, %v575
    %v577 = vpop.f32.mrf.mxu0
    %v578 = vadd.f32 0.0, %v577
    %v579 = vpop.f32.mrf.mxu0
    %v580 = vadd.f32 0.0, %v579
    %581 = vdwg.mxu0
    %582 = vst [vmem:[#allocation3] sm:$0xff] %v531
    %583 = vst [vmem:[#allocation3 + $0x8] sm:$0xff] %v533
    %584 = vst [vmem:[#allocation3 + $0x10] sm:$0xff] %v574
    %585 = vst [vmem:[#allocation3 + $0x18] sm:$0xff] %v576
    %586 = vst [vmem:[#allocation3 + $0x20] sm:$0xff] %v535
    %587 = vst [vmem:[#allocation3 + $0x28] sm:$0xff] %v537
    %588 = vst [vmem:[#allocation3 + $0x30] sm:$0xff] %v578
    %589 = vst [vmem:[#allocation3 + $0x38] sm:$0xff] %v580
    // Predicated region
    $region18: #{transformer_forward.21} parent=1 // pred_check
      _
    $region19: #{transformer_forward.21} parent=1 // pred_check_branch
      %591 = sbr.rel (0) target = $region21
    $region20: #{transformer_forward.21} parent=1 // pred_region
      %s593 = ssub.s32 1024, 1024
      %594 = vsyncadd [#allocation4], %s593
      %s595 = sshll.u32 [#allocation3], 4
      %s596 = int_to_ptr.vmem [resolvable:$true] %s595
      %601 = dma.vmem_to_hbm [thread:$0]  %s596, 1024, %s3, [#allocation4], 512, 512, 32
    $region21: #{transformer_forward.21} parent=1 // pred_fallthru
      _
    // Predicated region
    $region22: #{transformer_forward.21} parent=1 // pred_check
      _
    $region23: #{transformer_forward.21} parent=1 // pred_check_branch
      %603 = sbr.rel (0) target = $region25
    $region24: #{transformer_forward.21} parent=1 // pred_region
      %604 = dma.done [#allocation4], 1024
    $region25: #{transformer_forward.21} parent=1 // pred_fallthru
      _
    %605 = vsyncpa [#allocation4], 1

</llo_original>
